<compile_context>
chip_gen: v6e
topology: v6e:2x2x1
jax: 0.10.0
libtpu: 0.0.40
codegen_flags: <defaults>
</compile_context>

<pallas_src>
import math
import numpy as np
import jax
import jax.numpy as jnp
from jax import lax
from jax.experimental import pallas as pl
from jax.experimental.pallas import tpu as pltpu

# ---------------- configuration (small, consistent with the module) ----------------
STYLE_DIM   = 32   # style_emb_dim  (== sequence length T inside the denoiser)
STEP_DIM    = 16   # step_emb_dim
IN_OUT_CH   = 1    # in_out_channels (must be 1, see note above)
NUM_HEADS   = 1
HIDDEN_FFN  = 64   # hidden_channels_ffn
NUM_LAYERS  = 2
DROPOUT_P   = 0.1  # eval mode -> identity
B           = 2
EPS         = 1e-5

SCAL_PER_LAYER = 16          # SMEM scalars per layer (9 used, padded to 16)
SLAB_LANES     = 128         # weight-slab lane width (one native lane tile)
_HIGHEST       = lax.Precision.HIGHEST

assert HIDDEN_FFN % 8 == 0 and HIDDEN_FFN <= SLAB_LANES
assert 4 * STEP_DIM <= SLAB_LANES and STYLE_DIM <= SLAB_LANES


def _slab_layout():
    """Row offsets of every weight section in the single packed VMEM slab.
    Every section starts on an 8-row (sublane) boundary so in-kernel static slices
    never straddle a sublane tile awkwardly."""
    rows, cur = {}, 0

    def add(name, n):
        nonlocal cur
        rows[name] = cur
        cur = ((cur + n) + 7) // 8 * 8

    add("freq", 1)                               # [1, STEP_DIM//2]
    add("w1", STEP_DIM)                          # [STEP_DIM, 4*STEP_DIM]
    add("b1", 1)                                 # [1, 4*STEP_DIM]
    add("w2", 4 * STEP_DIM)                      # [4*STEP_DIM, STEP_DIM]
    add("b2", 1)                                 # [1, STEP_DIM]
    add("wp", STYLE_DIM + STEP_DIM)              # [D+dim, D]
    add("bp", 1)                                 # [1, D]
    add("c1", NUM_LAYERS * HIDDEN_FFN)           # per layer: [H, 4] (3 taps + bias column)
    add("c2", NUM_LAYERS * 8)                    # per layer: [3, H], padded to 8 rows
    add("norm", NUM_LAYERS * 8)                  # per layer: [4, D] (n1w,n1b,n2w,n2b), padded
    return rows, cur


_ROWS, SLAB_ROWS = _slab_layout()
ROW_FREQ = _ROWS["freq"]; ROW_W1 = _ROWS["w1"]; ROW_B1 = _ROWS["b1"]
ROW_W2 = _ROWS["w2"];     ROW_B2 = _ROWS["b2"]
ROW_WP = _ROWS["wp"];     ROW_BP = _ROWS["bp"]
ROW_C1 = _ROWS["c1"];     ROW_C2 = _ROWS["c2"];  ROW_NORM = _ROWS["norm"]


# ============================== fused Pallas kernel ==============================

def diffnet_kernel(scal_ref,      # SMEM  [NUM_LAYERS*16] f32 : per-layer degenerate scalars
                   w_ref,         # VMEM  [SLAB_ROWS, 128] f32 : all weights, packed at init
                   step_ref,      # VMEM  [B, 1]   f32 : diffusion step
                   z_ref,         # VMEM  [B, D]   f32 : input style vector
                   o_ref):        # VMEM  [B, D]   f32 : output
    Bsz, D = z_ref.shape
    T = D
    dim = STEP_DIM
    half = dim // 2
    H = HIDDEN_FFN

    # ---- SinusoidalPosEmb + MLP(Linear, Mish, Linear) + project_input (single dots) ----
    freq = w_ref[ROW_FREQ:ROW_FREQ + 1, 0:half]                            # [1, half]
    arg = step_ref[...] * freq                                             # [B, half]
    emb = jnp.concatenate([jnp.sin(arg), jnp.cos(arg)], axis=-1)           # [B, dim]

    w1 = w_ref[ROW_W1:ROW_W1 + dim, 0:4 * dim]
    b1 = w_ref[ROW_B1:ROW_B1 + 1, 0:4 * dim]
    h = jnp.dot(emb, w1, preferred_element_type=jnp.float32, precision=_HIGHEST) + b1
    # Mish: x * tanh(softplus(x)); threshold at 20 like PyTorch, exp arg clamped so no inf.
    sp = jnp.where(h > 20.0, h, jnp.log1p(jnp.exp(jnp.minimum(h, 20.0))))
    h = h * jnp.tanh(sp)

    w2 = w_ref[ROW_W2:ROW_W2 + 4 * dim, 0:dim]
    b2 = w_ref[ROW_B2:ROW_B2 + 1, 0:dim]
    t = jnp.dot(h, w2, preferred_element_type=jnp.float32, precision=_HIGHEST) + b2   # [B, dim]

    zt = jnp.concatenate([z_ref[...], t], axis=-1)                         # [B, D + dim]
    wp = w_ref[ROW_WP:ROW_WP + D + dim, 0:D]
    bp = w_ref[ROW_BP:ROW_BP + 1, 0:D]
    x = jnp.dot(zt, wp, preferred_element_type=jnp.float32, precision=_HIGHEST) + bp  # [B, D]

    # constants hoisted out of the layer loop (JAX does not CSE broadcasts)
    zcol = jnp.zeros((Bsz, 1), jnp.float32)
    zc1  = jnp.zeros((1, 1), jnp.float32)
    ones = jnp.ones((1, T), jnp.float32)

    # ---- FFTransformerBlock: static unrolled layer loop, x stays in registers ----
    # (At NUM_LAYERS > ~4 switch to lax.fori_loop to bound vreg live ranges; at larger
    #  batch, add a leading "parallel" grid axis so v7x's second TensorCore helps and make
    #  the output lane-dense.  Neither applies at B=2, L=2.)
    for l in range(NUM_LAYERS):
        off = l * SCAL_PER_LAYER
        wq = scal_ref[off + 0]; wk = scal_ref[off + 1]; wv = scal_ref[off + 2]
        bq = scal_ref[off + 3]; bk = scal_ref[off + 4]; bv = scal_ref[off + 5]
        ow = scal_ref[off + 6]; ob = scal_ref[off + 7]; c2b = scal_ref[off + 8]

        # ---- self attention (embed_dim = num_heads = 1, scaling = 1/sqrt(1)) ----
        q = x * wq + bq
        k = x * wk + bk
        v = x * wv + bv
        # scores[t,s] = q[t]*k[s]  =>  max_s scores[t,s] = q>=0 ? q*max(k) : q*min(k)
        kmax = jnp.max(k, axis=-1, keepdims=True)                          # [B, 1]
        kmin = jnp.min(k, axis=-1, keepdims=True)
        rowmax = jnp.where(q >= 0.0, q * kmax, q * kmin)                   # [B, T]
        e = jnp.exp(q[:, :, None] * k[:, None, :] - rowmax[:, :, None])    # [B, T, T]
        denom = jnp.sum(e, axis=-1)                                        # [B, T]
        attn = jnp.sum(e * v[:, None, :], axis=-1) / denom                 # exact softmax
        src2 = attn * ow + ob                                              # out_proj (scalars)
        x = x + 2.0 * src2             # src = src + dropout1(src2); src = src + src2 (eval)

        # ---- LayerNorm1 over T (= style_dim) ----
        nl = w_ref[ROW_NORM + l * 8: ROW_NORM + l * 8 + 4, 0:D]            # [4, D]
        mean = jnp.mean(x, axis=-1, keepdims=True)
        var = jnp.mean((x - mean) ** 2, axis=-1, keepdims=True)
        x = (x - mean) * lax.rsqrt(var + EPS) * nl[0:1, :] + nl[1:2, :]

        # ---- conv1 (1->H, k=3, p=1) + ReLU + conv2 (H->1, k=3, p=1) on the MXU ----
        x_m1 = jnp.concatenate([zcol, x[:, :T - 1]], axis=1)               # x[t-1], zero padded
        x_p1 = jnp.concatenate([x[:, 1:], zcol], axis=1)                   # x[t+1], zero padded
        # im2col with T on lanes, batches concatenated along lanes; 4th row of ones -> bias.
        cols = jnp.concatenate(
            [jnp.concatenate([x_m1[b:b + 1], x[b:b + 1], x_p1[b:b + 1], ones], axis=0)
             for b in range(Bsz)], axis=1)                                 # [4, B*T]
        c1 = w_ref[ROW_C1 + l * H: ROW_C1 + (l + 1) * H, 0:4]              # [H, 4]
        y1 = jnp.maximum(
            jnp.dot(c1, cols, preferred_element_type=jnp.float32, precision=_HIGHEST),
            0.0)                                                           # [H, B*T]
        c2 = w_ref[ROW_C2 + l * 8: ROW_C2 + l * 8 + 3, 0:H]                # [3, H]
        s = jnp.dot(c2, y1, preferred_element_type=jnp.float32, precision=_HIGHEST)  # [3, B*T]
        # y2[t] = S0[t-1] + S1[t] + S2[t+1] + c2_bias   (taps aligned per batch)
        y2_rows = []
        for b in range(Bsz):
            sb = s[:, b * T:(b + 1) * T]                                   # [3, T]
            s0 = jnp.concatenate([zc1, sb[0:1, :T - 1]], axis=1)           # tap 0 -> y1[t-1]
            s2 = jnp.concatenate([sb[2:3, 1:], zc1], axis=1)               # tap 2 -> y1[t+1]
            y2_rows.append(s0 + sb[1:2, :] + s2)
        y2 = jnp.concatenate(y2_rows, axis=0) + c2b                        # [B, T]
        x = x + y2

        # ---- LayerNorm2 over T ----
        mean = jnp.mean(x, axis=-1, keepdims=True)
        var = jnp.mean((x - mean) ** 2, axis=-1, keepdims=True)
        x = (x - mean) * lax.rsqrt(var + EPS) * nl[2:3, :] + nl[3:4, :]

    o_ref[...] = x.astype(o_ref.dtype)                                     # single final store


# ============================== parameters ==============================

def init_params(key):
    D, dim, H, L = STYLE_DIM, STEP_DIM, HIDDEN_FFN, NUM_LAYERS
    ks = iter(jax.random.split(key, 128))

    def rnd(shape, scale=0.1):
        return (scale * jax.random.normal(next(ks), shape)).astype(jnp.float32)

    raw = {
        # mlp / project_input weights stored as [in, out] (y = x @ W + b)
        "w1": rnd((dim, 4 * dim), 0.2), "b1": rnd((4 * dim,), 0.1),
        "w2": rnd((4 * dim, dim), 0.2), "b2": rnd((dim,), 0.1),
        "wp": rnd((D + dim, D), 0.2),   "bp": rnd((D,), 0.1),
        "layers": [],
    }
    for _ in range(L):
        raw["layers"].append({
            "in_proj_w": rnd((3,), 0.5),   # [wq, wk, wv] (embed_dim == 1)
            "in_proj_b": rnd((3,), 0.1),
            "out_w": rnd((1,), 0.5), "out_b": rnd((1,), 0.1),
            "c1w": rnd((H, 1, 3), 0.3), "c1b": rnd((H,), 0.1),
            "c2w": rnd((1, H, 3), 0.2), "c2b": rnd((1,), 0.1),
            "n1w": 1.0 + rnd((D,), 0.05), "n1b": rnd((D,), 0.05),
            "n2w": 1.0 + rnd((D,), 0.05), "n2b": rnd((D,), 0.05),
        })
    return raw


def pack_params(raw):
    """ONE-TIME host-side packing into (a) a flat SMEM scalar vector and (b) a single
    8-row-aligned [SLAB_ROWS, 128] f32 VMEM weight slab (includes the sinusoidal-embedding
    frequency table).  Called once at init; the per-call path never touches the host."""
    L, D, H, dim = NUM_LAYERS, STYLE_DIM, HIDDEN_FFN, STEP_DIM
    half = dim // 2

    slab = np.zeros((SLAB_ROWS, SLAB_LANES), np.float32)
    slab[ROW_FREQ, :half] = np.exp(np.arange(half, dtype=np.float64)
                                   * -(math.log(10000.0) / (half - 1))).astype(np.float32)
    slab[ROW_W1:ROW_W1 + dim, :4 * dim] = np.asarray(raw["w1"])
    slab[ROW_B1, :4 * dim] = np.asarray(raw["b1"])
    slab[ROW_W2:ROW_W2 + 4 * dim, :dim] = np.asarray(raw["w2"])
    slab[ROW_B2, :dim] = np.asarray(raw["b2"])
    slab[ROW_WP:ROW_WP + D + dim, :D] = np.asarray(raw["wp"])
    slab[ROW_BP, :D] = np.asarray(raw["bp"])

    scal = np.zeros((L * SCAL_PER_LAYER,), np.float32)
    for l, lyr in enumerate(raw["layers"]):
        off = l * SCAL_PER_LAYER
        scal[off + 0:off + 3] = np.asarray(lyr["in_proj_w"])
        scal[off + 3:off + 6] = np.asarray(lyr["in_proj_b"])
        scal[off + 6] = float(lyr["out_w"][0])
        scal[off + 7] = float(lyr["out_b"][0])
        scal[off + 8] = float(lyr["c2b"][0])

        r = ROW_C1 + l * H
        slab[r:r + H, 0:3] = np.asarray(lyr["c1w"][:, 0, :])   # [H, 3] taps
        slab[r:r + H, 3] = np.asarray(lyr["c1b"])              # bias folded via ones-row
        r = ROW_C2 + l * 8
        slab[r:r + 3, :H] = np.asarray(lyr["c2w"][0]).T        # [3, H]: packed[k,h]=w2[0,h,k]
        r = ROW_NORM + l * 8
        slab[r + 0, :D] = np.asarray(lyr["n1w"]); slab[r + 1, :D] = np.asarray(lyr["n1b"])
        slab[r + 2, :D] = np.asarray(lyr["n2w"]); slab[r + 3, :D] = np.asarray(lyr["n2b"])
    return jnp.asarray(scal), jnp.asarray(slab)


# ============================== wrapper (jitted, per-call path) ==============================

def _cost_estimate(Bsz):
    T, H, dim, L = STYLE_DIM, HIDDEN_FFN, STEP_DIM, NUM_LAYERS
    flops = 2 * Bsz * (dim * 4 * dim + 4 * dim * dim + (T + dim) * T)       # mlp + project
    flops += L * (2 * H * 4 * Bsz * T + 2 * 3 * H * Bsz * T + 6 * Bsz * T * T)  # convs + attn
    trans = L * Bsz * T * T + 12 * Bsz * dim + 8 * L * Bsz                  # exp / tanh / rsqrt
    byts = SLAB_ROWS * SLAB_LANES * 4 + Bsz * (T + 1) * 4 + Bsz * T * 4
    return pl.CostEstimate(flops=int(flops), transcendentals=int(trans),
                           bytes_accessed=int(byts))


@jax.jit
def diffnet_forward(z, diffusion_step, wslab, scal):
    Bsz = z.shape[0]
    D = STYLE_DIM
    step = diffusion_step.astype(jnp.float32).reshape(Bsz, 1)
    z2d = z.astype(jnp.float32).reshape(Bsz, D)

    vmem = pl.BlockSpec(memory_space=pltpu.MemorySpace.VMEM)
    smem = pl.BlockSpec(memory_space=pltpu.MemorySpace.SMEM)

    out2d = pl.pallas_call(
        diffnet_kernel,
        out_shape=jax.ShapeDtypeStruct((Bsz, D), jnp.float32),
        in_specs=[smem, vmem, vmem, vmem],   # 4 prologue DMAs total, everything resident
        out_specs=vmem,
        cost_estimate=_cost_estimate(Bsz),
    )(scal, wslab, step, z2d)

    return out2d.reshape(Bsz, 1, D)


# ============================== pure-JAX reference ==============================

def _layernorm(x, w, b, eps=EPS):
    mean = jnp.mean(x, axis=-1, keepdims=True)
    var = jnp.mean((x - mean) ** 2, axis=-1, keepdims=True)
    return (x - mean) / jnp.sqrt(var + eps) * w + b


def reference_forward(z, diffusion_step, raw):
    HP = lax.Precision.HIGHEST
    D, dim = STYLE_DIM, STEP_DIM
    Bsz = z.shape[0]
    half = dim // 2
    step = diffusion_step.astype(jnp.float32)
    freq = jnp.exp(jnp.arange(half, dtype=jnp.float32) * -(math.log(10000.0) / (half - 1)))
    emb = step[:, None] * freq[None, :]
    emb = jnp.concatenate([jnp.sin(emb), jnp.cos(emb)], axis=-1)
    h = jnp.dot(emb, raw["w1"], precision=HP) + raw["b1"]
    h = h * jnp.tanh(jax.nn.softplus(h))
    t = jnp.dot(h, raw["w2"], precision=HP) + raw["b2"]
    x = jnp.dot(jnp.concatenate([z.reshape(Bsz, D), t], axis=-1), raw["wp"],
                precision=HP) + raw["bp"]
    for lyr in raw["layers"]:
        wq, wk, wv = lyr["in_proj_w"][0], lyr["in_proj_w"][1], lyr["in_proj_w"][2]
        bq, bk, bv = lyr["in_proj_b"][0], lyr["in_proj_b"][1], lyr["in_proj_b"][2]
        q = x * wq + bq
        k = x * wk + bk
        v = x * wv + bv
        scores = q[:, :, None] * k[:, None, :]
        p = jax.nn.softmax(scores, axis=-1)
        attn = jnp.sum(p * v[:, None, :], axis=-1)
        src2 = attn * lyr["out_w"][0] + lyr["out_b"][0]
        x = x + 2.0 * src2
        x = _layernorm(x, lyr["n1w"], lyr["n1b"])
        xc = x[:, None, :]
        y1 = lax.conv_general_dilated(xc, lyr["c1w"], (1,), [(1, 1)],
                                      dimension_numbers=("NCH", "OIH", "NCH"),
                                      precision=HP)
        y1 = jnp.maximum(y1 + lyr["c1b"][None, :, None], 0.0)
        y2 = lax.conv_general_dilated(y1, lyr["c2w"], (1,), [(1, 1)],
                                      dimension_numbers=("NCH", "OIH", "NCH"),
                                      precision=HP)
        y2 = y2 + lyr["c2b"][None, :, None]
        x = x + y2[:, 0, :]
        x = _layernorm(x, lyr["n2w"], lyr["n2b"])
    return x.reshape(Bsz, 1, D)


# ============================== main ==============================

if __name__ == "__main__":
    key = jax.random.PRNGKey(0)
    k_params, k_z = jax.random.split(key)
    raw = init_params(k_params)

    # One-time packing at init (out of the per-call path, per the perf review).
    scal, wslab = pack_params(raw)

    z = jax.random.normal(k_z, (B, 1, STYLE_DIM), dtype=jnp.float32)
    diffusion_step = jnp.arange(B, dtype=jnp.float32) * 5.0 + 3.0   # [B]

    out = jax.block_until_ready(diffnet_forward(z, diffusion_step, wslab, scal))
    assert out.shape == (B, 1, STYLE_DIM)

    ref = jax.block_until_ready(reference_forward(z, diffusion_step, raw))
    # Tolerance tightened 20x vs. the previous revision: all dots run at precision=HIGHEST
    # on both sides, the analytic row-max is bit-identical to the true max, and the softmax
    # denominator uses an exact divide (no approx reciprocal).  Remaining differences are
    # EUP-vs-XLA transcendental ULPs and accumulation-order noise.
    np.testing.assert_allclose(np.asarray(out), np.asarray(ref), rtol=1e-3, atol=1e-3)

    print("KERNEL_OK")
</pallas_src>

<mosaic_0001>
module attributes {stable_mosaic.version = 11 : i64} {
  func.func @diffnet_kernel(%arg0: memref<32xf32, #tpu.memory_space<smem>>, %arg1: memref<320x128xf32, #tpu.memory_space<vmem>>, %arg2: memref<2x1xf32, #tpu.memory_space<vmem>>, %arg3: memref<2x32xf32, #tpu.memory_space<vmem>>, %arg4: memref<2x32xf32, #tpu.memory_space<vmem>>) attributes {dimension_semantics = [], scalar_prefetch = 0 : i64, scratch_operands = 0 : i64, tpu.core_type = #tpu.core_type<tc>} {
    %c0 = arith.constant 0 : index
    %c0_0 = arith.constant 0 : index
    %0 = vector.load %arg1[%c0, %c0_0] : memref<320x128xf32, #tpu.memory_space<vmem>>, vector<1x8xf32>
    %c0_1 = arith.constant 0 : index
    %c0_2 = arith.constant 0 : index
    %1 = vector.load %arg2[%c0_1, %c0_2] : memref<2x1xf32, #tpu.memory_space<vmem>>, vector<2x1xf32>
    %2 = vector.broadcast %1 : vector<2x1xf32> to vector<2x8xf32>
    %3 = vector.broadcast %0 : vector<1x8xf32> to vector<2x8xf32>
    %4 = arith.mulf %2, %3 : vector<2x8xf32>
    %5 = math.sin %4 : vector<2x8xf32>
    %6 = math.cos %4 : vector<2x8xf32>
    %7 = tpu.concatenate %5, %6 in 1 : vector<2x8xf32>, vector<2x8xf32> -> vector<2x16xf32>
    %c8 = arith.constant 8 : index
    %c0_3 = arith.constant 0 : index
    %8 = vector.load %arg1[%c8, %c0_3] : memref<320x128xf32, #tpu.memory_space<vmem>>, vector<16x64xf32>
    %c24 = arith.constant 24 : index
    %c0_4 = arith.constant 0 : index
    %9 = vector.load %arg1[%c24, %c0_4] : memref<320x128xf32, #tpu.memory_space<vmem>>, vector<1x64xf32>
    %cst = arith.constant dense<0.000000e+00> : vector<2x64xf32>
    %10 = tpu.matmul %7, %8, %cst {dimension_numbers = #tpu.dot_dimension_numbers<[1], [0], [0], [1], [0, 0, 1, 1], [], []>, precision = #tpu.contract_precision<fp32>} : vector<2x16xf32>, vector<16x64xf32>, vector<2x64xf32> -> vector<2x64xf32>
    %11 = vector.broadcast %9 : vector<1x64xf32> to vector<2x64xf32>
    %12 = arith.addf %10, %11 : vector<2x64xf32>
    %cst_5 = arith.constant 2.000000e+01 : f32
    %13 = vector.broadcast %cst_5 : f32 to vector<2x64xf32>
    %14 = arith.cmpf ogt, %12, %13 : vector<2x64xf32>
    %cst_6 = arith.constant 2.000000e+01 : f32
    %15 = vector.broadcast %cst_6 : f32 to vector<2x64xf32>
    %16 = arith.minimumf %12, %15 : vector<2x64xf32>
    %17 = math.exp %16 : vector<2x64xf32>
    %18 = math.log1p %17 : vector<2x64xf32>
    %19 = arith.select %14, %12, %18 : vector<2x64xi1>, vector<2x64xf32>
    %20 = math.tanh %19 : vector<2x64xf32>
    %21 = arith.mulf %12, %20 : vector<2x64xf32>
    %c32 = arith.constant 32 : index
    %c0_7 = arith.constant 0 : index
    %22 = vector.load %arg1[%c32, %c0_7] : memref<320x128xf32, #tpu.memory_space<vmem>>, vector<64x16xf32>
    %c96 = arith.constant 96 : index
    %c0_8 = arith.constant 0 : index
    %23 = vector.load %arg1[%c96, %c0_8] : memref<320x128xf32, #tpu.memory_space<vmem>>, vector<1x16xf32>
    %cst_9 = arith.constant dense<0.000000e+00> : vector<2x16xf32>
    %24 = tpu.matmul %21, %22, %cst_9 {dimension_numbers = #tpu.dot_dimension_numbers<[1], [0], [0], [1], [0, 0, 1, 1], [], []>, precision = #tpu.contract_precision<fp32>} : vector<2x64xf32>, vector<64x16xf32>, vector<2x16xf32> -> vector<2x16xf32>
    %25 = vector.broadcast %23 : vector<1x16xf32> to vector<2x16xf32>
    %26 = arith.addf %24, %25 : vector<2x16xf32>
    %c0_10 = arith.constant 0 : index
    %c0_11 = arith.constant 0 : index
    %27 = vector.load %arg3[%c0_10, %c0_11] : memref<2x32xf32, #tpu.memory_space<vmem>>, vector<2x32xf32>
    %28 = tpu.concatenate %27, %26 in 1 : vector<2x32xf32>, vector<2x16xf32> -> vector<2x48xf32>
    %c104 = arith.constant 104 : index
    %c0_12 = arith.constant 0 : index
    %29 = vector.load %arg1[%c104, %c0_12] : memref<320x128xf32, #tpu.memory_space<vmem>>, vector<48x32xf32>
    %c152 = arith.constant 152 : index
    %c0_13 = arith.constant 0 : index
    %30 = vector.load %arg1[%c152, %c0_13] : memref<320x128xf32, #tpu.memory_space<vmem>>, vector<1x32xf32>
    %cst_14 = arith.constant dense<0.000000e+00> : vector<2x32xf32>
    %31 = tpu.matmul %28, %29, %cst_14 {dimension_numbers = #tpu.dot_dimension_numbers<[1], [0], [0], [1], [0, 0, 1, 1], [], []>, precision = #tpu.contract_precision<fp32>} : vector<2x48xf32>, vector<48x32xf32>, vector<2x32xf32> -> vector<2x32xf32>
    %32 = vector.broadcast %30 : vector<1x32xf32> to vector<2x32xf32>
    %33 = arith.addf %31, %32 : vector<2x32xf32>
    %cst_15 = arith.constant 0.000000e+00 : f32
    %34 = vector.broadcast %cst_15 : f32 to vector<2x1xf32>
    %cst_16 = arith.constant 0.000000e+00 : f32
    %35 = vector.broadcast %cst_16 : f32 to vector<1x1xf32>
    %cst_17 = arith.constant 1.000000e+00 : f32
    %36 = vector.broadcast %cst_17 : f32 to vector<1x32xf32>
    %c0_18 = arith.constant 0 : index
    %37 = memref.load %arg0[%c0_18] : memref<32xf32, #tpu.memory_space<smem>>
    %c1 = arith.constant 1 : index
    %38 = memref.load %arg0[%c1] : memref<32xf32, #tpu.memory_space<smem>>
    %c2 = arith.constant 2 : index
    %39 = memref.load %arg0[%c2] : memref<32xf32, #tpu.memory_space<smem>>
    %c3 = arith.constant 3 : index
    %40 = memref.load %arg0[%c3] : memref<32xf32, #tpu.memory_space<smem>>
    %c4 = arith.constant 4 : index
    %41 = memref.load %arg0[%c4] : memref<32xf32, #tpu.memory_space<smem>>
    %c5 = arith.constant 5 : index
    %42 = memref.load %arg0[%c5] : memref<32xf32, #tpu.memory_space<smem>>
    %c6 = arith.constant 6 : index
    %43 = memref.load %arg0[%c6] : memref<32xf32, #tpu.memory_space<smem>>
    %c7 = arith.constant 7 : index
    %44 = memref.load %arg0[%c7] : memref<32xf32, #tpu.memory_space<smem>>
    %c8_19 = arith.constant 8 : index
    %45 = memref.load %arg0[%c8_19] : memref<32xf32, #tpu.memory_space<smem>>
    %46 = vector.broadcast %37 : f32 to vector<2x32xf32>
    %47 = arith.mulf %33, %46 : vector<2x32xf32>
    %48 = vector.broadcast %40 : f32 to vector<2x32xf32>
    %49 = arith.addf %47, %48 : vector<2x32xf32>
    %50 = vector.broadcast %38 : f32 to vector<2x32xf32>
    %51 = arith.mulf %33, %50 : vector<2x32xf32>
    %52 = vector.broadcast %41 : f32 to vector<2x32xf32>
    %53 = arith.addf %51, %52 : vector<2x32xf32>
    %54 = vector.broadcast %39 : f32 to vector<2x32xf32>
    %55 = arith.mulf %33, %54 : vector<2x32xf32>
    %56 = vector.broadcast %42 : f32 to vector<2x32xf32>
    %57 = arith.addf %55, %56 : vector<2x32xf32>
    %cst_20 = arith.constant dense<0xFF800000> : vector<2xf32>
    %58 = vector.multi_reduction <maximumf>, %53, %cst_20 [1] : vector<2x32xf32> to vector<2xf32>
    %59 = vector.shape_cast %58 : vector<2xf32> to vector<2x1xf32>
    %cst_21 = arith.constant dense<0x7F800000> : vector<2xf32>
    %60 = vector.multi_reduction <minimumf>, %53, %cst_21 [1] : vector<2x32xf32> to vector<2xf32>
    %61 = vector.shape_cast %60 : vector<2xf32> to vector<2x1xf32>
    %cst_22 = arith.constant 0.000000e+00 : f32
    %62 = vector.broadcast %cst_22 : f32 to vector<2x32xf32>
    %63 = arith.cmpf oge, %49, %62 : vector<2x32xf32>
    %64 = vector.broadcast %59 : vector<2x1xf32> to vector<2x32xf32>
    %65 = arith.mulf %49, %64 : vector<2x32xf32>
    %66 = vector.broadcast %61 : vector<2x1xf32> to vector<2x32xf32>
    %67 = arith.mulf %49, %66 : vector<2x32xf32>
    %68 = arith.select %63, %65, %67 : vector<2x32xi1>, vector<2x32xf32>
    %69 = vector.shape_cast %49 : vector<2x32xf32> to vector<2x32x1xf32>
    %70 = vector.shape_cast %53 : vector<2x32xf32> to vector<2x1x32xf32>
    %71 = vector.broadcast %69 : vector<2x32x1xf32> to vector<2x32x32xf32>
    %72 = vector.broadcast %70 : vector<2x1x32xf32> to vector<2x32x32xf32>
    %73 = arith.mulf %71, %72 : vector<2x32x32xf32>
    %74 = vector.shape_cast %68 : vector<2x32xf32> to vector<2x32x1xf32>
    %75 = vector.broadcast %74 : vector<2x32x1xf32> to vector<2x32x32xf32>
    %76 = arith.subf %73, %75 : vector<2x32x32xf32>
    %77 = math.exp %76 : vector<2x32x32xf32>
    %cst_23 = arith.constant dense<0.000000e+00> : vector<2x32xf32>
    %78 = vector.multi_reduction <add>, %77, %cst_23 [2] : vector<2x32x32xf32> to vector<2x32xf32>
    %79 = vector.shape_cast %57 : vector<2x32xf32> to vector<2x1x32xf32>
    %80 = vector.broadcast %79 : vector<2x1x32xf32> to vector<2x32x32xf32>
    %81 = arith.mulf %77, %80 : vector<2x32x32xf32>
    %cst_24 = arith.constant dense<0.000000e+00> : vector<2x32xf32>
    %82 = vector.multi_reduction <add>, %81, %cst_24 [2] : vector<2x32x32xf32> to vector<2x32xf32>
    %83 = arith.divf %82, %78 : vector<2x32xf32>
    %84 = vector.broadcast %43 : f32 to vector<2x32xf32>
    %85 = arith.mulf %83, %84 : vector<2x32xf32>
    %86 = vector.broadcast %44 : f32 to vector<2x32xf32>
    %87 = arith.addf %85, %86 : vector<2x32xf32>
    %cst_25 = arith.constant 2.000000e+00 : f32
    %88 = vector.broadcast %cst_25 : f32 to vector<2x32xf32>
    %89 = arith.mulf %88, %87 : vector<2x32xf32>
    %90 = arith.addf %33, %89 : vector<2x32xf32>
    %c304 = arith.constant 304 : index
    %c0_26 = arith.constant 0 : index
    %91 = vector.load %arg1[%c304, %c0_26] : memref<320x128xf32, #tpu.memory_space<vmem>>, vector<4x32xf32>
    %cst_27 = arith.constant dense<0.000000e+00> : vector<2xf32>
    %92 = vector.multi_reduction <add>, %90, %cst_27 [1] : vector<2x32xf32> to vector<2xf32>
    %93 = vector.shape_cast %92 : vector<2xf32> to vector<2x1xf32>
    %cst_28 = arith.constant 3.200000e+01 : f32
    %94 = vector.broadcast %cst_28 : f32 to vector<2x1xf32>
    %95 = arith.divf %93, %94 : vector<2x1xf32>
    %96 = vector.broadcast %95 : vector<2x1xf32> to vector<2x32xf32>
    %97 = arith.subf %90, %96 : vector<2x32xf32>
    %98 = arith.mulf %97, %97 : vector<2x32xf32>
    %cst_29 = arith.constant dense<0.000000e+00> : vector<2xf32>
    %99 = vector.multi_reduction <add>, %98, %cst_29 [1] : vector<2x32xf32> to vector<2xf32>
    %100 = vector.shape_cast %99 : vector<2xf32> to vector<2x1xf32>
    %cst_30 = arith.constant 3.200000e+01 : f32
    %101 = vector.broadcast %cst_30 : f32 to vector<2x1xf32>
    %102 = arith.divf %100, %101 : vector<2x1xf32>
    %103 = vector.broadcast %95 : vector<2x1xf32> to vector<2x32xf32>
    %104 = arith.subf %90, %103 : vector<2x32xf32>
    %cst_31 = arith.constant 9.99999974E-6 : f32
    %105 = vector.broadcast %cst_31 : f32 to vector<2x1xf32>
    %106 = arith.addf %102, %105 : vector<2x1xf32>
    %107 = math.rsqrt %106 : vector<2x1xf32>
    %108 = vector.broadcast %107 : vector<2x1xf32> to vector<2x32xf32>
    %109 = arith.mulf %104, %108 : vector<2x32xf32>
    %110 = vector.extract_strided_slice %91 {offsets = [0, 0], sizes = [1, 32], strides = [1, 1]} : vector<4x32xf32> to vector<1x32xf32>
    %111 = vector.broadcast %110 : vector<1x32xf32> to vector<2x32xf32>
    %112 = arith.mulf %109, %111 : vector<2x32xf32>
    %113 = vector.extract_strided_slice %91 {offsets = [1, 0], sizes = [1, 32], strides = [1, 1]} : vector<4x32xf32> to vector<1x32xf32>
    %114 = vector.broadcast %113 : vector<1x32xf32> to vector<2x32xf32>
    %115 = arith.addf %112, %114 : vector<2x32xf32>
    %116 = vector.extract_strided_slice %115 {offsets = [0, 0], sizes = [2, 31], strides = [1, 1]} : vector<2x32xf32> to vector<2x31xf32>
    %117 = tpu.concatenate %34, %116 in 1 : vector<2x1xf32>, vector<2x31xf32> -> vector<2x32xf32>
    %118 = vector.extract_strided_slice %115 {offsets = [0, 1], sizes = [2, 31], strides = [1, 1]} : vector<2x32xf32> to vector<2x31xf32>
    %119 = tpu.concatenate %118, %34 in 1 : vector<2x31xf32>, vector<2x1xf32> -> vector<2x32xf32>
    %120 = vector.extract_strided_slice %117 {offsets = [0, 0], sizes = [1, 32], strides = [1, 1]} : vector<2x32xf32> to vector<1x32xf32>
    %121 = vector.extract_strided_slice %115 {offsets = [0, 0], sizes = [1, 32], strides = [1, 1]} : vector<2x32xf32> to vector<1x32xf32>
    %122 = vector.extract_strided_slice %119 {offsets = [0, 0], sizes = [1, 32], strides = [1, 1]} : vector<2x32xf32> to vector<1x32xf32>
    %123 = tpu.concatenate %120, %121, %122, %36 in 0 : vector<1x32xf32>, vector<1x32xf32>, vector<1x32xf32>, vector<1x32xf32> -> vector<4x32xf32>
    %124 = vector.extract_strided_slice %117 {offsets = [1, 0], sizes = [1, 32], strides = [1, 1]} : vector<2x32xf32> to vector<1x32xf32>
    %125 = vector.extract_strided_slice %115 {offsets = [1, 0], sizes = [1, 32], strides = [1, 1]} : vector<2x32xf32> to vector<1x32xf32>
    %126 = vector.extract_strided_slice %119 {offsets = [1, 0], sizes = [1, 32], strides = [1, 1]} : vector<2x32xf32> to vector<1x32xf32>
    %127 = tpu.concatenate %124, %125, %126, %36 in 0 : vector<1x32xf32>, vector<1x32xf32>, vector<1x32xf32>, vector<1x32xf32> -> vector<4x32xf32>
    %128 = tpu.concatenate %123, %127 in 1 : vector<4x32xf32>, vector<4x32xf32> -> vector<4x64xf32>
    %c160 = arith.constant 160 : index
    %c0_32 = arith.constant 0 : index
    %129 = vector.load %arg1[%c160, %c0_32] : memref<320x128xf32, #tpu.memory_space<vmem>>, vector<64x4xf32>
    %cst_33 = arith.constant dense<0.000000e+00> : vector<64x64xf32>
    %130 = tpu.matmul %129, %128, %cst_33 {dimension_numbers = #tpu.dot_dimension_numbers<[1], [0], [0], [1], [0, 0, 1, 1], [], []>, precision = #tpu.contract_precision<fp32>} : vector<64x4xf32>, vector<4x64xf32>, vector<64x64xf32> -> vector<64x64xf32>
    %cst_34 = arith.constant 0.000000e+00 : f32
    %131 = vector.broadcast %cst_34 : f32 to vector<64x64xf32>
    %132 = arith.maximumf %130, %131 : vector<64x64xf32>
    %c288 = arith.constant 288 : index
    %c0_35 = arith.constant 0 : index
    %133 = vector.load %arg1[%c288, %c0_35] : memref<320x128xf32, #tpu.memory_space<vmem>>, vector<3x64xf32>
    %cst_36 = arith.constant dense<0.000000e+00> : vector<3x64xf32>
    %134 = tpu.matmul %133, %132, %cst_36 {dimension_numbers = #tpu.dot_dimension_numbers<[1], [0], [0], [1], [0, 0, 1, 1], [], []>, precision = #tpu.contract_precision<fp32>} : vector<3x64xf32>, vector<64x64xf32>, vector<3x64xf32> -> vector<3x64xf32>
    %135 = vector.extract_strided_slice %134 {offsets = [0, 0], sizes = [3, 32], strides = [1, 1]} : vector<3x64xf32> to vector<3x32xf32>
    %136 = vector.extract_strided_slice %135 {offsets = [0, 0], sizes = [1, 31], strides = [1, 1]} : vector<3x32xf32> to vector<1x31xf32>
    %137 = tpu.concatenate %35, %136 in 1 : vector<1x1xf32>, vector<1x31xf32> -> vector<1x32xf32>
    %138 = vector.extract_strided_slice %135 {offsets = [2, 1], sizes = [1, 31], strides = [1, 1]} : vector<3x32xf32> to vector<1x31xf32>
    %139 = tpu.concatenate %138, %35 in 1 : vector<1x31xf32>, vector<1x1xf32> -> vector<1x32xf32>
    %140 = vector.extract_strided_slice %135 {offsets = [1, 0], sizes = [1, 32], strides = [1, 1]} : vector<3x32xf32> to vector<1x32xf32>
    %141 = arith.addf %137, %140 : vector<1x32xf32>
    %142 = arith.addf %141, %139 : vector<1x32xf32>
    %143 = vector.extract_strided_slice %134 {offsets = [0, 32], sizes = [3, 32], strides = [1, 1]} : vector<3x64xf32> to vector<3x32xf32>
    %144 = vector.extract_strided_slice %143 {offsets = [0, 0], sizes = [1, 31], strides = [1, 1]} : vector<3x32xf32> to vector<1x31xf32>
    %145 = tpu.concatenate %35, %144 in 1 : vector<1x1xf32>, vector<1x31xf32> -> vector<1x32xf32>
    %146 = vector.extract_strided_slice %143 {offsets = [2, 1], sizes = [1, 31], strides = [1, 1]} : vector<3x32xf32> to vector<1x31xf32>
    %147 = tpu.concatenate %146, %35 in 1 : vector<1x31xf32>, vector<1x1xf32> -> vector<1x32xf32>
    %148 = vector.extract_strided_slice %143 {offsets = [1, 0], sizes = [1, 32], strides = [1, 1]} : vector<3x32xf32> to vector<1x32xf32>
    %149 = arith.addf %145, %148 : vector<1x32xf32>
    %150 = arith.addf %149, %147 : vector<1x32xf32>
    %151 = tpu.concatenate %142, %150 in 0 : vector<1x32xf32>, vector<1x32xf32> -> vector<2x32xf32>
    %152 = vector.broadcast %45 : f32 to vector<2x32xf32>
    %153 = arith.addf %151, %152 : vector<2x32xf32>
    %154 = arith.addf %115, %153 : vector<2x32xf32>
    %cst_37 = arith.constant dense<0.000000e+00> : vector<2xf32>
    %155 = vector.multi_reduction <add>, %154, %cst_37 [1] : vector<2x32xf32> to vector<2xf32>
    %156 = vector.shape_cast %155 : vector<2xf32> to vector<2x1xf32>
    %cst_38 = arith.constant 3.200000e+01 : f32
    %157 = vector.broadcast %cst_38 : f32 to vector<2x1xf32>
    %158 = arith.divf %156, %157 : vector<2x1xf32>
    %159 = vector.broadcast %158 : vector<2x1xf32> to vector<2x32xf32>
    %160 = arith.subf %154, %159 : vector<2x32xf32>
    %161 = arith.mulf %160, %160 : vector<2x32xf32>
    %cst_39 = arith.constant dense<0.000000e+00> : vector<2xf32>
    %162 = vector.multi_reduction <add>, %161, %cst_39 [1] : vector<2x32xf32> to vector<2xf32>
    %163 = vector.shape_cast %162 : vector<2xf32> to vector<2x1xf32>
    %cst_40 = arith.constant 3.200000e+01 : f32
    %164 = vector.broadcast %cst_40 : f32 to vector<2x1xf32>
    %165 = arith.divf %163, %164 : vector<2x1xf32>
    %166 = vector.broadcast %158 : vector<2x1xf32> to vector<2x32xf32>
    %167 = arith.subf %154, %166 : vector<2x32xf32>
    %cst_41 = arith.constant 9.99999974E-6 : f32
    %168 = vector.broadcast %cst_41 : f32 to vector<2x1xf32>
    %169 = arith.addf %165, %168 : vector<2x1xf32>
    %170 = math.rsqrt %169 : vector<2x1xf32>
    %171 = vector.broadcast %170 : vector<2x1xf32> to vector<2x32xf32>
    %172 = arith.mulf %167, %171 : vector<2x32xf32>
    %173 = vector.extract_strided_slice %91 {offsets = [2, 0], sizes = [1, 32], strides = [1, 1]} : vector<4x32xf32> to vector<1x32xf32>
    %174 = vector.broadcast %173 : vector<1x32xf32> to vector<2x32xf32>
    %175 = arith.mulf %172, %174 : vector<2x32xf32>
    %176 = vector.extract_strided_slice %91 {offsets = [3, 0], sizes = [1, 32], strides = [1, 1]} : vector<4x32xf32> to vector<1x32xf32>
    %177 = vector.broadcast %176 : vector<1x32xf32> to vector<2x32xf32>
    %178 = arith.addf %175, %177 : vector<2x32xf32>
    %c16 = arith.constant 16 : index
    %179 = memref.load %arg0[%c16] : memref<32xf32, #tpu.memory_space<smem>>
    %c17 = arith.constant 17 : index
    %180 = memref.load %arg0[%c17] : memref<32xf32, #tpu.memory_space<smem>>
    %c18 = arith.constant 18 : index
    %181 = memref.load %arg0[%c18] : memref<32xf32, #tpu.memory_space<smem>>
    %c19 = arith.constant 19 : index
    %182 = memref.load %arg0[%c19] : memref<32xf32, #tpu.memory_space<smem>>
    %c20 = arith.constant 20 : index
    %183 = memref.load %arg0[%c20] : memref<32xf32, #tpu.memory_space<smem>>
    %c21 = arith.constant 21 : index
    %184 = memref.load %arg0[%c21] : memref<32xf32, #tpu.memory_space<smem>>
    %c22 = arith.constant 22 : index
    %185 = memref.load %arg0[%c22] : memref<32xf32, #tpu.memory_space<smem>>
    %c23 = arith.constant 23 : index
    %186 = memref.load %arg0[%c23] : memref<32xf32, #tpu.memory_space<smem>>
    %c24_42 = arith.constant 24 : index
    %187 = memref.load %arg0[%c24_42] : memref<32xf32, #tpu.memory_space<smem>>
    %188 = vector.broadcast %179 : f32 to vector<2x32xf32>
    %189 = arith.mulf %178, %188 : vector<2x32xf32>
    %190 = vector.broadcast %182 : f32 to vector<2x32xf32>
    %191 = arith.addf %189, %190 : vector<2x32xf32>
    %192 = vector.broadcast %180 : f32 to vector<2x32xf32>
    %193 = arith.mulf %178, %192 : vector<2x32xf32>
    %194 = vector.broadcast %183 : f32 to vector<2x32xf32>
    %195 = arith.addf %193, %194 : vector<2x32xf32>
    %196 = vector.broadcast %181 : f32 to vector<2x32xf32>
    %197 = arith.mulf %178, %196 : vector<2x32xf32>
    %198 = vector.broadcast %184 : f32 to vector<2x32xf32>
    %199 = arith.addf %197, %198 : vector<2x32xf32>
    %cst_43 = arith.constant dense<0xFF800000> : vector<2xf32>
    %200 = vector.multi_reduction <maximumf>, %195, %cst_43 [1] : vector<2x32xf32> to vector<2xf32>
    %201 = vector.shape_cast %200 : vector<2xf32> to vector<2x1xf32>
    %cst_44 = arith.constant dense<0x7F800000> : vector<2xf32>
    %202 = vector.multi_reduction <minimumf>, %195, %cst_44 [1] : vector<2x32xf32> to vector<2xf32>
    %203 = vector.shape_cast %202 : vector<2xf32> to vector<2x1xf32>
    %cst_45 = arith.constant 0.000000e+00 : f32
    %204 = vector.broadcast %cst_45 : f32 to vector<2x32xf32>
    %205 = arith.cmpf oge, %191, %204 : vector<2x32xf32>
    %206 = vector.broadcast %201 : vector<2x1xf32> to vector<2x32xf32>
    %207 = arith.mulf %191, %206 : vector<2x32xf32>
    %208 = vector.broadcast %203 : vector<2x1xf32> to vector<2x32xf32>
    %209 = arith.mulf %191, %208 : vector<2x32xf32>
    %210 = arith.select %205, %207, %209 : vector<2x32xi1>, vector<2x32xf32>
    %211 = vector.shape_cast %191 : vector<2x32xf32> to vector<2x32x1xf32>
    %212 = vector.shape_cast %195 : vector<2x32xf32> to vector<2x1x32xf32>
    %213 = vector.broadcast %211 : vector<2x32x1xf32> to vector<2x32x32xf32>
    %214 = vector.broadcast %212 : vector<2x1x32xf32> to vector<2x32x32xf32>
    %215 = arith.mulf %213, %214 : vector<2x32x32xf32>
    %216 = vector.shape_cast %210 : vector<2x32xf32> to vector<2x32x1xf32>
    %217 = vector.broadcast %216 : vector<2x32x1xf32> to vector<2x32x32xf32>
    %218 = arith.subf %215, %217 : vector<2x32x32xf32>
    %219 = math.exp %218 : vector<2x32x32xf32>
    %cst_46 = arith.constant dense<0.000000e+00> : vector<2x32xf32>
    %220 = vector.multi_reduction <add>, %219, %cst_46 [2] : vector<2x32x32xf32> to vector<2x32xf32>
    %221 = vector.shape_cast %199 : vector<2x32xf32> to vector<2x1x32xf32>
    %222 = vector.broadcast %221 : vector<2x1x32xf32> to vector<2x32x32xf32>
    %223 = arith.mulf %219, %222 : vector<2x32x32xf32>
    %cst_47 = arith.constant dense<0.000000e+00> : vector<2x32xf32>
    %224 = vector.multi_reduction <add>, %223, %cst_47 [2] : vector<2x32x32xf32> to vector<2x32xf32>
    %225 = arith.divf %224, %220 : vector<2x32xf32>
    %226 = vector.broadcast %185 : f32 to vector<2x32xf32>
    %227 = arith.mulf %225, %226 : vector<2x32xf32>
    %228 = vector.broadcast %186 : f32 to vector<2x32xf32>
    %229 = arith.addf %227, %228 : vector<2x32xf32>
    %cst_48 = arith.constant 2.000000e+00 : f32
    %230 = vector.broadcast %cst_48 : f32 to vector<2x32xf32>
    %231 = arith.mulf %230, %229 : vector<2x32xf32>
    %232 = arith.addf %178, %231 : vector<2x32xf32>
    %c312 = arith.constant 312 : index
    %c0_49 = arith.constant 0 : index
    %233 = vector.load %arg1[%c312, %c0_49] : memref<320x128xf32, #tpu.memory_space<vmem>>, vector<4x32xf32>
    %cst_50 = arith.constant dense<0.000000e+00> : vector<2xf32>
    %234 = vector.multi_reduction <add>, %232, %cst_50 [1] : vector<2x32xf32> to vector<2xf32>
    %235 = vector.shape_cast %234 : vector<2xf32> to vector<2x1xf32>
    %cst_51 = arith.constant 3.200000e+01 : f32
    %236 = vector.broadcast %cst_51 : f32 to vector<2x1xf32>
    %237 = arith.divf %235, %236 : vector<2x1xf32>
    %238 = vector.broadcast %237 : vector<2x1xf32> to vector<2x32xf32>
    %239 = arith.subf %232, %238 : vector<2x32xf32>
    %240 = arith.mulf %239, %239 : vector<2x32xf32>
    %cst_52 = arith.constant dense<0.000000e+00> : vector<2xf32>
    %241 = vector.multi_reduction <add>, %240, %cst_52 [1] : vector<2x32xf32> to vector<2xf32>
    %242 = vector.shape_cast %241 : vector<2xf32> to vector<2x1xf32>
    %cst_53 = arith.constant 3.200000e+01 : f32
    %243 = vector.broadcast %cst_53 : f32 to vector<2x1xf32>
    %244 = arith.divf %242, %243 : vector<2x1xf32>
    %245 = vector.broadcast %237 : vector<2x1xf32> to vector<2x32xf32>
    %246 = arith.subf %232, %245 : vector<2x32xf32>
    %cst_54 = arith.constant 9.99999974E-6 : f32
    %247 = vector.broadcast %cst_54 : f32 to vector<2x1xf32>
    %248 = arith.addf %244, %247 : vector<2x1xf32>
    %249 = math.rsqrt %248 : vector<2x1xf32>
    %250 = vector.broadcast %249 : vector<2x1xf32> to vector<2x32xf32>
    %251 = arith.mulf %246, %250 : vector<2x32xf32>
    %252 = vector.extract_strided_slice %233 {offsets = [0, 0], sizes = [1, 32], strides = [1, 1]} : vector<4x32xf32> to vector<1x32xf32>
    %253 = vector.broadcast %252 : vector<1x32xf32> to vector<2x32xf32>
    %254 = arith.mulf %251, %253 : vector<2x32xf32>
    %255 = vector.extract_strided_slice %233 {offsets = [1, 0], sizes = [1, 32], strides = [1, 1]} : vector<4x32xf32> to vector<1x32xf32>
    %256 = vector.broadcast %255 : vector<1x32xf32> to vector<2x32xf32>
    %257 = arith.addf %254, %256 : vector<2x32xf32>
    %258 = vector.extract_strided_slice %257 {offsets = [0, 0], sizes = [2, 31], strides = [1, 1]} : vector<2x32xf32> to vector<2x31xf32>
    %259 = tpu.concatenate %34, %258 in 1 : vector<2x1xf32>, vector<2x31xf32> -> vector<2x32xf32>
    %260 = vector.extract_strided_slice %257 {offsets = [0, 1], sizes = [2, 31], strides = [1, 1]} : vector<2x32xf32> to vector<2x31xf32>
    %261 = tpu.concatenate %260, %34 in 1 : vector<2x31xf32>, vector<2x1xf32> -> vector<2x32xf32>
    %262 = vector.extract_strided_slice %259 {offsets = [0, 0], sizes = [1, 32], strides = [1, 1]} : vector<2x32xf32> to vector<1x32xf32>
    %263 = vector.extract_strided_slice %257 {offsets = [0, 0], sizes = [1, 32], strides = [1, 1]} : vector<2x32xf32> to vector<1x32xf32>
    %264 = vector.extract_strided_slice %261 {offsets = [0, 0], sizes = [1, 32], strides = [1, 1]} : vector<2x32xf32> to vector<1x32xf32>
    %265 = tpu.concatenate %262, %263, %264, %36 in 0 : vector<1x32xf32>, vector<1x32xf32>, vector<1x32xf32>, vector<1x32xf32> -> vector<4x32xf32>
    %266 = vector.extract_strided_slice %259 {offsets = [1, 0], sizes = [1, 32], strides = [1, 1]} : vector<2x32xf32> to vector<1x32xf32>
    %267 = vector.extract_strided_slice %257 {offsets = [1, 0], sizes = [1, 32], strides = [1, 1]} : vector<2x32xf32> to vector<1x32xf32>
    %268 = vector.extract_strided_slice %261 {offsets = [1, 0], sizes = [1, 32], strides = [1, 1]} : vector<2x32xf32> to vector<1x32xf32>
    %269 = tpu.concatenate %266, %267, %268, %36 in 0 : vector<1x32xf32>, vector<1x32xf32>, vector<1x32xf32>, vector<1x32xf32> -> vector<4x32xf32>
    %270 = tpu.concatenate %265, %269 in 1 : vector<4x32xf32>, vector<4x32xf32> -> vector<4x64xf32>
    %c224 = arith.constant 224 : index
    %c0_55 = arith.constant 0 : index
    %271 = vector.load %arg1[%c224, %c0_55] : memref<320x128xf32, #tpu.memory_space<vmem>>, vector<64x4xf32>
    %cst_56 = arith.constant dense<0.000000e+00> : vector<64x64xf32>
    %272 = tpu.matmul %271, %270, %cst_56 {dimension_numbers = #tpu.dot_dimension_numbers<[1], [0], [0], [1], [0, 0, 1, 1], [], []>, precision = #tpu.contract_precision<fp32>} : vector<64x4xf32>, vector<4x64xf32>, vector<64x64xf32> -> vector<64x64xf32>
    %cst_57 = arith.constant 0.000000e+00 : f32
    %273 = vector.broadcast %cst_57 : f32 to vector<64x64xf32>
    %274 = arith.maximumf %272, %273 : vector<64x64xf32>
    %c296 = arith.constant 296 : index
    %c0_58 = arith.constant 0 : index
    %275 = vector.load %arg1[%c296, %c0_58] : memref<320x128xf32, #tpu.memory_space<vmem>>, vector<3x64xf32>
    %cst_59 = arith.constant dense<0.000000e+00> : vector<3x64xf32>
    %276 = tpu.matmul %275, %274, %cst_59 {dimension_numbers = #tpu.dot_dimension_numbers<[1], [0], [0], [1], [0, 0, 1, 1], [], []>, precision = #tpu.contract_precision<fp32>} : vector<3x64xf32>, vector<64x64xf32>, vector<3x64xf32> -> vector<3x64xf32>
    %277 = vector.extract_strided_slice %276 {offsets = [0, 0], sizes = [3, 32], strides = [1, 1]} : vector<3x64xf32> to vector<3x32xf32>
    %278 = vector.extract_strided_slice %277 {offsets = [0, 0], sizes = [1, 31], strides = [1, 1]} : vector<3x32xf32> to vector<1x31xf32>
    %279 = tpu.concatenate %35, %278 in 1 : vector<1x1xf32>, vector<1x31xf32> -> vector<1x32xf32>
    %280 = vector.extract_strided_slice %277 {offsets = [2, 1], sizes = [1, 31], strides = [1, 1]} : vector<3x32xf32> to vector<1x31xf32>
    %281 = tpu.concatenate %280, %35 in 1 : vector<1x31xf32>, vector<1x1xf32> -> vector<1x32xf32>
    %282 = vector.extract_strided_slice %277 {offsets = [1, 0], sizes = [1, 32], strides = [1, 1]} : vector<3x32xf32> to vector<1x32xf32>
    %283 = arith.addf %279, %282 : vector<1x32xf32>
    %284 = arith.addf %283, %281 : vector<1x32xf32>
    %285 = vector.extract_strided_slice %276 {offsets = [0, 32], sizes = [3, 32], strides = [1, 1]} : vector<3x64xf32> to vector<3x32xf32>
    %286 = vector.extract_strided_slice %285 {offsets = [0, 0], sizes = [1, 31], strides = [1, 1]} : vector<3x32xf32> to vector<1x31xf32>
    %287 = tpu.concatenate %35, %286 in 1 : vector<1x1xf32>, vector<1x31xf32> -> vector<1x32xf32>
    %288 = vector.extract_strided_slice %285 {offsets = [2, 1], sizes = [1, 31], strides = [1, 1]} : vector<3x32xf32> to vector<1x31xf32>
    %289 = tpu.concatenate %288, %35 in 1 : vector<1x31xf32>, vector<1x1xf32> -> vector<1x32xf32>
    %290 = vector.extract_strided_slice %285 {offsets = [1, 0], sizes = [1, 32], strides = [1, 1]} : vector<3x32xf32> to vector<1x32xf32>
    %291 = arith.addf %287, %290 : vector<1x32xf32>
    %292 = arith.addf %291, %289 : vector<1x32xf32>
    %293 = tpu.concatenate %284, %292 in 0 : vector<1x32xf32>, vector<1x32xf32> -> vector<2x32xf32>
    %294 = vector.broadcast %187 : f32 to vector<2x32xf32>
    %295 = arith.addf %293, %294 : vector<2x32xf32>
    %296 = arith.addf %257, %295 : vector<2x32xf32>
    %cst_60 = arith.constant dense<0.000000e+00> : vector<2xf32>
    %297 = vector.multi_reduction <add>, %296, %cst_60 [1] : vector<2x32xf32> to vector<2xf32>
    %298 = vector.shape_cast %297 : vector<2xf32> to vector<2x1xf32>
    %cst_61 = arith.constant 3.200000e+01 : f32
    %299 = vector.broadcast %cst_61 : f32 to vector<2x1xf32>
    %300 = arith.divf %298, %299 : vector<2x1xf32>
    %301 = vector.broadcast %300 : vector<2x1xf32> to vector<2x32xf32>
    %302 = arith.subf %296, %301 : vector<2x32xf32>
    %303 = arith.mulf %302, %302 : vector<2x32xf32>
    %cst_62 = arith.constant dense<0.000000e+00> : vector<2xf32>
    %304 = vector.multi_reduction <add>, %303, %cst_62 [1] : vector<2x32xf32> to vector<2xf32>
    %305 = vector.shape_cast %304 : vector<2xf32> to vector<2x1xf32>
    %cst_63 = arith.constant 3.200000e+01 : f32
    %306 = vector.broadcast %cst_63 : f32 to vector<2x1xf32>
    %307 = arith.divf %305, %306 : vector<2x1xf32>
    %308 = vector.broadcast %300 : vector<2x1xf32> to vector<2x32xf32>
    %309 = arith.subf %296, %308 : vector<2x32xf32>
    %cst_64 = arith.constant 9.99999974E-6 : f32
    %310 = vector.broadcast %cst_64 : f32 to vector<2x1xf32>
    %311 = arith.addf %307, %310 : vector<2x1xf32>
    %312 = math.rsqrt %311 : vector<2x1xf32>
    %313 = vector.broadcast %312 : vector<2x1xf32> to vector<2x32xf32>
    %314 = arith.mulf %309, %313 : vector<2x32xf32>
    %315 = vector.extract_strided_slice %233 {offsets = [2, 0], sizes = [1, 32], strides = [1, 1]} : vector<4x32xf32> to vector<1x32xf32>
    %316 = vector.broadcast %315 : vector<1x32xf32> to vector<2x32xf32>
    %317 = arith.mulf %314, %316 : vector<2x32xf32>
    %318 = vector.extract_strided_slice %233 {offsets = [3, 0], sizes = [1, 32], strides = [1, 1]} : vector<4x32xf32> to vector<1x32xf32>
    %319 = vector.broadcast %318 : vector<1x32xf32> to vector<2x32xf32>
    %320 = arith.addf %317, %319 : vector<2x32xf32>
    %c0_65 = arith.constant 0 : index
    %c0_66 = arith.constant 0 : index
    %321 = vector.load %arg4[%c0_65, %c0_66] : memref<2x32xf32, #tpu.memory_space<vmem>>, vector<2x32xf32>
    tpu.vector_store %arg4[%c0_65, %c0_66], %320 {strides = array<i32>} : memref<2x32xf32, #tpu.memory_space<vmem>>, vector<2x32xf32>,
    return
  }
}

</mosaic_0001>

<llo_original>
// kernel: diffnet_forward.1
$region0: #{diffnet_forward.1}
  #allocation0 [shape = 'u32[]', space=smem, size = 0x4, offset = 0x4, fixed_abs, tag = 'smem constant byte address 0x4 - core index']
  #allocation1 [shape = 'u32[144,128]{1,0:T(1,128)}', space=vmem, size = 0x12000, scoped, tag = 'internal scratch']
  %s0 = inlined_call_operand.vmem [shape: f32[32], index: 0, kind: input, shape index: {}]
  %s1 = inlined_call_operand.hbm [shape: f32[320,128], index: 1, kind: input, shape index: {}]
  %s2 = inlined_call_operand.vmem [shape: f32[2,1], index: 2, kind: input, shape index: {}]
  %s3 = inlined_call_operand.vmem [shape: f32[2,32], index: 3, kind: input, shape index: {}]
  %s4 = inlined_call_operand.hbm [shape: f32[2,32], index: 4, kind: output, shape index: {}]
  %s5 = sld [smem:[#allocation0]]
  $region34: #{diffnet_forward.1} parent=0
    _
  %s7 = ssub.s32 1, %s5
  %s8 = scalar_select 0, %s7, %s5
  $region1: #{diffnet_forward.1} parent=0
    #allocation2 [shape = 'u8[512]{0}', space=smem, size = 0x200, scoped, tag = 'input window, operand 0, single buffered']
    #allocation3 [shape = 's32[1]{0}', space=sflag, size = 0x4, scoped, tag = 'scoped memory for diffnet_forward.1']
    #allocation4 [shape = 's32[1]{0}', space=sflag, size = 0x4, scoped, tag = 'scoped memory for diffnet_forward.1']
    #allocation5 [shape = 's32[1]{0}', space=sflag, size = 0x4, scoped, tag = 'scoped memory for diffnet_forward.1']
    #allocation6 [shape = 'u8[163840]{0}', space=vmem, size = 0x28000, scoped, tag = 'input window, operand 1, single buffered']
    #allocation7 [shape = 'u8[1024]{0}', space=vmem, size = 0x400, scoped, tag = 'output window, operand 0, single buffered']
    %9 = vsyncpa [#allocation5], 0
    %10 = vsyncpa [#allocation3], 0
    %11 = vsyncpa [#allocation4], 0
    // Predicated region
    $region2: #{diffnet_forward.1} parent=1 // pred_check
      _
    $region3: #{diffnet_forward.1} parent=1 // pred_check_branch
      %13 = sbr.rel (0) target = $region5
    $region4: #{diffnet_forward.1} parent=1 // pred_region
      %s15 = ssub.s32 16, 16
      %16 = vsyncadd [#allocation5], %s15
      %s18 = sshll.u32 %s0, 4
      %s19 = int_to_ptr.vmem [resolvable:$true] %s18
      %21 = dma.vmem_to_smem %s19, 16, [#allocation2], [#allocation5]
    $region5: #{diffnet_forward.1} parent=1 // pred_fallthru
      _
    // Predicated region
    $region6: #{diffnet_forward.1} parent=1 // pred_check
      _
    $region7: #{diffnet_forward.1} parent=1 // pred_check_branch
      %23 = sbr.rel (0) target = $region9
    $region8: #{diffnet_forward.1} parent=1 // pred_region
      %s25 = ssub.s32 5120, 5120
      %26 = vsyncadd [#allocation3], %s25
      %s27 = sshll.u32 [#allocation6], 4
      %s28 = int_to_ptr.vmem [resolvable:$true] %s27
      %33 = dma.hbm_to_vmem [thread:$0]  %s1, 5120, %s28, [#allocation3], 128, 128, 8
    $region9: #{diffnet_forward.1} parent=1 // pred_fallthru
      _
    // Predicated region
    $region10: #{diffnet_forward.1} parent=1 // pred_check
      _
    $region11: #{diffnet_forward.1} parent=1 // pred_check_branch
      %35 = sbr.rel (0) target = $region13
    $region12: #{diffnet_forward.1} parent=1 // pred_region
      _
    $region13: #{diffnet_forward.1} parent=1 // pred_fallthru
      _
    // Predicated region
    $region14: #{diffnet_forward.1} parent=1 // pred_check
      _
    $region15: #{diffnet_forward.1} parent=1 // pred_check_branch
      %37 = sbr.rel (0) target = $region17
    $region16: #{diffnet_forward.1} parent=1 // pred_region
      _
    $region17: #{diffnet_forward.1} parent=1 // pred_fallthru
      _
    // Predicated region
    $region18: #{diffnet_forward.1} parent=1 // pred_check
      _
    $region19: #{diffnet_forward.1} parent=1 // pred_check_branch
      %39 = sbr.rel (0) target = $region21
    $region20: #{diffnet_forward.1} parent=1 // pred_region
      %40 = dma.done [#allocation5], 16
    $region21: #{diffnet_forward.1} parent=1 // pred_fallthru
      _
    // Predicated region
    $region22: #{diffnet_forward.1} parent=1 // pred_check
      _
    $region23: #{diffnet_forward.1} parent=1 // pred_check_branch
      %42 = sbr.rel (0) target = $region25
    $region24: #{diffnet_forward.1} parent=1 // pred_region
      %43 = dma.done [#allocation3], 5120
    $region25: #{diffnet_forward.1} parent=1 // pred_fallthru
      _
    %44 = sfence
    %v45 = vld [vmem:[#allocation6] sm:$0x1]
    %v46 = vld [vmem:[%s2] sm:$0x3]
    %48 = vset.pattern.permute.xlu0 0
    %49 = vperm.xlu0 %48, %v46
    %v50 = vpop.permute.xlu0 %49
    %v52 = vlaneseq
    %v53 = vshrl.u32 %v52, 7
    %v54 = vsub.s32 0, %v53
    %v55 = vrot.slane %v45, %v54
    %v56 = vmul.f32 %v50, %v55
    %v57 = vand.u32 2147483647, %v56
    %vm58 = vcmp.le.f32.partialorder %v57, 0.7853982
    %vm59 = vcmp.lt.s32.totalorder %v56, 0
    %v60 = vand.u32 %v56, 2139095040
    %v61 = vshrl.u32 %v60, 23
    %v62 = vsub.s32 %v61, 127
    %v63 = vand.u32 2147483647, %v56
    %v64 = vand.u32 %v63, 8388607
    %v65 = vor.u32 %v64, 8388608
    %v66 = vsub.s32 0, %v65
    %v67 = vadd.s32 %v62, 1
    %vm68 = vcmp.gt.s32.totalorder %v67, 0
    %v69 = vsel %vm68, %v67, 0
    %v70 = vshrl.u32 %v69, 5
    %v71 = vand.u32 %v69, 31
    %v72 = vsub.s32 32, %v71
    %v73 = vshrl.u32 683565275, %v72
    %v74 = vshll.u32 683565275, %v71
    %v75 = vshrl.u32 2475754826, %v72
    %v76 = vor.u32 %v74, %v75
    %v77 = vshll.u32 2475754826, %v71
    %v78 = vshrl.u32 2131351028, %v72
    %v79 = vor.u32 %v77, %v78
    %v80 = vshll.u32 2131351028, %v71
    %v81 = vshrl.u32 2102212464, %v72
    %v82 = vor.u32 %v80, %v81
    %v83 = vshll.u32 2102212464, %v71
    %v84 = vshrl.u32 920167782, %v72
    %v85 = vor.u32 %v83, %v84
    %v86 = vshll.u32 920167782, %v71
    %v87 = vshrl.u32 1326507024, %v72
    %v88 = vor.u32 %v86, %v87
    %vm89 = vcmp.lt.s32.totalorder %v70, 1
    %vm90 = vcmp.lt.s32.totalorder %v70, 2
    %vm91 = vcmp.lt.s32.totalorder %v70, 3
    %vm92 = vcmp.lt.s32.totalorder %v70, 4
    %v93 = vsel %vm89, %v73, %v76
    %v94 = vsel %vm92, %v82, 2102212464
    %v95 = vsel %vm91, %v79, %v94
    %v96 = vsel %vm90, %v93, %v95
    %v97 = vsel %vm89, %v76, %v79
    %v98 = vsel %vm92, %v85, 920167782
    %v99 = vsel %vm91, %v82, %v98
    %v100 = vsel %vm90, %v97, %v99
    %v101 = vsel %vm89, %v79, %v82
    %v102 = vsel %vm92, %v88, 1326507024
    %v103 = vsel %vm91, %v85, %v102
    %v104 = vsel %vm90, %v101, %v103
    %v105 = vshll.u32 %v65, 8
    %v106 = vmul.u32.u64.compose %v105, %v104
    %v107 = vextract.low.u32 %v106
    %v108 = vextract.high.u32 %v106
    %v109 = vmul.u32.u64.compose %v105, %v100
    %v110 = vextract.low.u32 %v109
    %v111 = vextract.high.u32 %v109
    %v112 = vmul.u32 %v105, %v96
    %v113 = vadd.s32 %v108, %v110
    %vm114 = vc.u32 %v108, %v110
    %v115 = vadd.s32 %v111, 1
    %v116 = vsel %vm114, %v115, %v111
    %v117 = vadd.s32 %v112, %v116
    %v118 = vadd.s32 %v117, 536870912
    %v119 = vshrl.u32 %v118, 30
    %v120 = vshll.u32 %v119, 30
    %v121 = vsub.s32 %v117, %v120
    %vm122 = vcmp.lt.s32.totalorder %v121, 0
    %v123 = vsub.s32 0, %v121
    %v124 = vsel %vm122, %v123, %v121
    %v125 = vclz %v124
    %v126 = vsub.s32 %v125, 2
    %vm127 = vcmp.gt.s32.totalorder 0, %v126
    %v128 = vsel %vm127, 0, %v126
    %v129 = vsub.s32 32, %v128
    %v130 = vshll.u32 %v121, %v128
    %v131 = vshrl.u32 %v113, %v129
    %v132 = vor.u32 %v130, %v131
    %v133 = vsub.s32 4294967266, %v128
    %v134 = vadd.s32 %v133, 127
    %v135 = vshll.u32 %v134, 23
    %v136 = vor.u32 4788187, %v135
    %v137 = vand.u32 2147483647, %v136
    %v139 = vcvt.s32.f32 %v132
    %v140 = vmul.f32 %v139, %v137
    %v141 = vxor.u32 %v140, 2147483648
    %v142 = vsel %vm59, %v141, %v140
    %v143 = vsub.s32 4, %v119
    %v144 = vsel %vm59, %v143, %v119
    %v145 = vsel %vm58, %v56, %v142
    %v146 = vsel %vm58, 0, %v144
    %v147 = vcosq.f32.pop %v145
    %v148 = vsinq.f32.pop %v145
    %vm149 = vweird.f32 %v56
    %v150 = vadd.s32 %v146, 3
    %v151 = vand.u32 %v150, 3
    %vm152 = vcmp.lt.s32.totalorder %v151, 2
    %vm153 = vcmp.eq.s32.totalorder %v151, 0
    %v154 = vxor.u32 %v148, 2147483648
    %v155 = vsel %vm153, %v147, %v154
    %vm156 = vcmp.eq.s32.totalorder %v151, 2
    %v157 = vxor.u32 %v147, 2147483648
    %v158 = vsel %vm156, %v157, %v148
    %v159 = vsel %vm152, %v155, %v158
    %v160 = vsel %vm149, nan, %v159
    %v161 = vand.u32 2147483647, %v56
    %vm162 = vcmp.le.f32.partialorder %v161, 0.7853982
    %vm163 = vcmp.lt.s32.totalorder %v56, 0
    %v164 = vand.u32 %v56, 2139095040
    %v165 = vshrl.u32 %v164, 23
    %v166 = vsub.s32 %v165, 127
    %v167 = vand.u32 2147483647, %v56
    %v168 = vand.u32 %v167, 8388607
    %v169 = vor.u32 %v168, 8388608
    %v170 = vsub.s32 0, %v169
    %v171 = vadd.s32 %v166, 1
    %vm172 = vcmp.gt.s32.totalorder %v171, 0
    %v173 = vsel %vm172, %v171, 0
    %v174 = vshrl.u32 %v173, 5
    %v175 = vand.u32 %v173, 31
    %v176 = vsub.s32 32, %v175
    %v177 = vshrl.u32 683565275, %v176
    %v178 = vshll.u32 683565275, %v175
    %v179 = vshrl.u32 2475754826, %v176
    %v180 = vor.u32 %v178, %v179
    %v181 = vshll.u32 2475754826, %v175
    %v182 = vshrl.u32 2131351028, %v176
    %v183 = vor.u32 %v181, %v182
    %v184 = vshll.u32 2131351028, %v175
    %v185 = vshrl.u32 2102212464, %v176
    %v186 = vor.u32 %v184, %v185
    %v187 = vshll.u32 2102212464, %v175
    %v188 = vshrl.u32 920167782, %v176
    %v189 = vor.u32 %v187, %v188
    %v190 = vshll.u32 920167782, %v175
    %v191 = vshrl.u32 1326507024, %v176
    %v192 = vor.u32 %v190, %v191
    %vm193 = vcmp.lt.s32.totalorder %v174, 1
    %vm194 = vcmp.lt.s32.totalorder %v174, 2
    %vm195 = vcmp.lt.s32.totalorder %v174, 3
    %vm196 = vcmp.lt.s32.totalorder %v174, 4
    %v197 = vsel %vm193, %v177, %v180
    %v198 = vsel %vm196, %v186, 2102212464
    %v199 = vsel %vm195, %v183, %v198
    %v200 = vsel %vm194, %v197, %v199
    %v201 = vsel %vm193, %v180, %v183
    %v202 = vsel %vm196, %v189, 920167782
    %v203 = vsel %vm195, %v186, %v202
    %v204 = vsel %vm194, %v201, %v203
    %v205 = vsel %vm193, %v183, %v186
    %v206 = vsel %vm196, %v192, 1326507024
    %v207 = vsel %vm195, %v189, %v206
    %v208 = vsel %vm194, %v205, %v207
    %v209 = vshll.u32 %v169, 8
    %v210 = vmul.u32.u64.compose %v209, %v208
    %v211 = vextract.low.u32 %v210
    %v212 = vextract.high.u32 %v210
    %v213 = vmul.u32.u64.compose %v209, %v204
    %v214 = vextract.low.u32 %v213
    %v215 = vextract.high.u32 %v213
    %v216 = vmul.u32 %v209, %v200
    %v217 = vadd.s32 %v212, %v214
    %vm218 = vc.u32 %v212, %v214
    %v219 = vadd.s32 %v215, 1
    %v220 = vsel %vm218, %v219, %v215
    %v221 = vadd.s32 %v216, %v220
    %v222 = vadd.s32 %v221, 536870912
    %v223 = vshrl.u32 %v222, 30
    %v224 = vshll.u32 %v223, 30
    %v225 = vsub.s32 %v221, %v224
    %vm226 = vcmp.lt.s32.totalorder %v225, 0
    %v227 = vsub.s32 0, %v225
    %v228 = vsel %vm226, %v227, %v225
    %v229 = vclz %v228
    %v230 = vsub.s32 %v229, 2
    %vm231 = vcmp.gt.s32.totalorder 0, %v230
    %v232 = vsel %vm231, 0, %v230
    %v233 = vsub.s32 32, %v232
    %v234 = vshll.u32 %v225, %v232
    %v235 = vshrl.u32 %v217, %v233
    %v236 = vor.u32 %v234, %v235
    %v237 = vsub.s32 4294967266, %v232
    %v238 = vadd.s32 %v237, 127
    %v239 = vshll.u32 %v238, 23
    %v240 = vor.u32 4788187, %v239
    %v241 = vand.u32 2147483647, %v240
    %v243 = vcvt.s32.f32 %v236
    %v244 = vmul.f32 %v243, %v241
    %v245 = vxor.u32 %v244, 2147483648
    %v246 = vsel %vm163, %v245, %v244
    %v247 = vsub.s32 4, %v223
    %v248 = vsel %vm163, %v247, %v223
    %v249 = vsel %vm162, %v56, %v246
    %v250 = vsel %vm162, 0, %v248
    %v251 = vcosq.f32.pop %v249
    %v252 = vsinq.f32.pop %v249
    %vm253 = vweird.f32 %v56
    %v254 = vand.u32 %v250, 3
    %vm255 = vcmp.lt.s32.totalorder %v254, 2
    %vm256 = vcmp.eq.s32.totalorder %v254, 0
    %v257 = vxor.u32 %v252, 2147483648
    %v258 = vsel %vm256, %v251, %v257
    %vm259 = vcmp.eq.s32.totalorder %v254, 2
    %v260 = vxor.u32 %v251, 2147483648
    %v261 = vsel %vm259, %v260, %v252
    %v262 = vsel %vm255, %v258, %v261
    %v263 = vsel %vm253, nan, %v262
    %265 = vrot.lane.b32.xlu0 %v263, 8
    %v266 = vpop.permute.xlu0 %265
    %vm268 = vcmask 64512
    %v269 = vsel %vm268, %v160, %v266
    %v270 = vld [vmem:[#allocation6 + $0x8] sm:$0xff]
    %v271 = vld [vmem:[#allocation6 + $0x10] sm:$0xff]
    %v272 = vld [vmem:[#allocation6 + $0x18] sm:$0x1]
    %v273 = vlaneseq
    %v274 = vshrl.u32 %v273, 7
    %v275 = vsub.s32 0, %v274
    %v276 = vrot.slane %v272, %v275
    %vm277 = vcmask 130048
    %v279 = vsel %vm277, %v269, 0
    %281 = vmatprep.subr.mxu0 0.0
    %282 = vmatpush1.msra.mxu0 0.0
    %283 = vmatprep.subr.mxu0 0.0
    %284 = vmatpush1.msra.mxu0 0.0
    %285 = vmatprep.subr.mxu0 0.0
    %286 = vmatpush1.msra.mxu0 0.0
    %287 = vmatprep.subr.mxu0 0.0
    %288 = vmatpush1.msra.mxu0 0.0
    %289 = vmatprep.subr.mxu0 0.0
    %290 = vmatpush1.msra.mxu0 0.0
    %291 = vmatprep.subr.mxu0 0.0
    %292 = vmatpush1.msra.mxu0 0.0
    %293 = vmatprep.subr.mxu0 0.0
    %294 = vmatpush1.msra.mxu0 0.0
    %295 = vmatprep.subr.mxu0 0.0
    %296 = vmatpush1.msra.mxu0 0.0
    %297 = vmatprep.subr.mxu0 0.0
    %298 = vmatpush1.msra.mxu0 0.0
    %299 = vmatprep.subr.mxu0 0.0
    %300 = vmatpush1.msra.mxu0 0.0
    %301 = vmatprep.subr.mxu0 0.0
    %302 = vmatpush1.msra.mxu0 0.0
    %303 = vmatprep.subr.mxu0 0.0
    %304 = vmatpush1.msra.mxu0 0.0
    %305 = vmatprep.subr.mxu0 0.0
    %306 = vmatpush1.msra.mxu0 0.0
    %307 = vmatprep.subr.mxu0 0.0
    %308 = vmatpush1.msra.mxu0 0.0
    %309 = vmatprep.subr.mxu0 0.0
    %v310 = vand.u32 %v271, 4294901760
    %311 = vmatpush1.msra.mxu0 %v310
    %312 = vmatprep.subr.mxu0 0.0
    %v313 = vand.u32 %v270, 4294901760
    %314 = vmatpush1.msra.mxu0 %v313
    %315 = vmatprep.subr.mxu0 0.0
    %316 = vmatpush2.msra.mxu0 0.0
    %317 = vmatprep.subr.mxu0 0.0
    %318 = vmatpush2.msra.mxu0 0.0
    %319 = vmatprep.subr.mxu0 0.0
    %320 = vmatpush2.msra.mxu0 0.0
    %321 = vmatprep.subr.mxu0 0.0
    %322 = vmatpush2.msra.mxu0 0.0
    %323 = vmatprep.subr.mxu0 0.0
    %324 = vmatpush2.msra.mxu0 0.0
    %325 = vmatprep.subr.mxu0 0.0
    %326 = vmatpush2.msra.mxu0 0.0
    %327 = vmatprep.subr.mxu0 0.0
    %328 = vmatpush2.msra.mxu0 0.0
    %329 = vmatprep.subr.mxu0 0.0
    %330 = vmatpush2.msra.mxu0 0.0
    %331 = vmatprep.subr.mxu0 0.0
    %332 = vmatpush2.msra.mxu0 0.0
    %333 = vmatprep.subr.mxu0 0.0
    %334 = vmatpush2.msra.mxu0 0.0
    %335 = vmatprep.subr.mxu0 0.0
    %336 = vmatpush2.msra.mxu0 0.0
    %337 = vmatprep.subr.mxu0 0.0
    %338 = vmatpush2.msra.mxu0 0.0
    %339 = vmatprep.subr.mxu0 0.0
    %340 = vmatpush2.msra.mxu0 0.0
    %341 = vmatprep.subr.mxu0 0.0
    %342 = vmatpush2.msra.mxu0 0.0
    %343 = vmatprep.subr.mxu0 0.0
    %344 = vmatpush2.msra.mxu0 0.0
    %345 = vmatprep.subr.mxu0 0.0
    %346 = vmatpush2.msra.mxu0 0.0
    %347 = vmatprep.mubr.f32.mxu0 0.0
    %v348 = vand.u32 %v279, 4294901760
    %v349 = vsub.f32 %v279, %v348
    %v350 = vand.u32 %v349, 4294901760
    %v351 = vsub.f32 %v349, %v350
    %v352 = vand.u32 %v351, 4294901760
    %353 = vmatmul.mubr.f32.gmra.mxu0 %v352
    %v354 = vpop.f32.mrf.mxu0
    %v355 = vadd.f32 %v276, %v354
    %v356 = vpop.f32.mrf.mxu0
    %357 = vdwg.mxu0
    %358 = vmatprep.subr.mxu0 0.0
    %359 = vmatpush1.msra.mxu0 0.0
    %360 = vmatprep.subr.mxu0 0.0
    %361 = vmatpush1.msra.mxu0 0.0
    %362 = vmatprep.subr.mxu0 0.0
    %363 = vmatpush1.msra.mxu0 0.0
    %364 = vmatprep.subr.mxu0 0.0
    %365 = vmatpush1.msra.mxu0 0.0
    %366 = vmatprep.subr.mxu0 0.0
    %367 = vmatpush1.msra.mxu0 0.0
    %368 = vmatprep.subr.mxu0 0.0
    %369 = vmatpush1.msra.mxu0 0.0
    %370 = vmatprep.subr.mxu0 0.0
    %371 = vmatpush1.msra.mxu0 0.0
    %372 = vmatprep.subr.mxu0 0.0
    %373 = vmatpush1.msra.mxu0 0.0
    %374 = vmatprep.subr.mxu0 0.0
    %375 = vmatpush1.msra.mxu0 0.0
    %376 = vmatprep.subr.mxu0 0.0
    %377 = vmatpush1.msra.mxu0 0.0
    %378 = vmatprep.subr.mxu0 0.0
    %379 = vmatpush1.msra.mxu0 0.0
    %380 = vmatprep.subr.mxu0 0.0
    %381 = vmatpush1.msra.mxu0 0.0
    %382 = vmatprep.subr.mxu0 0.0
    %383 = vmatpush1.msra.mxu0 0.0
    %384 = vmatprep.subr.mxu0 0.0
    %385 = vmatpush1.msra.mxu0 0.0
    %386 = vmatprep.subr.mxu0 0.0
    %v387 = vand.u32 %v271, 4294901760
    %v388 = vsub.f32 %v271, %v387
    %v389 = vand.u32 %v388, 4294901760
    %v390 = vsub.f32 %v388, %v389
    %v391 = vand.u32 %v390, 4294901760
    %392 = vmatpush1.msra.mxu0 %v391
    %393 = vmatprep.subr.mxu0 0.0
    %v394 = vand.u32 %v270, 4294901760
    %v395 = vsub.f32 %v270, %v394
    %v396 = vand.u32 %v395, 4294901760
    %v397 = vsub.f32 %v395, %v396
    %v398 = vand.u32 %v397, 4294901760
    %399 = vmatpush1.msra.mxu0 %v398
    %400 = vmatprep.subr.mxu0 0.0
    %401 = vmatpush2.msra.mxu0 0.0
    %402 = vmatprep.subr.mxu0 0.0
    %403 = vmatpush2.msra.mxu0 0.0
    %404 = vmatprep.subr.mxu0 0.0
    %405 = vmatpush2.msra.mxu0 0.0
    %406 = vmatprep.subr.mxu0 0.0
    %407 = vmatpush2.msra.mxu0 0.0
    %408 = vmatprep.subr.mxu0 0.0
    %409 = vmatpush2.msra.mxu0 0.0
    %410 = vmatprep.subr.mxu0 0.0
    %411 = vmatpush2.msra.mxu0 0.0
    %412 = vmatprep.subr.mxu0 0.0
    %413 = vmatpush2.msra.mxu0 0.0
    %414 = vmatprep.subr.mxu0 0.0
    %415 = vmatpush2.msra.mxu0 0.0
    %416 = vmatprep.subr.mxu0 0.0
    %417 = vmatpush2.msra.mxu0 0.0
    %418 = vmatprep.subr.mxu0 0.0
    %419 = vmatpush2.msra.mxu0 0.0
    %420 = vmatprep.subr.mxu0 0.0
    %421 = vmatpush2.msra.mxu0 0.0
    %422 = vmatprep.subr.mxu0 0.0
    %423 = vmatpush2.msra.mxu0 0.0
    %424 = vmatprep.subr.mxu0 0.0
    %425 = vmatpush2.msra.mxu0 0.0
    %426 = vmatprep.subr.mxu0 0.0
    %427 = vmatpush2.msra.mxu0 0.0
    %428 = vmatprep.subr.mxu0 0.0
    %429 = vmatpush2.msra.mxu0 0.0
    %430 = vmatprep.subr.mxu0 0.0
    %431 = vmatpush2.msra.mxu0 0.0
    %432 = vmatprep.mubr.f32.mxu0 0.0
    %v433 = vand.u32 %v279, 4294901760
    %434 = vmatmul.mubr.f32.gmra.mxu0 %v433
    %v435 = vpop.f32.mrf.mxu0
    %v436 = vadd.f32 %v355, %v435
    %v437 = vpop.f32.mrf.mxu0
    %438 = vdwg.mxu0
    %439 = vmatprep.subr.mxu0 0.0
    %440 = vmatpush1.msra.mxu0 0.0
    %441 = vmatprep.subr.mxu0 0.0
    %442 = vmatpush1.msra.mxu0 0.0
    %443 = vmatprep.subr.mxu0 0.0
    %444 = vmatpush1.msra.mxu0 0.0
    %445 = vmatprep.subr.mxu0 0.0
    %446 = vmatpush1.msra.mxu0 0.0
    %447 = vmatprep.subr.mxu0 0.0
    %448 = vmatpush1.msra.mxu0 0.0
    %449 = vmatprep.subr.mxu0 0.0
    %450 = vmatpush1.msra.mxu0 0.0
    %451 = vmatprep.subr.mxu0 0.0
    %452 = vmatpush1.msra.mxu0 0.0
    %453 = vmatprep.subr.mxu0 0.0
    %454 = vmatpush1.msra.mxu0 0.0
    %455 = vmatprep.subr.mxu0 0.0
    %456 = vmatpush1.msra.mxu0 0.0
    %457 = vmatprep.subr.mxu0 0.0
    %458 = vmatpush1.msra.mxu0 0.0
    %459 = vmatprep.subr.mxu0 0.0
    %460 = vmatpush1.msra.mxu0 0.0
    %461 = vmatprep.subr.mxu0 0.0
    %462 = vmatpush1.msra.mxu0 0.0
    %463 = vmatprep.subr.mxu0 0.0
    %464 = vmatpush1.msra.mxu0 0.0
    %465 = vmatprep.subr.mxu0 0.0
    %466 = vmatpush1.msra.mxu0 0.0
    %467 = vmatprep.subr.mxu0 0.0
    %v468 = vand.u32 %v271, 4294901760
    %v469 = vsub.f32 %v271, %v468
    %470 = vmatpush1.msra.mxu0 %v469
    %471 = vmatprep.subr.mxu0 0.0
    %v472 = vand.u32 %v270, 4294901760
    %v473 = vsub.f32 %v270, %v472
    %474 = vmatpush1.msra.mxu0 %v473
    %475 = vmatprep.subr.mxu0 0.0
    %476 = vmatpush2.msra.mxu0 0.0
    %477 = vmatprep.subr.mxu0 0.0
    %478 = vmatpush2.msra.mxu0 0.0
    %479 = vmatprep.subr.mxu0 0.0
    %480 = vmatpush2.msra.mxu0 0.0
    %481 = vmatprep.subr.mxu0 0.0
    %482 = vmatpush2.msra.mxu0 0.0
    %483 = vmatprep.subr.mxu0 0.0
    %484 = vmatpush2.msra.mxu0 0.0
    %485 = vmatprep.subr.mxu0 0.0
    %486 = vmatpush2.msra.mxu0 0.0
    %487 = vmatprep.subr.mxu0 0.0
    %488 = vmatpush2.msra.mxu0 0.0
    %489 = vmatprep.subr.mxu0 0.0
    %490 = vmatpush2.msra.mxu0 0.0
    %491 = vmatprep.subr.mxu0 0.0
    %492 = vmatpush2.msra.mxu0 0.0
    %493 = vmatprep.subr.mxu0 0.0
    %494 = vmatpush2.msra.mxu0 0.0
    %495 = vmatprep.subr.mxu0 0.0
    %496 = vmatpush2.msra.mxu0 0.0
    %497 = vmatprep.subr.mxu0 0.0
    %498 = vmatpush2.msra.mxu0 0.0
    %499 = vmatprep.subr.mxu0 0.0
    %500 = vmatpush2.msra.mxu0 0.0
    %501 = vmatprep.subr.mxu0 0.0
    %502 = vmatpush2.msra.mxu0 0.0
    %503 = vmatprep.subr.mxu0 0.0
    %504 = vmatpush2.msra.mxu0 0.0
    %505 = vmatprep.subr.mxu0 0.0
    %506 = vmatpush2.msra.mxu0 0.0
    %507 = vmatprep.mubr.f32.mxu0 0.0
    %v508 = vand.u32 %v279, 4294901760
    %v509 = vsub.f32 %v279, %v508
    %510 = vmatmul.mubr.f32.gmra.mxu0 %v509
    %v511 = vpop.f32.mrf.mxu0
    %v512 = vadd.f32 %v436, %v511
    %v513 = vpop.f32.mrf.mxu0
    %514 = vdwg.mxu0
    %515 = vmatprep.subr.mxu0 0.0
    %516 = vmatpush1.msra.mxu0 0.0
    %517 = vmatprep.subr.mxu0 0.0
    %518 = vmatpush1.msra.mxu0 0.0
    %519 = vmatprep.subr.mxu0 0.0
    %520 = vmatpush1.msra.mxu0 0.0
    %521 = vmatprep.subr.mxu0 0.0
    %522 = vmatpush1.msra.mxu0 0.0
    %523 = vmatprep.subr.mxu0 0.0
    %524 = vmatpush1.msra.mxu0 0.0
    %525 = vmatprep.subr.mxu0 0.0
    %526 = vmatpush1.msra.mxu0 0.0
    %527 = vmatprep.subr.mxu0 0.0
    %528 = vmatpush1.msra.mxu0 0.0
    %529 = vmatprep.subr.mxu0 0.0
    %530 = vmatpush1.msra.mxu0 0.0
    %531 = vmatprep.subr.mxu0 0.0
    %532 = vmatpush1.msra.mxu0 0.0
    %533 = vmatprep.subr.mxu0 0.0
    %534 = vmatpush1.msra.mxu0 0.0
    %535 = vmatprep.subr.mxu0 0.0
    %536 = vmatpush1.msra.mxu0 0.0
    %537 = vmatprep.subr.mxu0 0.0
    %538 = vmatpush1.msra.mxu0 0.0
    %539 = vmatprep.subr.mxu0 0.0
    %540 = vmatpush1.msra.mxu0 0.0
    %541 = vmatprep.subr.mxu0 0.0
    %542 = vmatpush1.msra.mxu0 0.0
    %543 = vmatprep.subr.mxu0 0.0
    %v544 = vand.u32 %v271, 4294901760
    %545 = vmatpush1.msra.mxu0 %v544
    %546 = vmatprep.subr.mxu0 0.0
    %v547 = vand.u32 %v270, 4294901760
    %548 = vmatpush1.msra.mxu0 %v547
    %549 = vmatprep.subr.mxu0 0.0
    %550 = vmatpush2.msra.mxu0 0.0
    %551 = vmatprep.subr.mxu0 0.0
    %552 = vmatpush2.msra.mxu0 0.0
    %553 = vmatprep.subr.mxu0 0.0
    %554 = vmatpush2.msra.mxu0 0.0
    %555 = vmatprep.subr.mxu0 0.0
    %556 = vmatpush2.msra.mxu0 0.0
    %557 = vmatprep.subr.mxu0 0.0
    %558 = vmatpush2.msra.mxu0 0.0
    %559 = vmatprep.subr.mxu0 0.0
    %560 = vmatpush2.msra.mxu0 0.0
    %561 = vmatprep.subr.mxu0 0.0
    %562 = vmatpush2.msra.mxu0 0.0
    %563 = vmatprep.subr.mxu0 0.0
    %564 = vmatpush2.msra.mxu0 0.0
    %565 = vmatprep.subr.mxu0 0.0
    %566 = vmatpush2.msra.mxu0 0.0
    %567 = vmatprep.subr.mxu0 0.0
    %568 = vmatpush2.msra.mxu0 0.0
    %569 = vmatprep.subr.mxu0 0.0
    %570 = vmatpush2.msra.mxu0 0.0
    %571 = vmatprep.subr.mxu0 0.0
    %572 = vmatpush2.msra.mxu0 0.0
    %573 = vmatprep.subr.mxu0 0.0
    %574 = vmatpush2.msra.mxu0 0.0
    %575 = vmatprep.subr.mxu0 0.0
    %576 = vmatpush2.msra.mxu0 0.0
    %577 = vmatprep.subr.mxu0 0.0
    %578 = vmatpush2.msra.mxu0 0.0
    %579 = vmatprep.subr.mxu0 0.0
    %580 = vmatpush2.msra.mxu0 0.0
    %581 = vmatprep.mubr.f32.mxu0 0.0
    %v582 = vand.u32 %v279, 4294901760
    %v583 = vsub.f32 %v279, %v582
    %v584 = vand.u32 %v583, 4294901760
    %585 = vmatmul.mubr.f32.gmra.mxu0 %v584
    %v586 = vpop.f32.mrf.mxu0
    %v587 = vadd.f32 %v512, %v586
    %v588 = vpop.f32.mrf.mxu0
    %589 = vdwg.mxu0
    %590 = vmatprep.subr.mxu0 0.0
    %591 = vmatpush1.msra.mxu0 0.0
    %592 = vmatprep.subr.mxu0 0.0
    %593 = vmatpush1.msra.mxu0 0.0
    %594 = vmatprep.subr.mxu0 0.0
    %595 = vmatpush1.msra.mxu0 0.0
    %596 = vmatprep.subr.mxu0 0.0
    %597 = vmatpush1.msra.mxu0 0.0
    %598 = vmatprep.subr.mxu0 0.0
    %599 = vmatpush1.msra.mxu0 0.0
    %600 = vmatprep.subr.mxu0 0.0
    %601 = vmatpush1.msra.mxu0 0.0
    %602 = vmatprep.subr.mxu0 0.0
    %603 = vmatpush1.msra.mxu0 0.0
    %604 = vmatprep.subr.mxu0 0.0
    %605 = vmatpush1.msra.mxu0 0.0
    %606 = vmatprep.subr.mxu0 0.0
    %607 = vmatpush1.msra.mxu0 0.0
    %608 = vmatprep.subr.mxu0 0.0
    %609 = vmatpush1.msra.mxu0 0.0
    %610 = vmatprep.subr.mxu0 0.0
    %611 = vmatpush1.msra.mxu0 0.0
    %612 = vmatprep.subr.mxu0 0.0
    %613 = vmatpush1.msra.mxu0 0.0
    %614 = vmatprep.subr.mxu0 0.0
    %615 = vmatpush1.msra.mxu0 0.0
    %616 = vmatprep.subr.mxu0 0.0
    %617 = vmatpush1.msra.mxu0 0.0
    %618 = vmatprep.subr.mxu0 0.0
    %v619 = vand.u32 %v271, 4294901760
    %v620 = vsub.f32 %v271, %v619
    %v621 = vand.u32 %v620, 4294901760
    %622 = vmatpush1.msra.mxu0 %v621
    %623 = vmatprep.subr.mxu0 0.0
    %v624 = vand.u32 %v270, 4294901760
    %v625 = vsub.f32 %v270, %v624
    %v626 = vand.u32 %v625, 4294901760
    %627 = vmatpush1.msra.mxu0 %v626
    %628 = vmatprep.subr.mxu0 0.0
    %629 = vmatpush2.msra.mxu0 0.0
    %630 = vmatprep.subr.mxu0 0.0
    %631 = vmatpush2.msra.mxu0 0.0
    %632 = vmatprep.subr.mxu0 0.0
    %633 = vmatpush2.msra.mxu0 0.0
    %634 = vmatprep.subr.mxu0 0.0
    %635 = vmatpush2.msra.mxu0 0.0
    %636 = vmatprep.subr.mxu0 0.0
    %637 = vmatpush2.msra.mxu0 0.0
    %638 = vmatprep.subr.mxu0 0.0
    %639 = vmatpush2.msra.mxu0 0.0
    %640 = vmatprep.subr.mxu0 0.0
    %641 = vmatpush2.msra.mxu0 0.0
    %642 = vmatprep.subr.mxu0 0.0
    %643 = vmatpush2.msra.mxu0 0.0
    %644 = vmatprep.subr.mxu0 0.0
    %645 = vmatpush2.msra.mxu0 0.0
    %646 = vmatprep.subr.mxu0 0.0
    %647 = vmatpush2.msra.mxu0 0.0
    %648 = vmatprep.subr.mxu0 0.0
    %649 = vmatpush2.msra.mxu0 0.0
    %650 = vmatprep.subr.mxu0 0.0
    %651 = vmatpush2.msra.mxu0 0.0
    %652 = vmatprep.subr.mxu0 0.0
    %653 = vmatpush2.msra.mxu0 0.0
    %654 = vmatprep.subr.mxu0 0.0
    %655 = vmatpush2.msra.mxu0 0.0
    %656 = vmatprep.subr.mxu0 0.0
    %657 = vmatpush2.msra.mxu0 0.0
    %658 = vmatprep.subr.mxu0 0.0
    %659 = vmatpush2.msra.mxu0 0.0
    %660 = vmatprep.mubr.f32.mxu0 0.0
    %v661 = vand.u32 %v279, 4294901760
    %662 = vmatmul.mubr.f32.gmra.mxu0 %v661
    %v663 = vpop.f32.mrf.mxu0
    %v664 = vadd.f32 %v587, %v663
    %v665 = vpop.f32.mrf.mxu0
    %666 = vdwg.mxu0
    %667 = vmatprep.subr.mxu0 0.0
    %668 = vmatpush1.msra.mxu0 0.0
    %669 = vmatprep.subr.mxu0 0.0
    %670 = vmatpush1.msra.mxu0 0.0
    %671 = vmatprep.subr.mxu0 0.0
    %672 = vmatpush1.msra.mxu0 0.0
    %673 = vmatprep.subr.mxu0 0.0
    %674 = vmatpush1.msra.mxu0 0.0
    %675 = vmatprep.subr.mxu0 0.0
    %676 = vmatpush1.msra.mxu0 0.0
    %677 = vmatprep.subr.mxu0 0.0
    %678 = vmatpush1.msra.mxu0 0.0
    %679 = vmatprep.subr.mxu0 0.0
    %680 = vmatpush1.msra.mxu0 0.0
    %681 = vmatprep.subr.mxu0 0.0
    %682 = vmatpush1.msra.mxu0 0.0
    %683 = vmatprep.subr.mxu0 0.0
    %684 = vmatpush1.msra.mxu0 0.0
    %685 = vmatprep.subr.mxu0 0.0
    %686 = vmatpush1.msra.mxu0 0.0
    %687 = vmatprep.subr.mxu0 0.0
    %688 = vmatpush1.msra.mxu0 0.0
    %689 = vmatprep.subr.mxu0 0.0
    %690 = vmatpush1.msra.mxu0 0.0
    %691 = vmatprep.subr.mxu0 0.0
    %692 = vmatpush1.msra.mxu0 0.0
    %693 = vmatprep.subr.mxu0 0.0
    %694 = vmatpush1.msra.mxu0 0.0
    %695 = vmatprep.subr.mxu0 0.0
    %v696 = vand.u32 %v271, 4294901760
    %697 = vmatpush1.msra.mxu0 %v696
    %698 = vmatprep.subr.mxu0 0.0
    %v699 = vand.u32 %v270, 4294901760
    %700 = vmatpush1.msra.mxu0 %v699
    %701 = vmatprep.subr.mxu0 0.0
    %702 = vmatpush2.msra.mxu0 0.0
    %703 = vmatprep.subr.mxu0 0.0
    %704 = vmatpush2.msra.mxu0 0.0
    %705 = vmatprep.subr.mxu0 0.0
    %706 = vmatpush2.msra.mxu0 0.0
    %707 = vmatprep.subr.mxu0 0.0
    %708 = vmatpush2.msra.mxu0 0.0
    %709 = vmatprep.subr.mxu0 0.0
    %710 = vmatpush2.msra.mxu0 0.0
    %711 = vmatprep.subr.mxu0 0.0
    %712 = vmatpush2.msra.mxu0 0.0
    %713 = vmatprep.subr.mxu0 0.0
    %714 = vmatpush2.msra.mxu0 0.0
    %715 = vmatprep.subr.mxu0 0.0
    %716 = vmatpush2.msra.mxu0 0.0
    %717 = vmatprep.subr.mxu0 0.0
    %718 = vmatpush2.msra.mxu0 0.0
    %719 = vmatprep.subr.mxu0 0.0
    %720 = vmatpush2.msra.mxu0 0.0
    %721 = vmatprep.subr.mxu0 0.0
    %722 = vmatpush2.msra.mxu0 0.0
    %723 = vmatprep.subr.mxu0 0.0
    %724 = vmatpush2.msra.mxu0 0.0
    %725 = vmatprep.subr.mxu0 0.0
    %726 = vmatpush2.msra.mxu0 0.0
    %727 = vmatprep.subr.mxu0 0.0
    %728 = vmatpush2.msra.mxu0 0.0
    %729 = vmatprep.subr.mxu0 0.0
    %730 = vmatpush2.msra.mxu0 0.0
    %731 = vmatprep.subr.mxu0 0.0
    %732 = vmatpush2.msra.mxu0 0.0
    %733 = vmatprep.mubr.f32.mxu0 0.0
    %v734 = vand.u32 %v279, 4294901760
    %735 = vmatmul.mubr.f32.gmra.mxu0 %v734
    %v736 = vpop.f32.mrf.mxu0
    %v737 = vadd.f32 %v664, %v736
    %v738 = vpop.f32.mrf.mxu0
    %739 = vdwg.mxu0
    %vm740 = vcmp.gt.f32.partialorder %v737, 20.0
    %v741 = vmin.f32 %v737, 20.0
    %v742 = vmul.f32 %v741, 1.442695
    %v743 = vpow.pop %v742
    %v744 = vadd.f32 %v743, 1.0
    %v745 = vlog2.pop %v744
    %v746 = vmul.f32 %v745, 0.6931472
    %v747 = vmul.f32 -0.5, %v743
    %v748 = vadd.f32 %v747, 1.0
    %v749 = vmul.f32 %v748, %v743
    %v750 = vand.u32 2147483647, %v743
    %vm751 = vcmp.lt.f32.partialorder %v750, 0.0004427343
    %v752 = vsel %vm751, %v749, %v746
    %v753 = vsel %vm740, %v737, %v752
    %v754 = vtanh.pop %v753
    %v755 = vmul.f32 %v737, %v754
    %v756 = vld [vmem:[#allocation6 + $0x20] sm:$0xff]
    %v757 = vld [vmem:[#allocation6 + $0x28] sm:$0xff]
    %v758 = vld [vmem:[#allocation6 + $0x30] sm:$0xff]
    %v759 = vld [vmem:[#allocation6 + $0x38] sm:$0xff]
    %v760 = vld [vmem:[#allocation6 + $0x40] sm:$0xff]
    %v761 = vld [vmem:[#allocation6 + $0x48] sm:$0xff]
    %v762 = vld [vmem:[#allocation6 + $0x50] sm:$0xff]
    %v763 = vld [vmem:[#allocation6 + $0x58] sm:$0xff]
    %v764 = vld [vmem:[#allocation6 + $0x60] sm:$0x1]
    %v765 = vlaneseq
    %v766 = vshrl.u32 %v765, 7
    %v767 = vsub.s32 0, %v766
    %v768 = vrot.slane %v764, %v767
    %vm769 = vcmask 523264
    %v771 = vsel %vm769, %v755, 0
    %773 = vmatprep.subr.mxu0 0.0
    %774 = vmatpush1.msra.mxu0 0.0
    %775 = vmatprep.subr.mxu0 0.0
    %776 = vmatpush1.msra.mxu0 0.0
    %777 = vmatprep.subr.mxu0 0.0
    %778 = vmatpush1.msra.mxu0 0.0
    %779 = vmatprep.subr.mxu0 0.0
    %780 = vmatpush1.msra.mxu0 0.0
    %781 = vmatprep.subr.mxu0 0.0
    %782 = vmatpush1.msra.mxu0 0.0
    %783 = vmatprep.subr.mxu0 0.0
    %784 = vmatpush1.msra.mxu0 0.0
    %785 = vmatprep.subr.mxu0 0.0
    %786 = vmatpush1.msra.mxu0 0.0
    %787 = vmatprep.subr.mxu0 0.0
    %788 = vmatpush1.msra.mxu0 0.0
    %789 = vmatprep.subr.mxu0 0.0
    %v790 = vand.u32 %v763, 4294901760
    %791 = vmatpush1.msra.mxu0 %v790
    %792 = vmatprep.subr.mxu0 0.0
    %v793 = vand.u32 %v762, 4294901760
    %794 = vmatpush1.msra.mxu0 %v793
    %795 = vmatprep.subr.mxu0 0.0
    %v796 = vand.u32 %v761, 4294901760
    %797 = vmatpush1.msra.mxu0 %v796
    %798 = vmatprep.subr.mxu0 0.0
    %v799 = vand.u32 %v760, 4294901760
    %800 = vmatpush1.msra.mxu0 %v799
    %801 = vmatprep.subr.mxu0 0.0
    %v802 = vand.u32 %v759, 4294901760
    %803 = vmatpush1.msra.mxu0 %v802
    %804 = vmatprep.subr.mxu0 0.0
    %v805 = vand.u32 %v758, 4294901760
    %806 = vmatpush1.msra.mxu0 %v805
    %807 = vmatprep.subr.mxu0 0.0
    %v808 = vand.u32 %v757, 4294901760
    %809 = vmatpush1.msra.mxu0 %v808
    %810 = vmatprep.subr.mxu0 0.0
    %v811 = vand.u32 %v756, 4294901760
    %812 = vmatpush1.msra.mxu0 %v811
    %813 = vmatprep.subr.mxu0 0.0
    %814 = vmatpush2.msra.mxu0 0.0
    %815 = vmatprep.subr.mxu0 0.0
    %816 = vmatpush2.msra.mxu0 0.0
    %817 = vmatprep.subr.mxu0 0.0
    %818 = vmatpush2.msra.mxu0 0.0
    %819 = vmatprep.subr.mxu0 0.0
    %820 = vmatpush2.msra.mxu0 0.0
    %821 = vmatprep.subr.mxu0 0.0
    %822 = vmatpush2.msra.mxu0 0.0
    %823 = vmatprep.subr.mxu0 0.0
    %824 = vmatpush2.msra.mxu0 0.0
    %825 = vmatprep.subr.mxu0 0.0
    %826 = vmatpush2.msra.mxu0 0.0
    %827 = vmatprep.subr.mxu0 0.0
    %828 = vmatpush2.msra.mxu0 0.0
    %829 = vmatprep.subr.mxu0 0.0
    %830 = vmatpush2.msra.mxu0 0.0
    %831 = vmatprep.subr.mxu0 0.0
    %832 = vmatpush2.msra.mxu0 0.0
    %833 = vmatprep.subr.mxu0 0.0
    %834 = vmatpush2.msra.mxu0 0.0
    %835 = vmatprep.subr.mxu0 0.0
    %836 = vmatpush2.msra.mxu0 0.0
    %837 = vmatprep.subr.mxu0 0.0
    %838 = vmatpush2.msra.mxu0 0.0
    %839 = vmatprep.subr.mxu0 0.0
    %840 = vmatpush2.msra.mxu0 0.0
    %841 = vmatprep.subr.mxu0 0.0
    %842 = vmatpush2.msra.mxu0 0.0
    %843 = vmatprep.subr.mxu0 0.0
    %844 = vmatpush2.msra.mxu0 0.0
    %845 = vmatprep.mubr.f32.mxu0 0.0
    %v846 = vand.u32 %v771, 4294901760
    %v847 = vsub.f32 %v771, %v846
    %v848 = vand.u32 %v847, 4294901760
    %v849 = vsub.f32 %v847, %v848
    %v850 = vand.u32 %v849, 4294901760
    %851 = vmatmul.mubr.f32.gmra.mxu0 %v850
    %v852 = vpop.f32.mrf.mxu0
    %v853 = vadd.f32 %v768, %v852
    %v854 = vpop.f32.mrf.mxu0
    %855 = vdwg.mxu0
    %856 = vmatprep.subr.mxu0 0.0
    %857 = vmatpush1.msra.mxu0 0.0
    %858 = vmatprep.subr.mxu0 0.0
    %859 = vmatpush1.msra.mxu0 0.0
    %860 = vmatprep.subr.mxu0 0.0
    %861 = vmatpush1.msra.mxu0 0.0
    %862 = vmatprep.subr.mxu0 0.0
    %863 = vmatpush1.msra.mxu0 0.0
    %864 = vmatprep.subr.mxu0 0.0
    %865 = vmatpush1.msra.mxu0 0.0
    %866 = vmatprep.subr.mxu0 0.0
    %867 = vmatpush1.msra.mxu0 0.0
    %868 = vmatprep.subr.mxu0 0.0
    %869 = vmatpush1.msra.mxu0 0.0
    %870 = vmatprep.subr.mxu0 0.0
    %871 = vmatpush1.msra.mxu0 0.0
    %872 = vmatprep.subr.mxu0 0.0
    %v873 = vand.u32 %v763, 4294901760
    %v874 = vsub.f32 %v763, %v873
    %v875 = vand.u32 %v874, 4294901760
    %v876 = vsub.f32 %v874, %v875
    %v877 = vand.u32 %v876, 4294901760
    %878 = vmatpush1.msra.mxu0 %v877
    %879 = vmatprep.subr.mxu0 0.0
    %v880 = vand.u32 %v762, 4294901760
    %v881 = vsub.f32 %v762, %v880
    %v882 = vand.u32 %v881, 4294901760
    %v883 = vsub.f32 %v881, %v882
    %v884 = vand.u32 %v883, 4294901760
    %885 = vmatpush1.msra.mxu0 %v884
    %886 = vmatprep.subr.mxu0 0.0
    %v887 = vand.u32 %v761, 4294901760
    %v888 = vsub.f32 %v761, %v887
    %v889 = vand.u32 %v888, 4294901760
    %v890 = vsub.f32 %v888, %v889
    %v891 = vand.u32 %v890, 4294901760
    %892 = vmatpush1.msra.mxu0 %v891
    %893 = vmatprep.subr.mxu0 0.0
    %v894 = vand.u32 %v760, 4294901760
    %v895 = vsub.f32 %v760, %v894
    %v896 = vand.u32 %v895, 4294901760
    %v897 = vsub.f32 %v895, %v896
    %v898 = vand.u32 %v897, 4294901760
    %899 = vmatpush1.msra.mxu0 %v898
    %900 = vmatprep.subr.mxu0 0.0
    %v901 = vand.u32 %v759, 4294901760
    %v902 = vsub.f32 %v759, %v901
    %v903 = vand.u32 %v902, 4294901760
    %v904 = vsub.f32 %v902, %v903
    %v905 = vand.u32 %v904, 4294901760
    %906 = vmatpush1.msra.mxu0 %v905
    %907 = vmatprep.subr.mxu0 0.0
    %v908 = vand.u32 %v758, 4294901760
    %v909 = vsub.f32 %v758, %v908
    %v910 = vand.u32 %v909, 4294901760
    %v911 = vsub.f32 %v909, %v910
    %v912 = vand.u32 %v911, 4294901760
    %913 = vmatpush1.msra.mxu0 %v912
    %914 = vmatprep.subr.mxu0 0.0
    %v915 = vand.u32 %v757, 4294901760
    %v916 = vsub.f32 %v757, %v915
    %v917 = vand.u32 %v916, 4294901760
    %v918 = vsub.f32 %v916, %v917
    %v919 = vand.u32 %v918, 4294901760
    %920 = vmatpush1.msra.mxu0 %v919
    %921 = vmatprep.subr.mxu0 0.0
    %v922 = vand.u32 %v756, 4294901760
    %v923 = vsub.f32 %v756, %v922
    %v924 = vand.u32 %v923, 4294901760
    %v925 = vsub.f32 %v923, %v924
    %v926 = vand.u32 %v925, 4294901760
    %927 = vmatpush1.msra.mxu0 %v926
    %928 = vmatprep.subr.mxu0 0.0
    %929 = vmatpush2.msra.mxu0 0.0
    %930 = vmatprep.subr.mxu0 0.0
    %931 = vmatpush2.msra.mxu0 0.0
    %932 = vmatprep.subr.mxu0 0.0
    %933 = vmatpush2.msra.mxu0 0.0
    %934 = vmatprep.subr.mxu0 0.0
    %935 = vmatpush2.msra.mxu0 0.0
    %936 = vmatprep.subr.mxu0 0.0
    %937 = vmatpush2.msra.mxu0 0.0
    %938 = vmatprep.subr.mxu0 0.0
    %939 = vmatpush2.msra.mxu0 0.0
    %940 = vmatprep.subr.mxu0 0.0
    %941 = vmatpush2.msra.mxu0 0.0
    %942 = vmatprep.subr.mxu0 0.0
    %943 = vmatpush2.msra.mxu0 0.0
    %944 = vmatprep.subr.mxu0 0.0
    %945 = vmatpush2.msra.mxu0 0.0
    %946 = vmatprep.subr.mxu0 0.0
    %947 = vmatpush2.msra.mxu0 0.0
    %948 = vmatprep.subr.mxu0 0.0
    %949 = vmatpush2.msra.mxu0 0.0
    %950 = vmatprep.subr.mxu0 0.0
    %951 = vmatpush2.msra.mxu0 0.0
    %952 = vmatprep.subr.mxu0 0.0
    %953 = vmatpush2.msra.mxu0 0.0
    %954 = vmatprep.subr.mxu0 0.0
    %955 = vmatpush2.msra.mxu0 0.0
    %956 = vmatprep.subr.mxu0 0.0
    %957 = vmatpush2.msra.mxu0 0.0
    %958 = vmatprep.subr.mxu0 0.0
    %959 = vmatpush2.msra.mxu0 0.0
    %960 = vmatprep.mubr.f32.mxu0 0.0
    %v961 = vand.u32 %v771, 4294901760
    %962 = vmatmul.mubr.f32.gmra.mxu0 %v961
    %v963 = vpop.f32.mrf.mxu0
    %v964 = vadd.f32 %v853, %v963
    %v965 = vpop.f32.mrf.mxu0
    %966 = vdwg.mxu0
    %967 = vmatprep.subr.mxu0 0.0
    %968 = vmatpush1.msra.mxu0 0.0
    %969 = vmatprep.subr.mxu0 0.0
    %970 = vmatpush1.msra.mxu0 0.0
    %971 = vmatprep.subr.mxu0 0.0
    %972 = vmatpush1.msra.mxu0 0.0
    %973 = vmatprep.subr.mxu0 0.0
    %974 = vmatpush1.msra.mxu0 0.0
    %975 = vmatprep.subr.mxu0 0.0
    %976 = vmatpush1.msra.mxu0 0.0
    %977 = vmatprep.subr.mxu0 0.0
    %978 = vmatpush1.msra.mxu0 0.0
    %979 = vmatprep.subr.mxu0 0.0
    %980 = vmatpush1.msra.mxu0 0.0
    %981 = vmatprep.subr.mxu0 0.0
    %982 = vmatpush1.msra.mxu0 0.0
    %983 = vmatprep.subr.mxu0 0.0
    %v984 = vand.u32 %v763, 4294901760
    %v985 = vsub.f32 %v763, %v984
    %986 = vmatpush1.msra.mxu0 %v985
    %987 = vmatprep.subr.mxu0 0.0
    %v988 = vand.u32 %v762, 4294901760
    %v989 = vsub.f32 %v762, %v988
    %990 = vmatpush1.msra.mxu0 %v989
    %991 = vmatprep.subr.mxu0 0.0
    %v992 = vand.u32 %v761, 4294901760
    %v993 = vsub.f32 %v761, %v992
    %994 = vmatpush1.msra.mxu0 %v993
    %995 = vmatprep.subr.mxu0 0.0
    %v996 = vand.u32 %v760, 4294901760
    %v997 = vsub.f32 %v760, %v996
    %998 = vmatpush1.msra.mxu0 %v997
    %999 = vmatprep.subr.mxu0 0.0
    %v1000 = vand.u32 %v759, 4294901760
    %v1001 = vsub.f32 %v759, %v1000
    %1002 = vmatpush1.msra.mxu0 %v1001
    %1003 = vmatprep.subr.mxu0 0.0
    %v1004 = vand.u32 %v758, 4294901760
    %v1005 = vsub.f32 %v758, %v1004
    %1006 = vmatpush1.msra.mxu0 %v1005
    %1007 = vmatprep.subr.mxu0 0.0
    %v1008 = vand.u32 %v757, 4294901760
    %v1009 = vsub.f32 %v757, %v1008
    %1010 = vmatpush1.msra.mxu0 %v1009
    %1011 = vmatprep.subr.mxu0 0.0
    %v1012 = vand.u32 %v756, 4294901760
    %v1013 = vsub.f32 %v756, %v1012
    %1014 = vmatpush1.msra.mxu0 %v1013
    %1015 = vmatprep.subr.mxu0 0.0
    %1016 = vmatpush2.msra.mxu0 0.0
    %1017 = vmatprep.subr.mxu0 0.0
    %1018 = vmatpush2.msra.mxu0 0.0
    %1019 = vmatprep.subr.mxu0 0.0
    %1020 = vmatpush2.msra.mxu0 0.0
    %1021 = vmatprep.subr.mxu0 0.0
    %1022 = vmatpush2.msra.mxu0 0.0
    %1023 = vmatprep.subr.mxu0 0.0
    %1024 = vmatpush2.msra.mxu0 0.0
    %1025 = vmatprep.subr.mxu0 0.0
    %1026 = vmatpush2.msra.mxu0 0.0
    %1027 = vmatprep.subr.mxu0 0.0
    %1028 = vmatpush2.msra.mxu0 0.0
    %1029 = vmatprep.subr.mxu0 0.0
    %1030 = vmatpush2.msra.mxu0 0.0
    %1031 = vmatprep.subr.mxu0 0.0
    %1032 = vmatpush2.msra.mxu0 0.0
    %1033 = vmatprep.subr.mxu0 0.0
    %1034 = vmatpush2.msra.mxu0 0.0
    %1035 = vmatprep.subr.mxu0 0.0
    %1036 = vmatpush2.msra.mxu0 0.0
    %1037 = vmatprep.subr.mxu0 0.0
    %1038 = vmatpush2.msra.mxu0 0.0
    %1039 = vmatprep.subr.mxu0 0.0
    %1040 = vmatpush2.msra.mxu0 0.0
    %1041 = vmatprep.subr.mxu0 0.0
    %1042 = vmatpush2.msra.mxu0 0.0
    %1043 = vmatprep.subr.mxu0 0.0
    %1044 = vmatpush2.msra.mxu0 0.0
    %1045 = vmatprep.subr.mxu0 0.0
    %1046 = vmatpush2.msra.mxu0 0.0
    %1047 = vmatprep.mubr.f32.mxu0 0.0
    %v1048 = vand.u32 %v771, 4294901760
    %v1049 = vsub.f32 %v771, %v1048
    %1050 = vmatmul.mubr.f32.gmra.mxu0 %v1049
    %v1051 = vpop.f32.mrf.mxu0
    %v1052 = vadd.f32 %v964, %v1051
    %v1053 = vpop.f32.mrf.mxu0
    %1054 = vdwg.mxu0
    %1055 = vmatprep.subr.mxu0 0.0
    %1056 = vmatpush1.msra.mxu0 0.0
    %1057 = vmatprep.subr.mxu0 0.0
    %1058 = vmatpush1.msra.mxu0 0.0
    %1059 = vmatprep.subr.mxu0 0.0
    %1060 = vmatpush1.msra.mxu0 0.0
    %1061 = vmatprep.subr.mxu0 0.0
    %1062 = vmatpush1.msra.mxu0 0.0
    %1063 = vmatprep.subr.mxu0 0.0
    %1064 = vmatpush1.msra.mxu0 0.0
    %1065 = vmatprep.subr.mxu0 0.0
    %1066 = vmatpush1.msra.mxu0 0.0
    %1067 = vmatprep.subr.mxu0 0.0
    %1068 = vmatpush1.msra.mxu0 0.0
    %1069 = vmatprep.subr.mxu0 0.0
    %1070 = vmatpush1.msra.mxu0 0.0
    %1071 = vmatprep.subr.mxu0 0.0
    %v1072 = vand.u32 %v763, 4294901760
    %1073 = vmatpush1.msra.mxu0 %v1072
    %1074 = vmatprep.subr.mxu0 0.0
    %v1075 = vand.u32 %v762, 4294901760
    %1076 = vmatpush1.msra.mxu0 %v1075
    %1077 = vmatprep.subr.mxu0 0.0
    %v1078 = vand.u32 %v761, 4294901760
    %1079 = vmatpush1.msra.mxu0 %v1078
    %1080 = vmatprep.subr.mxu0 0.0
    %v1081 = vand.u32 %v760, 4294901760
    %1082 = vmatpush1.msra.mxu0 %v1081
    %1083 = vmatprep.subr.mxu0 0.0
    %v1084 = vand.u32 %v759, 4294901760
    %1085 = vmatpush1.msra.mxu0 %v1084
    %1086 = vmatprep.subr.mxu0 0.0
    %v1087 = vand.u32 %v758, 4294901760
    %1088 = vmatpush1.msra.mxu0 %v1087
    %1089 = vmatprep.subr.mxu0 0.0
    %v1090 = vand.u32 %v757, 4294901760
    %1091 = vmatpush1.msra.mxu0 %v1090
    %1092 = vmatprep.subr.mxu0 0.0
    %v1093 = vand.u32 %v756, 4294901760
    %1094 = vmatpush1.msra.mxu0 %v1093
    %1095 = vmatprep.subr.mxu0 0.0
    %1096 = vmatpush2.msra.mxu0 0.0
    %1097 = vmatprep.subr.mxu0 0.0
    %1098 = vmatpush2.msra.mxu0 0.0
    %1099 = vmatprep.subr.mxu0 0.0
    %1100 = vmatpush2.msra.mxu0 0.0
    %1101 = vmatprep.subr.mxu0 0.0
    %1102 = vmatpush2.msra.mxu0 0.0
    %1103 = vmatprep.subr.mxu0 0.0
    %1104 = vmatpush2.msra.mxu0 0.0
    %1105 = vmatprep.subr.mxu0 0.0
    %1106 = vmatpush2.msra.mxu0 0.0
    %1107 = vmatprep.subr.mxu0 0.0
    %1108 = vmatpush2.msra.mxu0 0.0
    %1109 = vmatprep.subr.mxu0 0.0
    %1110 = vmatpush2.msra.mxu0 0.0
    %1111 = vmatprep.subr.mxu0 0.0
    %1112 = vmatpush2.msra.mxu0 0.0
    %1113 = vmatprep.subr.mxu0 0.0
    %1114 = vmatpush2.msra.mxu0 0.0
    %1115 = vmatprep.subr.mxu0 0.0
    %1116 = vmatpush2.msra.mxu0 0.0
    %1117 = vmatprep.subr.mxu0 0.0
    %1118 = vmatpush2.msra.mxu0 0.0
    %1119 = vmatprep.subr.mxu0 0.0
    %1120 = vmatpush2.msra.mxu0 0.0
    %1121 = vmatprep.subr.mxu0 0.0
    %1122 = vmatpush2.msra.mxu0 0.0
    %1123 = vmatprep.subr.mxu0 0.0
    %1124 = vmatpush2.msra.mxu0 0.0
    %1125 = vmatprep.subr.mxu0 0.0
    %1126 = vmatpush2.msra.mxu0 0.0
    %1127 = vmatprep.mubr.f32.mxu0 0.0
    %v1128 = vand.u32 %v771, 4294901760
    %v1129 = vsub.f32 %v771, %v1128
    %v1130 = vand.u32 %v1129, 4294901760
    %1131 = vmatmul.mubr.f32.gmra.mxu0 %v1130
    %v1132 = vpop.f32.mrf.mxu0
    %v1133 = vadd.f32 %v1052, %v1132
    %v1134 = vpop.f32.mrf.mxu0
    %1135 = vdwg.mxu0
    %1136 = vmatprep.subr.mxu0 0.0
    %1137 = vmatpush1.msra.mxu0 0.0
    %1138 = vmatprep.subr.mxu0 0.0
    %1139 = vmatpush1.msra.mxu0 0.0
    %1140 = vmatprep.subr.mxu0 0.0
    %1141 = vmatpush1.msra.mxu0 0.0
    %1142 = vmatprep.subr.mxu0 0.0
    %1143 = vmatpush1.msra.mxu0 0.0
    %1144 = vmatprep.subr.mxu0 0.0
    %1145 = vmatpush1.msra.mxu0 0.0
    %1146 = vmatprep.subr.mxu0 0.0
    %1147 = vmatpush1.msra.mxu0 0.0
    %1148 = vmatprep.subr.mxu0 0.0
    %1149 = vmatpush1.msra.mxu0 0.0
    %1150 = vmatprep.subr.mxu0 0.0
    %1151 = vmatpush1.msra.mxu0 0.0
    %1152 = vmatprep.subr.mxu0 0.0
    %v1153 = vand.u32 %v763, 4294901760
    %v1154 = vsub.f32 %v763, %v1153
    %v1155 = vand.u32 %v1154, 4294901760
    %1156 = vmatpush1.msra.mxu0 %v1155
    %1157 = vmatprep.subr.mxu0 0.0
    %v1158 = vand.u32 %v762, 4294901760
    %v1159 = vsub.f32 %v762, %v1158
    %v1160 = vand.u32 %v1159, 4294901760
    %1161 = vmatpush1.msra.mxu0 %v1160
    %1162 = vmatprep.subr.mxu0 0.0
    %v1163 = vand.u32 %v761, 4294901760
    %v1164 = vsub.f32 %v761, %v1163
    %v1165 = vand.u32 %v1164, 4294901760
    %1166 = vmatpush1.msra.mxu0 %v1165
    %1167 = vmatprep.subr.mxu0 0.0
    %v1168 = vand.u32 %v760, 4294901760
    %v1169 = vsub.f32 %v760, %v1168
    %v1170 = vand.u32 %v1169, 4294901760
    %1171 = vmatpush1.msra.mxu0 %v1170
    %1172 = vmatprep.subr.mxu0 0.0
    %v1173 = vand.u32 %v759, 4294901760
    %v1174 = vsub.f32 %v759, %v1173
    %v1175 = vand.u32 %v1174, 4294901760
    %1176 = vmatpush1.msra.mxu0 %v1175
    %1177 = vmatprep.subr.mxu0 0.0
    %v1178 = vand.u32 %v758, 4294901760
    %v1179 = vsub.f32 %v758, %v1178
    %v1180 = vand.u32 %v1179, 4294901760
    %1181 = vmatpush1.msra.mxu0 %v1180
    %1182 = vmatprep.subr.mxu0 0.0
    %v1183 = vand.u32 %v757, 4294901760
    %v1184 = vsub.f32 %v757, %v1183
    %v1185 = vand.u32 %v1184, 4294901760
    %1186 = vmatpush1.msra.mxu0 %v1185
    %1187 = vmatprep.subr.mxu0 0.0
    %v1188 = vand.u32 %v756, 4294901760
    %v1189 = vsub.f32 %v756, %v1188
    %v1190 = vand.u32 %v1189, 4294901760
    %1191 = vmatpush1.msra.mxu0 %v1190
    %1192 = vmatprep.subr.mxu0 0.0
    %1193 = vmatpush2.msra.mxu0 0.0
    %1194 = vmatprep.subr.mxu0 0.0
    %1195 = vmatpush2.msra.mxu0 0.0
    %1196 = vmatprep.subr.mxu0 0.0
    %1197 = vmatpush2.msra.mxu0 0.0
    %1198 = vmatprep.subr.mxu0 0.0
    %1199 = vmatpush2.msra.mxu0 0.0
    %1200 = vmatprep.subr.mxu0 0.0
    %1201 = vmatpush2.msra.mxu0 0.0
    %1202 = vmatprep.subr.mxu0 0.0
    %1203 = vmatpush2.msra.mxu0 0.0
    %1204 = vmatprep.subr.mxu0 0.0
    %1205 = vmatpush2.msra.mxu0 0.0
    %1206 = vmatprep.subr.mxu0 0.0
    %1207 = vmatpush2.msra.mxu0 0.0
    %1208 = vmatprep.subr.mxu0 0.0
    %1209 = vmatpush2.msra.mxu0 0.0
    %1210 = vmatprep.subr.mxu0 0.0
    %1211 = vmatpush2.msra.mxu0 0.0
    %1212 = vmatprep.subr.mxu0 0.0
    %1213 = vmatpush2.msra.mxu0 0.0
    %1214 = vmatprep.subr.mxu0 0.0
    %1215 = vmatpush2.msra.mxu0 0.0
    %1216 = vmatprep.subr.mxu0 0.0
    %1217 = vmatpush2.msra.mxu0 0.0
    %1218 = vmatprep.subr.mxu0 0.0
    %1219 = vmatpush2.msra.mxu0 0.0
    %1220 = vmatprep.subr.mxu0 0.0
    %1221 = vmatpush2.msra.mxu0 0.0
    %1222 = vmatprep.subr.mxu0 0.0
    %1223 = vmatpush2.msra.mxu0 0.0
    %1224 = vmatprep.mubr.f32.mxu0 0.0
    %v1225 = vand.u32 %v771, 4294901760
    %1226 = vmatmul.mubr.f32.gmra.mxu0 %v1225
    %v1227 = vpop.f32.mrf.mxu0
    %v1228 = vadd.f32 %v1133, %v1227
    %v1229 = vpop.f32.mrf.mxu0
    %1230 = vdwg.mxu0
    %1231 = vmatprep.subr.mxu0 0.0
    %1232 = vmatpush1.msra.mxu0 0.0
    %1233 = vmatprep.subr.mxu0 0.0
    %1234 = vmatpush1.msra.mxu0 0.0
    %1235 = vmatprep.subr.mxu0 0.0
    %1236 = vmatpush1.msra.mxu0 0.0
    %1237 = vmatprep.subr.mxu0 0.0
    %1238 = vmatpush1.msra.mxu0 0.0
    %1239 = vmatprep.subr.mxu0 0.0
    %1240 = vmatpush1.msra.mxu0 0.0
    %1241 = vmatprep.subr.mxu0 0.0
    %1242 = vmatpush1.msra.mxu0 0.0
    %1243 = vmatprep.subr.mxu0 0.0
    %1244 = vmatpush1.msra.mxu0 0.0
    %1245 = vmatprep.subr.mxu0 0.0
    %1246 = vmatpush1.msra.mxu0 0.0
    %1247 = vmatprep.subr.mxu0 0.0
    %v1248 = vand.u32 %v763, 4294901760
    %1249 = vmatpush1.msra.mxu0 %v1248
    %1250 = vmatprep.subr.mxu0 0.0
    %v1251 = vand.u32 %v762, 4294901760
    %1252 = vmatpush1.msra.mxu0 %v1251
    %1253 = vmatprep.subr.mxu0 0.0
    %v1254 = vand.u32 %v761, 4294901760
    %1255 = vmatpush1.msra.mxu0 %v1254
    %1256 = vmatprep.subr.mxu0 0.0
    %v1257 = vand.u32 %v760, 4294901760
    %1258 = vmatpush1.msra.mxu0 %v1257
    %1259 = vmatprep.subr.mxu0 0.0
    %v1260 = vand.u32 %v759, 4294901760
    %1261 = vmatpush1.msra.mxu0 %v1260
    %1262 = vmatprep.subr.mxu0 0.0
    %v1263 = vand.u32 %v758, 4294901760
    %1264 = vmatpush1.msra.mxu0 %v1263
    %1265 = vmatprep.subr.mxu0 0.0
    %v1266 = vand.u32 %v757, 4294901760
    %1267 = vmatpush1.msra.mxu0 %v1266
    %1268 = vmatprep.subr.mxu0 0.0
    %v1269 = vand.u32 %v756, 4294901760
    %1270 = vmatpush1.msra.mxu0 %v1269
    %1271 = vmatprep.subr.mxu0 0.0
    %1272 = vmatpush2.msra.mxu0 0.0
    %1273 = vmatprep.subr.mxu0 0.0
    %1274 = vmatpush2.msra.mxu0 0.0
    %1275 = vmatprep.subr.mxu0 0.0
    %1276 = vmatpush2.msra.mxu0 0.0
    %1277 = vmatprep.subr.mxu0 0.0
    %1278 = vmatpush2.msra.mxu0 0.0
    %1279 = vmatprep.subr.mxu0 0.0
    %1280 = vmatpush2.msra.mxu0 0.0
    %1281 = vmatprep.subr.mxu0 0.0
    %1282 = vmatpush2.msra.mxu0 0.0
    %1283 = vmatprep.subr.mxu0 0.0
    %1284 = vmatpush2.msra.mxu0 0.0
    %1285 = vmatprep.subr.mxu0 0.0
    %1286 = vmatpush2.msra.mxu0 0.0
    %1287 = vmatprep.subr.mxu0 0.0
    %1288 = vmatpush2.msra.mxu0 0.0
    %1289 = vmatprep.subr.mxu0 0.0
    %1290 = vmatpush2.msra.mxu0 0.0
    %1291 = vmatprep.subr.mxu0 0.0
    %1292 = vmatpush2.msra.mxu0 0.0
    %1293 = vmatprep.subr.mxu0 0.0
    %1294 = vmatpush2.msra.mxu0 0.0
    %1295 = vmatprep.subr.mxu0 0.0
    %1296 = vmatpush2.msra.mxu0 0.0
    %1297 = vmatprep.subr.mxu0 0.0
    %1298 = vmatpush2.msra.mxu0 0.0
    %1299 = vmatprep.subr.mxu0 0.0
    %1300 = vmatpush2.msra.mxu0 0.0
    %1301 = vmatprep.subr.mxu0 0.0
    %1302 = vmatpush2.msra.mxu0 0.0
    %1303 = vmatprep.mubr.f32.mxu0 0.0
    %v1304 = vand.u32 %v771, 4294901760
    %1305 = vmatmul.mubr.f32.gmra.mxu0 %v1304
    %v1306 = vpop.f32.mrf.mxu0
    %v1307 = vadd.f32 %v1228, %v1306
    %v1308 = vpop.f32.mrf.mxu0
    %1309 = vdwg.mxu0
    %v1310 = vld [vmem:[%s3] sm:$0x3]
    %1312 = vrot.lane.b32.xlu0 %v1307, 32
    %v1313 = vpop.permute.xlu0 %1312
    %vm1315 = vcmask 261120
    %v1316 = vsel %vm1315, %v1310, %v1313
    %v1317 = vld [vmem:[#allocation6 + $0x68] sm:$0xff]
    %v1318 = vld [vmem:[#allocation6 + $0x70] sm:$0xff]
    %v1319 = vld [vmem:[#allocation6 + $0x78] sm:$0xff]
    %v1320 = vld [vmem:[#allocation6 + $0x80] sm:$0xff]
    %v1321 = vld [vmem:[#allocation6 + $0x88] sm:$0xff]
    %v1322 = vld [vmem:[#allocation6 + $0x90] sm:$0xff]
    %v1323 = vld [vmem:[#allocation6 + $0x98] sm:$0x1]
    %v1324 = vlaneseq
    %v1325 = vshrl.u32 %v1324, 7
    %v1326 = vsub.s32 0, %v1325
    %v1327 = vrot.slane %v1323, %v1326
    %vm1328 = vcmask 392192
    %v1330 = vsel %vm1328, %v1316, 0
    %1332 = vmatprep.subr.mxu0 0.0
    %1333 = vmatpush1.msra.mxu0 0.0
    %1334 = vmatprep.subr.mxu0 0.0
    %1335 = vmatpush1.msra.mxu0 0.0
    %1336 = vmatprep.subr.mxu0 0.0
    %1337 = vmatpush1.msra.mxu0 0.0
    %1338 = vmatprep.subr.mxu0 0.0
    %1339 = vmatpush1.msra.mxu0 0.0
    %1340 = vmatprep.subr.mxu0 0.0
    %1341 = vmatpush1.msra.mxu0 0.0
    %1342 = vmatprep.subr.mxu0 0.0
    %1343 = vmatpush1.msra.mxu0 0.0
    %1344 = vmatprep.subr.mxu0 0.0
    %1345 = vmatpush1.msra.mxu0 0.0
    %1346 = vmatprep.subr.mxu0 0.0
    %1347 = vmatpush1.msra.mxu0 0.0
    %1348 = vmatprep.subr.mxu0 0.0
    %1349 = vmatpush1.msra.mxu0 0.0
    %1350 = vmatprep.subr.mxu0 0.0
    %1351 = vmatpush1.msra.mxu0 0.0
    %1352 = vmatprep.subr.mxu0 0.0
    %v1353 = vand.u32 %v1322, 4294901760
    %1354 = vmatpush1.msra.mxu0 %v1353
    %1355 = vmatprep.subr.mxu0 0.0
    %v1356 = vand.u32 %v1321, 4294901760
    %1357 = vmatpush1.msra.mxu0 %v1356
    %1358 = vmatprep.subr.mxu0 0.0
    %v1359 = vand.u32 %v1320, 4294901760
    %1360 = vmatpush1.msra.mxu0 %v1359
    %1361 = vmatprep.subr.mxu0 0.0
    %v1362 = vand.u32 %v1319, 4294901760
    %1363 = vmatpush1.msra.mxu0 %v1362
    %1364 = vmatprep.subr.mxu0 0.0
    %v1365 = vand.u32 %v1318, 4294901760
    %1366 = vmatpush1.msra.mxu0 %v1365
    %1367 = vmatprep.subr.mxu0 0.0
    %v1368 = vand.u32 %v1317, 4294901760
    %1369 = vmatpush1.msra.mxu0 %v1368
    %1370 = vmatprep.subr.mxu0 0.0
    %1371 = vmatpush2.msra.mxu0 0.0
    %1372 = vmatprep.subr.mxu0 0.0
    %1373 = vmatpush2.msra.mxu0 0.0
    %1374 = vmatprep.subr.mxu0 0.0
    %1375 = vmatpush2.msra.mxu0 0.0
    %1376 = vmatprep.subr.mxu0 0.0
    %1377 = vmatpush2.msra.mxu0 0.0
    %1378 = vmatprep.subr.mxu0 0.0
    %1379 = vmatpush2.msra.mxu0 0.0
    %1380 = vmatprep.subr.mxu0 0.0
    %1381 = vmatpush2.msra.mxu0 0.0
    %1382 = vmatprep.subr.mxu0 0.0
    %1383 = vmatpush2.msra.mxu0 0.0
    %1384 = vmatprep.subr.mxu0 0.0
    %1385 = vmatpush2.msra.mxu0 0.0
    %1386 = vmatprep.subr.mxu0 0.0
    %1387 = vmatpush2.msra.mxu0 0.0
    %1388 = vmatprep.subr.mxu0 0.0
    %1389 = vmatpush2.msra.mxu0 0.0
    %1390 = vmatprep.subr.mxu0 0.0
    %1391 = vmatpush2.msra.mxu0 0.0
    %1392 = vmatprep.subr.mxu0 0.0
    %1393 = vmatpush2.msra.mxu0 0.0
    %1394 = vmatprep.subr.mxu0 0.0
    %1395 = vmatpush2.msra.mxu0 0.0
    %1396 = vmatprep.subr.mxu0 0.0
    %1397 = vmatpush2.msra.mxu0 0.0
    %1398 = vmatprep.subr.mxu0 0.0
    %1399 = vmatpush2.msra.mxu0 0.0
    %1400 = vmatprep.subr.mxu0 0.0
    %1401 = vmatpush2.msra.mxu0 0.0
    %1402 = vmatprep.mubr.f32.mxu0 0.0
    %v1403 = vand.u32 %v1330, 4294901760
    %v1404 = vsub.f32 %v1330, %v1403
    %v1405 = vand.u32 %v1404, 4294901760
    %v1406 = vsub.f32 %v1404, %v1405
    %v1407 = vand.u32 %v1406, 4294901760
    %1408 = vmatmul.mubr.f32.gmra.mxu0 %v1407
    %v1409 = vpop.f32.mrf.mxu0
    %v1410 = vadd.f32 %v1327, %v1409
    %v1411 = vpop.f32.mrf.mxu0
    %1412 = vdwg.mxu0
    %1413 = vmatprep.subr.mxu0 0.0
    %1414 = vmatpush1.msra.mxu0 0.0
    %1415 = vmatprep.subr.mxu0 0.0
    %1416 = vmatpush1.msra.mxu0 0.0
    %1417 = vmatprep.subr.mxu0 0.0
    %1418 = vmatpush1.msra.mxu0 0.0
    %1419 = vmatprep.subr.mxu0 0.0
    %1420 = vmatpush1.msra.mxu0 0.0
    %1421 = vmatprep.subr.mxu0 0.0
    %1422 = vmatpush1.msra.mxu0 0.0
    %1423 = vmatprep.subr.mxu0 0.0
    %1424 = vmatpush1.msra.mxu0 0.0
    %1425 = vmatprep.subr.mxu0 0.0
    %1426 = vmatpush1.msra.mxu0 0.0
    %1427 = vmatprep.subr.mxu0 0.0
    %1428 = vmatpush1.msra.mxu0 0.0
    %1429 = vmatprep.subr.mxu0 0.0
    %1430 = vmatpush1.msra.mxu0 0.0
    %1431 = vmatprep.subr.mxu0 0.0
    %1432 = vmatpush1.msra.mxu0 0.0
    %1433 = vmatprep.subr.mxu0 0.0
    %v1434 = vand.u32 %v1322, 4294901760
    %v1435 = vsub.f32 %v1322, %v1434
    %v1436 = vand.u32 %v1435, 4294901760
    %v1437 = vsub.f32 %v1435, %v1436
    %v1438 = vand.u32 %v1437, 4294901760
    %1439 = vmatpush1.msra.mxu0 %v1438
    %1440 = vmatprep.subr.mxu0 0.0
    %v1441 = vand.u32 %v1321, 4294901760
    %v1442 = vsub.f32 %v1321, %v1441
    %v1443 = vand.u32 %v1442, 4294901760
    %v1444 = vsub.f32 %v1442, %v1443
    %v1445 = vand.u32 %v1444, 4294901760
    %1446 = vmatpush1.msra.mxu0 %v1445
    %1447 = vmatprep.subr.mxu0 0.0
    %v1448 = vand.u32 %v1320, 4294901760
    %v1449 = vsub.f32 %v1320, %v1448
    %v1450 = vand.u32 %v1449, 4294901760
    %v1451 = vsub.f32 %v1449, %v1450
    %v1452 = vand.u32 %v1451, 4294901760
    %1453 = vmatpush1.msra.mxu0 %v1452
    %1454 = vmatprep.subr.mxu0 0.0
    %v1455 = vand.u32 %v1319, 4294901760
    %v1456 = vsub.f32 %v1319, %v1455
    %v1457 = vand.u32 %v1456, 4294901760
    %v1458 = vsub.f32 %v1456, %v1457
    %v1459 = vand.u32 %v1458, 4294901760
    %1460 = vmatpush1.msra.mxu0 %v1459
    %1461 = vmatprep.subr.mxu0 0.0
    %v1462 = vand.u32 %v1318, 4294901760
    %v1463 = vsub.f32 %v1318, %v1462
    %v1464 = vand.u32 %v1463, 4294901760
    %v1465 = vsub.f32 %v1463, %v1464
    %v1466 = vand.u32 %v1465, 4294901760
    %1467 = vmatpush1.msra.mxu0 %v1466
    %1468 = vmatprep.subr.mxu0 0.0
    %v1469 = vand.u32 %v1317, 4294901760
    %v1470 = vsub.f32 %v1317, %v1469
    %v1471 = vand.u32 %v1470, 4294901760
    %v1472 = vsub.f32 %v1470, %v1471
    %v1473 = vand.u32 %v1472, 4294901760
    %1474 = vmatpush1.msra.mxu0 %v1473
    %1475 = vmatprep.subr.mxu0 0.0
    %1476 = vmatpush2.msra.mxu0 0.0
    %1477 = vmatprep.subr.mxu0 0.0
    %1478 = vmatpush2.msra.mxu0 0.0
    %1479 = vmatprep.subr.mxu0 0.0
    %1480 = vmatpush2.msra.mxu0 0.0
    %1481 = vmatprep.subr.mxu0 0.0
    %1482 = vmatpush2.msra.mxu0 0.0
    %1483 = vmatprep.subr.mxu0 0.0
    %1484 = vmatpush2.msra.mxu0 0.0
    %1485 = vmatprep.subr.mxu0 0.0
    %1486 = vmatpush2.msra.mxu0 0.0
    %1487 = vmatprep.subr.mxu0 0.0
    %1488 = vmatpush2.msra.mxu0 0.0
    %1489 = vmatprep.subr.mxu0 0.0
    %1490 = vmatpush2.msra.mxu0 0.0
    %1491 = vmatprep.subr.mxu0 0.0
    %1492 = vmatpush2.msra.mxu0 0.0
    %1493 = vmatprep.subr.mxu0 0.0
    %1494 = vmatpush2.msra.mxu0 0.0
    %1495 = vmatprep.subr.mxu0 0.0
    %1496 = vmatpush2.msra.mxu0 0.0
    %1497 = vmatprep.subr.mxu0 0.0
    %1498 = vmatpush2.msra.mxu0 0.0
    %1499 = vmatprep.subr.mxu0 0.0
    %1500 = vmatpush2.msra.mxu0 0.0
    %1501 = vmatprep.subr.mxu0 0.0
    %1502 = vmatpush2.msra.mxu0 0.0
    %1503 = vmatprep.subr.mxu0 0.0
    %1504 = vmatpush2.msra.mxu0 0.0
    %1505 = vmatprep.subr.mxu0 0.0
    %1506 = vmatpush2.msra.mxu0 0.0
    %1507 = vmatprep.mubr.f32.mxu0 0.0
    %v1508 = vand.u32 %v1330, 4294901760
    %1509 = vmatmul.mubr.f32.gmra.mxu0 %v1508
    %v1510 = vpop.f32.mrf.mxu0
    %v1511 = vadd.f32 %v1410, %v1510
    %v1512 = vpop.f32.mrf.mxu0
    %1513 = vdwg.mxu0
    %1514 = vmatprep.subr.mxu0 0.0
    %1515 = vmatpush1.msra.mxu0 0.0
    %1516 = vmatprep.subr.mxu0 0.0
    %1517 = vmatpush1.msra.mxu0 0.0
    %1518 = vmatprep.subr.mxu0 0.0
    %1519 = vmatpush1.msra.mxu0 0.0
    %1520 = vmatprep.subr.mxu0 0.0
    %1521 = vmatpush1.msra.mxu0 0.0
    %1522 = vmatprep.subr.mxu0 0.0
    %1523 = vmatpush1.msra.mxu0 0.0
    %1524 = vmatprep.subr.mxu0 0.0
    %1525 = vmatpush1.msra.mxu0 0.0
    %1526 = vmatprep.subr.mxu0 0.0
    %1527 = vmatpush1.msra.mxu0 0.0
    %1528 = vmatprep.subr.mxu0 0.0
    %1529 = vmatpush1.msra.mxu0 0.0
    %1530 = vmatprep.subr.mxu0 0.0
    %1531 = vmatpush1.msra.mxu0 0.0
    %1532 = vmatprep.subr.mxu0 0.0
    %1533 = vmatpush1.msra.mxu0 0.0
    %1534 = vmatprep.subr.mxu0 0.0
    %v1535 = vand.u32 %v1322, 4294901760
    %v1536 = vsub.f32 %v1322, %v1535
    %1537 = vmatpush1.msra.mxu0 %v1536
    %1538 = vmatprep.subr.mxu0 0.0
    %v1539 = vand.u32 %v1321, 4294901760
    %v1540 = vsub.f32 %v1321, %v1539
    %1541 = vmatpush1.msra.mxu0 %v1540
    %1542 = vmatprep.subr.mxu0 0.0
    %v1543 = vand.u32 %v1320, 4294901760
    %v1544 = vsub.f32 %v1320, %v1543
    %1545 = vmatpush1.msra.mxu0 %v1544
    %1546 = vmatprep.subr.mxu0 0.0
    %v1547 = vand.u32 %v1319, 4294901760
    %v1548 = vsub.f32 %v1319, %v1547
    %1549 = vmatpush1.msra.mxu0 %v1548
    %1550 = vmatprep.subr.mxu0 0.0
    %v1551 = vand.u32 %v1318, 4294901760
    %v1552 = vsub.f32 %v1318, %v1551
    %1553 = vmatpush1.msra.mxu0 %v1552
    %1554 = vmatprep.subr.mxu0 0.0
    %v1555 = vand.u32 %v1317, 4294901760
    %v1556 = vsub.f32 %v1317, %v1555
    %1557 = vmatpush1.msra.mxu0 %v1556
    %1558 = vmatprep.subr.mxu0 0.0
    %1559 = vmatpush2.msra.mxu0 0.0
    %1560 = vmatprep.subr.mxu0 0.0
    %1561 = vmatpush2.msra.mxu0 0.0
    %1562 = vmatprep.subr.mxu0 0.0
    %1563 = vmatpush2.msra.mxu0 0.0
    %1564 = vmatprep.subr.mxu0 0.0
    %1565 = vmatpush2.msra.mxu0 0.0
    %1566 = vmatprep.subr.mxu0 0.0
    %1567 = vmatpush2.msra.mxu0 0.0
    %1568 = vmatprep.subr.mxu0 0.0
    %1569 = vmatpush2.msra.mxu0 0.0
    %1570 = vmatprep.subr.mxu0 0.0
    %1571 = vmatpush2.msra.mxu0 0.0
    %1572 = vmatprep.subr.mxu0 0.0
    %1573 = vmatpush2.msra.mxu0 0.0
    %1574 = vmatprep.subr.mxu0 0.0
    %1575 = vmatpush2.msra.mxu0 0.0
    %1576 = vmatprep.subr.mxu0 0.0
    %1577 = vmatpush2.msra.mxu0 0.0
    %1578 = vmatprep.subr.mxu0 0.0
    %1579 = vmatpush2.msra.mxu0 0.0
    %1580 = vmatprep.subr.mxu0 0.0
    %1581 = vmatpush2.msra.mxu0 0.0
    %1582 = vmatprep.subr.mxu0 0.0
    %1583 = vmatpush2.msra.mxu0 0.0
    %1584 = vmatprep.subr.mxu0 0.0
    %1585 = vmatpush2.msra.mxu0 0.0
    %1586 = vmatprep.subr.mxu0 0.0
    %1587 = vmatpush2.msra.mxu0 0.0
    %1588 = vmatprep.subr.mxu0 0.0
    %1589 = vmatpush2.msra.mxu0 0.0
    %1590 = vmatprep.mubr.f32.mxu0 0.0
    %v1591 = vand.u32 %v1330, 4294901760
    %v1592 = vsub.f32 %v1330, %v1591
    %1593 = vmatmul.mubr.f32.gmra.mxu0 %v1592
    %v1594 = vpop.f32.mrf.mxu0
    %v1595 = vadd.f32 %v1511, %v1594
    %v1596 = vpop.f32.mrf.mxu0
    %1597 = vdwg.mxu0
    %1598 = vmatprep.subr.mxu0 0.0
    %1599 = vmatpush1.msra.mxu0 0.0
    %1600 = vmatprep.subr.mxu0 0.0
    %1601 = vmatpush1.msra.mxu0 0.0
    %1602 = vmatprep.subr.mxu0 0.0
    %1603 = vmatpush1.msra.mxu0 0.0
    %1604 = vmatprep.subr.mxu0 0.0
    %1605 = vmatpush1.msra.mxu0 0.0
    %1606 = vmatprep.subr.mxu0 0.0
    %1607 = vmatpush1.msra.mxu0 0.0
    %1608 = vmatprep.subr.mxu0 0.0
    %1609 = vmatpush1.msra.mxu0 0.0
    %1610 = vmatprep.subr.mxu0 0.0
    %1611 = vmatpush1.msra.mxu0 0.0
    %1612 = vmatprep.subr.mxu0 0.0
    %1613 = vmatpush1.msra.mxu0 0.0
    %1614 = vmatprep.subr.mxu0 0.0
    %1615 = vmatpush1.msra.mxu0 0.0
    %1616 = vmatprep.subr.mxu0 0.0
    %1617 = vmatpush1.msra.mxu0 0.0
    %1618 = vmatprep.subr.mxu0 0.0
    %v1619 = vand.u32 %v1322, 4294901760
    %1620 = vmatpush1.msra.mxu0 %v1619
    %1621 = vmatprep.subr.mxu0 0.0
    %v1622 = vand.u32 %v1321, 4294901760
    %1623 = vmatpush1.msra.mxu0 %v1622
    %1624 = vmatprep.subr.mxu0 0.0
    %v1625 = vand.u32 %v1320, 4294901760
    %1626 = vmatpush1.msra.mxu0 %v1625
    %1627 = vmatprep.subr.mxu0 0.0
    %v1628 = vand.u32 %v1319, 4294901760
    %1629 = vmatpush1.msra.mxu0 %v1628
    %1630 = vmatprep.subr.mxu0 0.0
    %v1631 = vand.u32 %v1318, 4294901760
    %1632 = vmatpush1.msra.mxu0 %v1631
    %1633 = vmatprep.subr.mxu0 0.0
    %v1634 = vand.u32 %v1317, 4294901760
    %1635 = vmatpush1.msra.mxu0 %v1634
    %1636 = vmatprep.subr.mxu0 0.0
    %1637 = vmatpush2.msra.mxu0 0.0
    %1638 = vmatprep.subr.mxu0 0.0
    %1639 = vmatpush2.msra.mxu0 0.0
    %1640 = vmatprep.subr.mxu0 0.0
    %1641 = vmatpush2.msra.mxu0 0.0
    %1642 = vmatprep.subr.mxu0 0.0
    %1643 = vmatpush2.msra.mxu0 0.0
    %1644 = vmatprep.subr.mxu0 0.0
    %1645 = vmatpush2.msra.mxu0 0.0
    %1646 = vmatprep.subr.mxu0 0.0
    %1647 = vmatpush2.msra.mxu0 0.0
    %1648 = vmatprep.subr.mxu0 0.0
    %1649 = vmatpush2.msra.mxu0 0.0
    %1650 = vmatprep.subr.mxu0 0.0
    %1651 = vmatpush2.msra.mxu0 0.0
    %1652 = vmatprep.subr.mxu0 0.0
    %1653 = vmatpush2.msra.mxu0 0.0
    %1654 = vmatprep.subr.mxu0 0.0
    %1655 = vmatpush2.msra.mxu0 0.0
    %1656 = vmatprep.subr.mxu0 0.0
    %1657 = vmatpush2.msra.mxu0 0.0
    %1658 = vmatprep.subr.mxu0 0.0
    %1659 = vmatpush2.msra.mxu0 0.0
    %1660 = vmatprep.subr.mxu0 0.0
    %1661 = vmatpush2.msra.mxu0 0.0
    %1662 = vmatprep.subr.mxu0 0.0
    %1663 = vmatpush2.msra.mxu0 0.0
    %1664 = vmatprep.subr.mxu0 0.0
    %1665 = vmatpush2.msra.mxu0 0.0
    %1666 = vmatprep.subr.mxu0 0.0
    %1667 = vmatpush2.msra.mxu0 0.0
    %1668 = vmatprep.mubr.f32.mxu0 0.0
    %v1669 = vand.u32 %v1330, 4294901760
    %v1670 = vsub.f32 %v1330, %v1669
    %v1671 = vand.u32 %v1670, 4294901760
    %1672 = vmatmul.mubr.f32.gmra.mxu0 %v1671
    %v1673 = vpop.f32.mrf.mxu0
    %v1674 = vadd.f32 %v1595, %v1673
    %v1675 = vpop.f32.mrf.mxu0
    %1676 = vdwg.mxu0
    %1677 = vmatprep.subr.mxu0 0.0
    %1678 = vmatpush1.msra.mxu0 0.0
    %1679 = vmatprep.subr.mxu0 0.0
    %1680 = vmatpush1.msra.mxu0 0.0
    %1681 = vmatprep.subr.mxu0 0.0
    %1682 = vmatpush1.msra.mxu0 0.0
    %1683 = vmatprep.subr.mxu0 0.0
    %1684 = vmatpush1.msra.mxu0 0.0
    %1685 = vmatprep.subr.mxu0 0.0
    %1686 = vmatpush1.msra.mxu0 0.0
    %1687 = vmatprep.subr.mxu0 0.0
    %1688 = vmatpush1.msra.mxu0 0.0
    %1689 = vmatprep.subr.mxu0 0.0
    %1690 = vmatpush1.msra.mxu0 0.0
    %1691 = vmatprep.subr.mxu0 0.0
    %1692 = vmatpush1.msra.mxu0 0.0
    %1693 = vmatprep.subr.mxu0 0.0
    %1694 = vmatpush1.msra.mxu0 0.0
    %1695 = vmatprep.subr.mxu0 0.0
    %1696 = vmatpush1.msra.mxu0 0.0
    %1697 = vmatprep.subr.mxu0 0.0
    %v1698 = vand.u32 %v1322, 4294901760
    %v1699 = vsub.f32 %v1322, %v1698
    %v1700 = vand.u32 %v1699, 4294901760
    %1701 = vmatpush1.msra.mxu0 %v1700
    %1702 = vmatprep.subr.mxu0 0.0
    %v1703 = vand.u32 %v1321, 4294901760
    %v1704 = vsub.f32 %v1321, %v1703
    %v1705 = vand.u32 %v1704, 4294901760
    %1706 = vmatpush1.msra.mxu0 %v1705
    %1707 = vmatprep.subr.mxu0 0.0
    %v1708 = vand.u32 %v1320, 4294901760
    %v1709 = vsub.f32 %v1320, %v1708
    %v1710 = vand.u32 %v1709, 4294901760
    %1711 = vmatpush1.msra.mxu0 %v1710
    %1712 = vmatprep.subr.mxu0 0.0
    %v1713 = vand.u32 %v1319, 4294901760
    %v1714 = vsub.f32 %v1319, %v1713
    %v1715 = vand.u32 %v1714, 4294901760
    %1716 = vmatpush1.msra.mxu0 %v1715
    %1717 = vmatprep.subr.mxu0 0.0
    %v1718 = vand.u32 %v1318, 4294901760
    %v1719 = vsub.f32 %v1318, %v1718
    %v1720 = vand.u32 %v1719, 4294901760
    %1721 = vmatpush1.msra.mxu0 %v1720
    %1722 = vmatprep.subr.mxu0 0.0
    %v1723 = vand.u32 %v1317, 4294901760
    %v1724 = vsub.f32 %v1317, %v1723
    %v1725 = vand.u32 %v1724, 4294901760
    %1726 = vmatpush1.msra.mxu0 %v1725
    %1727 = vmatprep.subr.mxu0 0.0
    %1728 = vmatpush2.msra.mxu0 0.0
    %1729 = vmatprep.subr.mxu0 0.0
    %1730 = vmatpush2.msra.mxu0 0.0
    %1731 = vmatprep.subr.mxu0 0.0
    %1732 = vmatpush2.msra.mxu0 0.0
    %1733 = vmatprep.subr.mxu0 0.0
    %1734 = vmatpush2.msra.mxu0 0.0
    %1735 = vmatprep.subr.mxu0 0.0
    %1736 = vmatpush2.msra.mxu0 0.0
    %1737 = vmatprep.subr.mxu0 0.0
    %1738 = vmatpush2.msra.mxu0 0.0
    %1739 = vmatprep.subr.mxu0 0.0
    %1740 = vmatpush2.msra.mxu0 0.0
    %1741 = vmatprep.subr.mxu0 0.0
    %1742 = vmatpush2.msra.mxu0 0.0
    %1743 = vmatprep.subr.mxu0 0.0
    %1744 = vmatpush2.msra.mxu0 0.0
    %1745 = vmatprep.subr.mxu0 0.0
    %1746 = vmatpush2.msra.mxu0 0.0
    %1747 = vmatprep.subr.mxu0 0.0
    %1748 = vmatpush2.msra.mxu0 0.0
    %1749 = vmatprep.subr.mxu0 0.0
    %1750 = vmatpush2.msra.mxu0 0.0
    %1751 = vmatprep.subr.mxu0 0.0
    %1752 = vmatpush2.msra.mxu0 0.0
    %1753 = vmatprep.subr.mxu0 0.0
    %1754 = vmatpush2.msra.mxu0 0.0
    %1755 = vmatprep.subr.mxu0 0.0
    %1756 = vmatpush2.msra.mxu0 0.0
    %1757 = vmatprep.subr.mxu0 0.0
    %1758 = vmatpush2.msra.mxu0 0.0
    %1759 = vmatprep.mubr.f32.mxu0 0.0
    %v1760 = vand.u32 %v1330, 4294901760
    %1761 = vmatmul.mubr.f32.gmra.mxu0 %v1760
    %v1762 = vpop.f32.mrf.mxu0
    %v1763 = vadd.f32 %v1674, %v1762
    %v1764 = vpop.f32.mrf.mxu0
    %1765 = vdwg.mxu0
    %1766 = vmatprep.subr.mxu0 0.0
    %1767 = vmatpush1.msra.mxu0 0.0
    %1768 = vmatprep.subr.mxu0 0.0
    %1769 = vmatpush1.msra.mxu0 0.0
    %1770 = vmatprep.subr.mxu0 0.0
    %1771 = vmatpush1.msra.mxu0 0.0
    %1772 = vmatprep.subr.mxu0 0.0
    %1773 = vmatpush1.msra.mxu0 0.0
    %1774 = vmatprep.subr.mxu0 0.0
    %1775 = vmatpush1.msra.mxu0 0.0
    %1776 = vmatprep.subr.mxu0 0.0
    %1777 = vmatpush1.msra.mxu0 0.0
    %1778 = vmatprep.subr.mxu0 0.0
    %1779 = vmatpush1.msra.mxu0 0.0
    %1780 = vmatprep.subr.mxu0 0.0
    %1781 = vmatpush1.msra.mxu0 0.0
    %1782 = vmatprep.subr.mxu0 0.0
    %1783 = vmatpush1.msra.mxu0 0.0
    %1784 = vmatprep.subr.mxu0 0.0
    %1785 = vmatpush1.msra.mxu0 0.0
    %1786 = vmatprep.subr.mxu0 0.0
    %v1787 = vand.u32 %v1322, 4294901760
    %1788 = vmatpush1.msra.mxu0 %v1787
    %1789 = vmatprep.subr.mxu0 0.0
    %v1790 = vand.u32 %v1321, 4294901760
    %1791 = vmatpush1.msra.mxu0 %v1790
    %1792 = vmatprep.subr.mxu0 0.0
    %v1793 = vand.u32 %v1320, 4294901760
    %1794 = vmatpush1.msra.mxu0 %v1793
    %1795 = vmatprep.subr.mxu0 0.0
    %v1796 = vand.u32 %v1319, 4294901760
    %1797 = vmatpush1.msra.mxu0 %v1796
    %1798 = vmatprep.subr.mxu0 0.0
    %v1799 = vand.u32 %v1318, 4294901760
    %1800 = vmatpush1.msra.mxu0 %v1799
    %1801 = vmatprep.subr.mxu0 0.0
    %v1802 = vand.u32 %v1317, 4294901760
    %1803 = vmatpush1.msra.mxu0 %v1802
    %1804 = vmatprep.subr.mxu0 0.0
    %1805 = vmatpush2.msra.mxu0 0.0
    %1806 = vmatprep.subr.mxu0 0.0
    %1807 = vmatpush2.msra.mxu0 0.0
    %1808 = vmatprep.subr.mxu0 0.0
    %1809 = vmatpush2.msra.mxu0 0.0
    %1810 = vmatprep.subr.mxu0 0.0
    %1811 = vmatpush2.msra.mxu0 0.0
    %1812 = vmatprep.subr.mxu0 0.0
    %1813 = vmatpush2.msra.mxu0 0.0
    %1814 = vmatprep.subr.mxu0 0.0
    %1815 = vmatpush2.msra.mxu0 0.0
    %1816 = vmatprep.subr.mxu0 0.0
    %1817 = vmatpush2.msra.mxu0 0.0
    %1818 = vmatprep.subr.mxu0 0.0
    %1819 = vmatpush2.msra.mxu0 0.0
    %1820 = vmatprep.subr.mxu0 0.0
    %1821 = vmatpush2.msra.mxu0 0.0
    %1822 = vmatprep.subr.mxu0 0.0
    %1823 = vmatpush2.msra.mxu0 0.0
    %1824 = vmatprep.subr.mxu0 0.0
    %1825 = vmatpush2.msra.mxu0 0.0
    %1826 = vmatprep.subr.mxu0 0.0
    %1827 = vmatpush2.msra.mxu0 0.0
    %1828 = vmatprep.subr.mxu0 0.0
    %1829 = vmatpush2.msra.mxu0 0.0
    %1830 = vmatprep.subr.mxu0 0.0
    %1831 = vmatpush2.msra.mxu0 0.0
    %1832 = vmatprep.subr.mxu0 0.0
    %1833 = vmatpush2.msra.mxu0 0.0
    %1834 = vmatprep.subr.mxu0 0.0
    %1835 = vmatpush2.msra.mxu0 0.0
    %1836 = vmatprep.mubr.f32.mxu0 0.0
    %v1837 = vand.u32 %v1330, 4294901760
    %1838 = vmatmul.mubr.f32.gmra.mxu0 %v1837
    %v1839 = vpop.f32.mrf.mxu0
    %v1840 = vadd.f32 %v1763, %v1839
    %v1841 = vpop.f32.mrf.mxu0
    %1842 = vdwg.mxu0
    %s1843 = sld [smem:[#allocation2]]
    %s1844 = sld [smem:[#allocation2 + $0x1]]
    %s1845 = sld [smem:[#allocation2 + $0x2]]
    %s1846 = sld [smem:[#allocation2 + $0x3]]
    %s1847 = sld [smem:[#allocation2 + $0x4]]
    %s1848 = sld [smem:[#allocation2 + $0x5]]
    %s1849 = sld [smem:[#allocation2 + $0x6]]
    %s1850 = sld [smem:[#allocation2 + $0x7]]
    %s1851 = sld [smem:[#allocation2 + $0x8]]
    %v1852 = vstv %s1843
    %v1853 = vmul.f32 %v1840, %v1852
    %v1854 = vstv %s1846
    %v1855 = vadd.f32 %v1853, %v1854
    %v1856 = vstv %s1844
    %v1857 = vmul.f32 %v1840, %v1856
    %v1858 = vstv %s1847
    %v1859 = vadd.f32 %v1857, %v1858
    %v1860 = vstv %s1845
    %v1861 = vmul.f32 %v1840, %v1860
    %v1862 = vstv %s1848
    %v1863 = vadd.f32 %v1861, %v1862
    %vm1864 = vcmask 254976
    %v1865 = vsel %vm1864, %v1859, -inf
    %1866 = vmax.xlane.f32.xlu0 %v1865
    %v1867 = vpop.xlane.xlu0 %1866
    %v1868 = vsel %vm1864, %v1859, inf
    %1869 = vmin.xlane.f32.xlu0 %v1868
    %v1870 = vpop.xlane.xlu0 %1869
    %vm1871 = vcmp.ge.f32.partialorder %v1855, 0.0
    %v1872 = vmul.f32 %v1855, %v1867
    %v1873 = vmul.f32 %v1855, %v1870
    %v1874 = vsel %vm1871, %v1872, %v1873
    %v1875 = vlaneseq
    %v1876 = vshrl.u32 %v1875, 7
    %v1877 = vsub.s32 0, %v1876
    %v1878 = vrot.slane %v1855, %v1877
    %1880 = vbcast.lane.b32.xlu0 %v1878, 256
    %v1881 = vpop.permute.xlu0 %1880
    %s1883 = sor.u32 256, 8
    %1884 = vbcast.lane.b32.xlu0 %v1878, %s1883
    %v1885 = vpop.permute.xlu0 %1884
    %s1887 = sor.u32 256, 16
    %1888 = vbcast.lane.b32.xlu0 %v1878, %s1887
    %v1889 = vpop.permute.xlu0 %1888
    %s1891 = sor.u32 256, 24
    %1892 = vbcast.lane.b32.xlu0 %v1878, %s1891
    %v1893 = vpop.permute.xlu0 %1892
    %v1894 = vlaneseq
    %v1895 = vshrl.u32 %v1894, 7
    %v1896 = vsub.s32 1, %v1895
    %v1897 = vrot.slane %v1855, %v1896
    %1899 = vbcast.lane.b32.xlu0 %v1897, 256
    %v1900 = vpop.permute.xlu0 %1899
    %s1902 = sor.u32 256, 8
    %1903 = vbcast.lane.b32.xlu0 %v1897, %s1902
    %v1904 = vpop.permute.xlu0 %1903
    %s1906 = sor.u32 256, 16
    %1907 = vbcast.lane.b32.xlu0 %v1897, %s1906
    %v1908 = vpop.permute.xlu0 %1907
    %s1910 = sor.u32 256, 24
    %1911 = vbcast.lane.b32.xlu0 %v1897, %s1910
    %v1912 = vpop.permute.xlu0 %1911
    %v1915 = vunpack.c.l.s4 1966171168
    %v1916 = vunpack.c.0.s8 %v1915
    %v1917 = vlaneseq
    %v1918 = vshrl.u32 %v1917, 7
    %v1919 = vsub.s32 %v1916, %v1918
    %v1920 = vrot.slane %v1859, %v1919
    %v1921 = vcombine.high %v1920, %v1920
    %v1923 = vunpack.c.l.s4 1966171168
    %v1924 = vunpack.c.0.s8 %v1923
    %v1925 = vlaneseq
    %v1926 = vshrl.u32 %v1925, 7
    %v1927 = vsub.s32 %v1924, %v1926
    %v1928 = vrot.slane %v1920, %v1927
    %v1930 = vunpack.c.l.s4 1966171168
    %v1931 = vunpack.c.0.s8 %v1930
    %v1932 = vlaneseq
    %v1933 = vshrl.u32 %v1932, 7
    %v1934 = vsub.s32 %v1931, %v1933
    %v1935 = vrot.slane %v1921, %v1934
    %v1936 = vlaneseq
    %v1937 = vshrl.u32 %v1936, 7
    %v1938 = vsub.s32 0, %v1937
    %v1939 = vrot.slane %v1928, %v1938
    %v1940 = vlaneseq
    %v1941 = vshrl.u32 %v1940, 7
    %v1942 = vsub.s32 0, %v1941
    %v1943 = vrot.slane %v1935, %v1942
    %v1946 = vmul.f32 %v1881, %v1939
    %v1947 = vmul.f32 %v1885, %v1939
    %v1948 = vmul.f32 %v1889, %v1939
    %v1949 = vmul.f32 %v1893, %v1939
    %v1950 = vmul.f32 %v1900, %v1943
    %v1951 = vmul.f32 %v1904, %v1943
    %v1952 = vmul.f32 %v1908, %v1943
    %v1953 = vmul.f32 %v1912, %v1943
    %v1954 = vlaneseq
    %v1955 = vshrl.u32 %v1954, 7
    %v1956 = vsub.s32 0, %v1955
    %v1957 = vrot.slane %v1874, %v1956
    %1959 = vbcast.lane.b32.xlu0 %v1957, 256
    %v1960 = vpop.permute.xlu0 %1959
    %s1962 = sor.u32 256, 8
    %1963 = vbcast.lane.b32.xlu0 %v1957, %s1962
    %v1964 = vpop.permute.xlu0 %1963
    %s1966 = sor.u32 256, 16
    %1967 = vbcast.lane.b32.xlu0 %v1957, %s1966
    %v1968 = vpop.permute.xlu0 %1967
    %s1970 = sor.u32 256, 24
    %1971 = vbcast.lane.b32.xlu0 %v1957, %s1970
    %v1972 = vpop.permute.xlu0 %1971
    %v1973 = vlaneseq
    %v1974 = vshrl.u32 %v1973, 7
    %v1975 = vsub.s32 1, %v1974
    %v1976 = vrot.slane %v1874, %v1975
    %1978 = vbcast.lane.b32.xlu0 %v1976, 256
    %v1979 = vpop.permute.xlu0 %1978
    %s1981 = sor.u32 256, 8
    %1982 = vbcast.lane.b32.xlu0 %v1976, %s1981
    %v1983 = vpop.permute.xlu0 %1982
    %s1985 = sor.u32 256, 16
    %1986 = vbcast.lane.b32.xlu0 %v1976, %s1985
    %v1987 = vpop.permute.xlu0 %1986
    %s1989 = sor.u32 256, 24
    %1990 = vbcast.lane.b32.xlu0 %v1976, %s1989
    %v1991 = vpop.permute.xlu0 %1990
    %v1992 = vsub.f32 %v1946, %v1960
    %v1993 = vsub.f32 %v1947, %v1964
    %v1994 = vsub.f32 %v1948, %v1968
    %v1995 = vsub.f32 %v1949, %v1972
    %v1996 = vsub.f32 %v1950, %v1979
    %v1997 = vsub.f32 %v1951, %v1983
    %v1998 = vsub.f32 %v1952, %v1987
    %v1999 = vsub.f32 %v1953, %v1991
    %v2000 = vmul.f32 %v1992, 1.442695
    %v2001 = vpow.pop %v2000
    %v2002 = vmul.f32 %v1993, 1.442695
    %v2003 = vpow.pop %v2002
    %v2004 = vmul.f32 %v1994, 1.442695
    %v2005 = vpow.pop %v2004
    %v2006 = vmul.f32 %v1995, 1.442695
    %v2007 = vpow.pop %v2006
    %v2008 = vmul.f32 %v1996, 1.442695
    %v2009 = vpow.pop %v2008
    %v2010 = vmul.f32 %v1997, 1.442695
    %v2011 = vpow.pop %v2010
    %v2012 = vmul.f32 %v1998, 1.442695
    %v2013 = vpow.pop %v2012
    %v2014 = vmul.f32 %v1999, 1.442695
    %v2015 = vpow.pop %v2014
    %v2016 = vsel %vm1315, %v2001, 0.0
    %2017 = vadd.xlane.f32.xlu0 %v2016
    %v2018 = vpop.xlane.xlu0 %2017
    %v2019 = vsel %vm1315, %v2003, 0.0
    %2020 = vadd.xlane.f32.xlu0 %v2019
    %v2021 = vpop.xlane.xlu0 %2020
    %v2022 = vsel %vm1315, %v2005, 0.0
    %2023 = vadd.xlane.f32.xlu0 %v2022
    %v2024 = vpop.xlane.xlu0 %2023
    %v2025 = vsel %vm1315, %v2007, 0.0
    %2026 = vadd.xlane.f32.xlu0 %v2025
    %v2027 = vpop.xlane.xlu0 %2026
    %v2028 = vsel %vm1315, %v2009, 0.0
    %2029 = vadd.xlane.f32.xlu0 %v2028
    %v2030 = vpop.xlane.xlu0 %2029
    %v2031 = vsel %vm1315, %v2011, 0.0
    %2032 = vadd.xlane.f32.xlu0 %v2031
    %v2033 = vpop.xlane.xlu0 %2032
    %v2034 = vsel %vm1315, %v2013, 0.0
    %2035 = vadd.xlane.f32.xlu0 %v2034
    %v2036 = vpop.xlane.xlu0 %2035
    %v2037 = vsel %vm1315, %v2015, 0.0
    %2038 = vadd.xlane.f32.xlu0 %v2037
    %v2039 = vpop.xlane.xlu0 %2038
    %v2042 = vunpack.c.l.s4 1966171168
    %v2043 = vunpack.c.0.s8 %v2042
    %v2044 = vlaneseq
    %v2045 = vshrl.u32 %v2044, 7
    %v2046 = vsub.s32 %v2043, %v2045
    %v2047 = vrot.slane %v1863, %v2046
    %v2048 = vcombine.high %v2047, %v2047
    %v2050 = vunpack.c.l.s4 1966171168
    %v2051 = vunpack.c.0.s8 %v2050
    %v2052 = vlaneseq
    %v2053 = vshrl.u32 %v2052, 7
    %v2054 = vsub.s32 %v2051, %v2053
    %v2055 = vrot.slane %v2047, %v2054
    %v2057 = vunpack.c.l.s4 1966171168
    %v2058 = vunpack.c.0.s8 %v2057
    %v2059 = vlaneseq
    %v2060 = vshrl.u32 %v2059, 7
    %v2061 = vsub.s32 %v2058, %v2060
    %v2062 = vrot.slane %v2048, %v2061
    %v2063 = vlaneseq
    %v2064 = vshrl.u32 %v2063, 7
    %v2065 = vsub.s32 0, %v2064
    %v2066 = vrot.slane %v2055, %v2065
    %v2067 = vlaneseq
    %v2068 = vshrl.u32 %v2067, 7
    %v2069 = vsub.s32 0, %v2068
    %v2070 = vrot.slane %v2062, %v2069
    %v2073 = vmul.f32 %v2001, %v2066
    %v2074 = vmul.f32 %v2003, %v2066
    %v2075 = vmul.f32 %v2005, %v2066
    %v2076 = vmul.f32 %v2007, %v2066
    %v2077 = vmul.f32 %v2009, %v2070
    %v2078 = vmul.f32 %v2011, %v2070
    %v2079 = vmul.f32 %v2013, %v2070
    %v2080 = vmul.f32 %v2015, %v2070
    %v2081 = vsel %vm1315, %v2073, 0.0
    %2082 = vadd.xlane.f32.xlu0 %v2081
    %v2083 = vpop.xlane.xlu0 %2082
    %v2084 = vsel %vm1315, %v2074, 0.0
    %2085 = vadd.xlane.f32.xlu0 %v2084
    %v2086 = vpop.xlane.xlu0 %2085
    %v2087 = vsel %vm1315, %v2075, 0.0
    %2088 = vadd.xlane.f32.xlu0 %v2087
    %v2089 = vpop.xlane.xlu0 %2088
    %v2090 = vsel %vm1315, %v2076, 0.0
    %2091 = vadd.xlane.f32.xlu0 %v2090
    %v2092 = vpop.xlane.xlu0 %2091
    %v2093 = vsel %vm1315, %v2077, 0.0
    %2094 = vadd.xlane.f32.xlu0 %v2093
    %v2095 = vpop.xlane.xlu0 %2094
    %v2096 = vsel %vm1315, %v2078, 0.0
    %2097 = vadd.xlane.f32.xlu0 %v2096
    %v2098 = vpop.xlane.xlu0 %2097
    %v2099 = vsel %vm1315, %v2079, 0.0
    %2100 = vadd.xlane.f32.xlu0 %v2099
    %v2101 = vpop.xlane.xlu0 %2100
    %v2102 = vsel %vm1315, %v2080, 0.0
    %2103 = vadd.xlane.f32.xlu0 %v2102
    %v2104 = vpop.xlane.xlu0 %2103
    %v2105 = vrcp.pop %v2018
    %v2106 = vmul.f32 %v2083, %v2105
    %v2107 = vrcp.pop %v2021
    %v2108 = vmul.f32 %v2086, %v2107
    %v2109 = vrcp.pop %v2024
    %v2110 = vmul.f32 %v2089, %v2109
    %v2111 = vrcp.pop %v2027
    %v2112 = vmul.f32 %v2092, %v2111
    %v2113 = vrcp.pop %v2030
    %v2114 = vmul.f32 %v2095, %v2113
    %v2115 = vrcp.pop %v2033
    %v2116 = vmul.f32 %v2098, %v2115
    %v2117 = vrcp.pop %v2036
    %v2118 = vmul.f32 %v2101, %v2117
    %v2119 = vrcp.pop %v2039
    %v2120 = vmul.f32 %v2104, %v2119
    %v2121 = vstv %s1849
    %v2122 = vmul.f32 %v2106, %v2121
    %v2123 = vmul.f32 %v2108, %v2121
    %v2124 = vmul.f32 %v2110, %v2121
    %v2125 = vmul.f32 %v2112, %v2121
    %v2126 = vmul.f32 %v2114, %v2121
    %v2127 = vmul.f32 %v2116, %v2121
    %v2128 = vmul.f32 %v2118, %v2121
    %v2129 = vmul.f32 %v2120, %v2121
    %v2130 = vstv %s1850
    %v2131 = vadd.f32 %v2122, %v2130
    %v2132 = vadd.f32 %v2123, %v2130
    %v2133 = vadd.f32 %v2124, %v2130
    %v2134 = vadd.f32 %v2125, %v2130
    %v2135 = vadd.f32 %v2126, %v2130
    %v2136 = vadd.f32 %v2127, %v2130
    %v2137 = vadd.f32 %v2128, %v2130
    %v2138 = vadd.f32 %v2129, %v2130
    %v2139 = vmul.f32 %v2131, 2.0
    %v2140 = vmul.f32 %v2132, 2.0
    %v2141 = vmul.f32 %v2133, 2.0
    %v2142 = vmul.f32 %v2134, 2.0
    %v2143 = vmul.f32 %v2135, 2.0
    %v2144 = vmul.f32 %v2136, 2.0
    %v2145 = vmul.f32 %v2137, 2.0
    %v2146 = vmul.f32 %v2138, 2.0
    %v2155 = vlaneseq
    %v2156 = vand.u32 %v2155, 127
    %v2157 = vlaneseq
    %v2158 = vshrl.u32 %v2157, 7
    %v2159 = vsub.s32 %v2156, %v2158
    %v2160 = vrot.slane %v2139, %v2159
    %v2161 = vadd.s32 %v2156, 4294967288
    %v2162 = vlaneseq
    %v2163 = vshrl.u32 %v2162, 7
    %v2164 = vsub.s32 %v2161, %v2163
    %v2165 = vrot.slane %v2140, %v2164
    %vm2166 = vcmask 130112
    %v2167 = vsel %vm2166, %v2165, %v2160
    %v2168 = vadd.s32 %v2156, 4294967280
    %v2169 = vlaneseq
    %v2170 = vshrl.u32 %v2169, 7
    %v2171 = vsub.s32 %v2168, %v2170
    %v2172 = vrot.slane %v2141, %v2171
    %vm2173 = vcmask 195712
    %v2174 = vsel %vm2173, %v2172, %v2167
    %v2175 = vadd.s32 %v2156, 4294967272
    %v2176 = vlaneseq
    %v2177 = vshrl.u32 %v2176, 7
    %v2178 = vsub.s32 %v2175, %v2177
    %v2179 = vrot.slane %v2142, %v2178
    %vm2180 = vcmask 261312
    %v2181 = vsel %vm2180, %v2179, %v2174
    %v2182 = vlaneseq
    %v2183 = vshrl.u32 %v2182, 7
    %v2184 = vsub.s32 %v2156, %v2183
    %v2185 = vrot.slane %v2143, %v2184
    %v2186 = vlaneseq
    %v2187 = vshrl.u32 %v2186, 7
    %v2188 = vsub.s32 %v2161, %v2187
    %v2189 = vrot.slane %v2144, %v2188
    %v2190 = vsel %vm2166, %v2189, %v2185
    %v2191 = vlaneseq
    %v2192 = vshrl.u32 %v2191, 7
    %v2193 = vsub.s32 %v2168, %v2192
    %v2194 = vrot.slane %v2145, %v2193
    %v2195 = vsel %vm2173, %v2194, %v2190
    %v2196 = vlaneseq
    %v2197 = vshrl.u32 %v2196, 7
    %v2198 = vsub.s32 %v2175, %v2197
    %v2199 = vrot.slane %v2146, %v2198
    %v2200 = vsel %vm2180, %v2199, %v2195
    %vm2201 = vcmask 1041409
    %v2202 = vsel %vm2201, %v2200, %v2181
    %v2204 = vadd.f32 %v1840, %v2202
    %v2205 = vld [vmem:[#allocation6 + $0x130] sm:$0xf]
    %v2206 = vsel %vm1864, %v2204, 0.0
    %2207 = vadd.xlane.f32.xlu0 %v2206
    %v2208 = vpop.xlane.xlu0 %2207
    %v2209 = vrcp.pop 32.0
    %v2210 = vmul.f32 %v2208, %v2209
    %v2211 = vsub.f32 %v2204, %v2210
    %v2212 = vmul.f32 %v2211, %v2211
    %v2213 = vsel %vm1864, %v2212, 0.0
    %2214 = vadd.xlane.f32.xlu0 %v2213
    %v2215 = vpop.xlane.xlu0 %2214
    %v2216 = vmul.f32 %v2215, %v2209
    %v2217 = vadd.f32 %v2216, 1e-05
    %v2218 = vrsqrt.pop %v2217
    %v2219 = vmul.f32 %v2211, %v2218
    %v2220 = vlaneseq
    %v2221 = vshrl.u32 %v2220, 7
    %v2222 = vsub.s32 0, %v2221
    %v2223 = vrot.slane %v2205, %v2222
    %v2224 = vmul.f32 %v2219, %v2223
    %v2225 = vlaneseq
    %v2226 = vshrl.u32 %v2225, 7
    %v2227 = vsub.s32 1, %v2226
    %v2228 = vrot.slane %v2205, %v2227
    %v2229 = vadd.f32 %v2224, %v2228
    %2231 = vrot.lane.b32.xlu0 %v2229, 1
    %v2232 = vpop.permute.xlu0 %2231
    %vm2234 = vcmask 7168
    %v2235 = vsel %vm2234, 0.0, %v2232
    %2236 = vrot.lane.b32.xlu0 %v2229, 127
    %v2237 = vpop.permute.xlu0 %2236
    %vm2239 = vcmask 252928
    %v2240 = vsel %vm2239, %v2237, 0.0
    %v2241 = vrot.slane %v2229, 7
    %v2244 = vrot.slane %v2240, 6
    %vm2246 = vcmask 1040384
    %v2247 = vsel %vm2246, %v2235, %v2241
    %vm2248 = vcmask 1041408
    %v2249 = vsel %vm2248, %v2247, %v2244
    %vm2250 = vcmask 1042432
    %v2251 = vsel %vm2250, %v2249, 1.0
    %v2253 = vrot.slane %v2235, 1
    %v2255 = vrot.slane %v2240, 7
    %v2257 = vsel %vm2246, %v2253, %v2229
    %v2258 = vsel %vm2248, %v2257, %v2255
    %v2259 = vsel %vm2250, %v2258, 1.0
    %2261 = vrot.lane.b32.xlu0 %v2259, 32
    %v2262 = vpop.permute.xlu0 %2261
    %v2264 = vsel %vm1315, %v2251, %v2262
    %v2265 = vld [vmem:[#allocation6 + $0xa0] sm:$0xff]
    %v2266 = vld [vmem:[#allocation6 + $0xa8] sm:$0xff]
    %v2267 = vld [vmem:[#allocation6 + $0xb0] sm:$0xff]
    %v2268 = vld [vmem:[#allocation6 + $0xb8] sm:$0xff]
    %v2269 = vld [vmem:[#allocation6 + $0xc0] sm:$0xff]
    %v2270 = vld [vmem:[#allocation6 + $0xc8] sm:$0xff]
    %v2271 = vld [vmem:[#allocation6 + $0xd0] sm:$0xff]
    %v2272 = vld [vmem:[#allocation6 + $0xd8] sm:$0xff]
    %vm2273 = vcmask 31744
    %v2275 = vsel %vm2273, %v2265, 0
    %v2278 = vsel %vm2273, %v2266, 0
    %v2281 = vsel %vm2273, %v2267, 0
    %v2284 = vsel %vm2273, %v2268, 0
    %v2287 = vsel %vm2273, %v2269, 0
    %v2290 = vsel %vm2273, %v2270, 0
    %v2293 = vsel %vm2273, %v2271, 0
    %v2296 = vsel %vm2273, %v2272, 0
    %vm2298 = vcmask 1043456
    %v2300 = vsel %vm2298, %v2264, 0
    %2302 = vmatprep.subr.mxu0 0.0
    %2303 = vmatpush1.msra.mxu0 0.0
    %2304 = vmatprep.subr.mxu0 0.0
    %2305 = vmatpush1.msra.mxu0 0.0
    %2306 = vmatprep.subr.mxu0 0.0
    %2307 = vmatpush1.msra.mxu0 0.0
    %2308 = vmatprep.subr.mxu0 0.0
    %2309 = vmatpush1.msra.mxu0 0.0
    %2310 = vmatprep.subr.mxu0 0.0
    %2311 = vmatpush1.msra.mxu0 0.0
    %2312 = vmatprep.subr.mxu0 0.0
    %2313 = vmatpush1.msra.mxu0 0.0
    %2314 = vmatprep.subr.mxu0 0.0
    %2315 = vmatpush1.msra.mxu0 0.0
    %2316 = vmatprep.subr.mxu0 0.0
    %2317 = vmatpush1.msra.mxu0 0.0
    %2318 = vmatprep.subr.mxu0 0.0
    %2319 = vmatpush1.msra.mxu0 0.0
    %2320 = vmatprep.subr.mxu0 0.0
    %2321 = vmatpush1.msra.mxu0 0.0
    %2322 = vmatprep.subr.mxu0 0.0
    %2323 = vmatpush1.msra.mxu0 0.0
    %2324 = vmatprep.subr.mxu0 0.0
    %2325 = vmatpush1.msra.mxu0 0.0
    %2326 = vmatprep.subr.mxu0 0.0
    %2327 = vmatpush1.msra.mxu0 0.0
    %2328 = vmatprep.subr.mxu0 0.0
    %2329 = vmatpush1.msra.mxu0 0.0
    %2330 = vmatprep.subr.mxu0 0.0
    %2331 = vmatpush1.msra.mxu0 0.0
    %2332 = vmatprep.subr.mxu0 0.0
    %v2333 = vand.u32 %v2300, 4294901760
    %2334 = vmatpush1.msra.mxu0 %v2333
    %2335 = vmatprep.subr.mxu0 0.0
    %2336 = vmatpush2.msra.mxu0 0.0
    %2337 = vmatprep.subr.mxu0 0.0
    %2338 = vmatpush2.msra.mxu0 0.0
    %2339 = vmatprep.subr.mxu0 0.0
    %2340 = vmatpush2.msra.mxu0 0.0
    %2341 = vmatprep.subr.mxu0 0.0
    %2342 = vmatpush2.msra.mxu0 0.0
    %2343 = vmatprep.subr.mxu0 0.0
    %2344 = vmatpush2.msra.mxu0 0.0
    %2345 = vmatprep.subr.mxu0 0.0
    %2346 = vmatpush2.msra.mxu0 0.0
    %2347 = vmatprep.subr.mxu0 0.0
    %2348 = vmatpush2.msra.mxu0 0.0
    %2349 = vmatprep.subr.mxu0 0.0
    %2350 = vmatpush2.msra.mxu0 0.0
    %2351 = vmatprep.subr.mxu0 0.0
    %2352 = vmatpush2.msra.mxu0 0.0
    %2353 = vmatprep.subr.mxu0 0.0
    %2354 = vmatpush2.msra.mxu0 0.0
    %2355 = vmatprep.subr.mxu0 0.0
    %2356 = vmatpush2.msra.mxu0 0.0
    %2357 = vmatprep.subr.mxu0 0.0
    %2358 = vmatpush2.msra.mxu0 0.0
    %2359 = vmatprep.subr.mxu0 0.0
    %2360 = vmatpush2.msra.mxu0 0.0
    %2361 = vmatprep.subr.mxu0 0.0
    %2362 = vmatpush2.msra.mxu0 0.0
    %2363 = vmatprep.subr.mxu0 0.0
    %2364 = vmatpush2.msra.mxu0 0.0
    %2365 = vmatprep.subr.mxu0 0.0
    %2366 = vmatpush2.msra.mxu0 0.0
    %2367 = vmatprep.mubr.f32.mxu0 0.0
    %v2368 = vand.u32 %v2275, 4294901760
    %v2369 = vsub.f32 %v2275, %v2368
    %v2370 = vand.u32 %v2369, 4294901760
    %v2371 = vsub.f32 %v2369, %v2370
    %v2372 = vand.u32 %v2371, 4294901760
    %2373 = vmatmul.mubr.f32.gmra.mxu0 %v2372
    %v2374 = vpop.f32.mrf.mxu0
    %v2375 = vadd.f32 0.0, %v2374
    %v2376 = vpop.f32.mrf.mxu0
    %2377 = vmatprep.mubr.f32.mxu0 0.0
    %v2378 = vand.u32 %v2278, 4294901760
    %v2379 = vsub.f32 %v2278, %v2378
    %v2380 = vand.u32 %v2379, 4294901760
    %v2381 = vsub.f32 %v2379, %v2380
    %v2382 = vand.u32 %v2381, 4294901760
    %2383 = vmatmul.mubr.f32.gmra.mxu0 %v2382
    %v2384 = vpop.f32.mrf.mxu0
    %v2385 = vadd.f32 0.0, %v2384
    %v2386 = vpop.f32.mrf.mxu0
    %2387 = vmatprep.mubr.f32.mxu0 0.0
    %v2388 = vand.u32 %v2281, 4294901760
    %v2389 = vsub.f32 %v2281, %v2388
    %v2390 = vand.u32 %v2389, 4294901760
    %v2391 = vsub.f32 %v2389, %v2390
    %v2392 = vand.u32 %v2391, 4294901760
    %2393 = vmatmul.mubr.f32.gmra.mxu0 %v2392
    %v2394 = vpop.f32.mrf.mxu0
    %v2395 = vadd.f32 0.0, %v2394
    %v2396 = vpop.f32.mrf.mxu0
    %2397 = vmatprep.mubr.f32.mxu0 0.0
    %v2398 = vand.u32 %v2284, 4294901760
    %v2399 = vsub.f32 %v2284, %v2398
    %v2400 = vand.u32 %v2399, 4294901760
    %v2401 = vsub.f32 %v2399, %v2400
    %v2402 = vand.u32 %v2401, 4294901760
    %2403 = vmatmul.mubr.f32.gmra.mxu0 %v2402
    %v2404 = vpop.f32.mrf.mxu0
    %v2405 = vadd.f32 0.0, %v2404
    %v2406 = vpop.f32.mrf.mxu0
    %2407 = vmatprep.mubr.f32.mxu0 0.0
    %v2408 = vand.u32 %v2287, 4294901760
    %v2409 = vsub.f32 %v2287, %v2408
    %v2410 = vand.u32 %v2409, 4294901760
    %v2411 = vsub.f32 %v2409, %v2410
    %v2412 = vand.u32 %v2411, 4294901760
    %2413 = vmatmul.mubr.f32.gmra.mxu0 %v2412
    %v2414 = vpop.f32.mrf.mxu0
    %v2415 = vadd.f32 0.0, %v2414
    %v2416 = vpop.f32.mrf.mxu0
    %2417 = vmatprep.mubr.f32.mxu0 0.0
    %v2418 = vand.u32 %v2290, 4294901760
    %v2419 = vsub.f32 %v2290, %v2418
    %v2420 = vand.u32 %v2419, 4294901760
    %v2421 = vsub.f32 %v2419, %v2420
    %v2422 = vand.u32 %v2421, 4294901760
    %2423 = vmatmul.mubr.f32.gmra.mxu0 %v2422
    %v2424 = vpop.f32.mrf.mxu0
    %v2425 = vadd.f32 0.0, %v2424
    %v2426 = vpop.f32.mrf.mxu0
    %2427 = vmatprep.mubr.f32.mxu0 0.0
    %v2428 = vand.u32 %v2293, 4294901760
    %v2429 = vsub.f32 %v2293, %v2428
    %v2430 = vand.u32 %v2429, 4294901760
    %v2431 = vsub.f32 %v2429, %v2430
    %v2432 = vand.u32 %v2431, 4294901760
    %2433 = vmatmul.mubr.f32.gmra.mxu0 %v2432
    %v2434 = vpop.f32.mrf.mxu0
    %v2435 = vadd.f32 0.0, %v2434
    %v2436 = vpop.f32.mrf.mxu0
    %2437 = vmatprep.mubr.f32.mxu0 0.0
    %v2438 = vand.u32 %v2296, 4294901760
    %v2439 = vsub.f32 %v2296, %v2438
    %v2440 = vand.u32 %v2439, 4294901760
    %v2441 = vsub.f32 %v2439, %v2440
    %v2442 = vand.u32 %v2441, 4294901760
    %2443 = vmatmul.mubr.f32.gmra.mxu0 %v2442
    %v2444 = vpop.f32.mrf.mxu0
    %v2445 = vadd.f32 0.0, %v2444
    %v2446 = vpop.f32.mrf.mxu0
    %2447 = vdwg.mxu0
    %2448 = vmatprep.subr.mxu0 0.0
    %2449 = vmatpush1.msra.mxu0 0.0
    %2450 = vmatprep.subr.mxu0 0.0
    %2451 = vmatpush1.msra.mxu0 0.0
    %2452 = vmatprep.subr.mxu0 0.0
    %2453 = vmatpush1.msra.mxu0 0.0
    %2454 = vmatprep.subr.mxu0 0.0
    %2455 = vmatpush1.msra.mxu0 0.0
    %2456 = vmatprep.subr.mxu0 0.0
    %2457 = vmatpush1.msra.mxu0 0.0
    %2458 = vmatprep.subr.mxu0 0.0
    %2459 = vmatpush1.msra.mxu0 0.0
    %2460 = vmatprep.subr.mxu0 0.0
    %2461 = vmatpush1.msra.mxu0 0.0
    %2462 = vmatprep.subr.mxu0 0.0
    %2463 = vmatpush1.msra.mxu0 0.0
    %2464 = vmatprep.subr.mxu0 0.0
    %2465 = vmatpush1.msra.mxu0 0.0
    %2466 = vmatprep.subr.mxu0 0.0
    %2467 = vmatpush1.msra.mxu0 0.0
    %2468 = vmatprep.subr.mxu0 0.0
    %2469 = vmatpush1.msra.mxu0 0.0
    %2470 = vmatprep.subr.mxu0 0.0
    %2471 = vmatpush1.msra.mxu0 0.0
    %2472 = vmatprep.subr.mxu0 0.0
    %2473 = vmatpush1.msra.mxu0 0.0
    %2474 = vmatprep.subr.mxu0 0.0
    %2475 = vmatpush1.msra.mxu0 0.0
    %2476 = vmatprep.subr.mxu0 0.0
    %2477 = vmatpush1.msra.mxu0 0.0
    %2478 = vmatprep.subr.mxu0 0.0
    %v2479 = vand.u32 %v2300, 4294901760
    %v2480 = vsub.f32 %v2300, %v2479
    %v2481 = vand.u32 %v2480, 4294901760
    %v2482 = vsub.f32 %v2480, %v2481
    %v2483 = vand.u32 %v2482, 4294901760
    %2484 = vmatpush1.msra.mxu0 %v2483
    %2485 = vmatprep.subr.mxu0 0.0
    %2486 = vmatpush2.msra.mxu0 0.0
    %2487 = vmatprep.subr.mxu0 0.0
    %2488 = vmatpush2.msra.mxu0 0.0
    %2489 = vmatprep.subr.mxu0 0.0
    %2490 = vmatpush2.msra.mxu0 0.0
    %2491 = vmatprep.subr.mxu0 0.0
    %2492 = vmatpush2.msra.mxu0 0.0
    %2493 = vmatprep.subr.mxu0 0.0
    %2494 = vmatpush2.msra.mxu0 0.0
    %2495 = vmatprep.subr.mxu0 0.0
    %2496 = vmatpush2.msra.mxu0 0.0
    %2497 = vmatprep.subr.mxu0 0.0
    %2498 = vmatpush2.msra.mxu0 0.0
    %2499 = vmatprep.subr.mxu0 0.0
    %2500 = vmatpush2.msra.mxu0 0.0
    %2501 = vmatprep.subr.mxu0 0.0
    %2502 = vmatpush2.msra.mxu0 0.0
    %2503 = vmatprep.subr.mxu0 0.0
    %2504 = vmatpush2.msra.mxu0 0.0
    %2505 = vmatprep.subr.mxu0 0.0
    %2506 = vmatpush2.msra.mxu0 0.0
    %2507 = vmatprep.subr.mxu0 0.0
    %2508 = vmatpush2.msra.mxu0 0.0
    %2509 = vmatprep.subr.mxu0 0.0
    %2510 = vmatpush2.msra.mxu0 0.0
    %2511 = vmatprep.subr.mxu0 0.0
    %2512 = vmatpush2.msra.mxu0 0.0
    %2513 = vmatprep.subr.mxu0 0.0
    %2514 = vmatpush2.msra.mxu0 0.0
    %2515 = vmatprep.subr.mxu0 0.0
    %2516 = vmatpush2.msra.mxu0 0.0
    %2517 = vmatprep.mubr.f32.mxu0 0.0
    %v2518 = vand.u32 %v2275, 4294901760
    %2519 = vmatmul.mubr.f32.gmra.mxu0 %v2518
    %v2520 = vpop.f32.mrf.mxu0
    %v2521 = vadd.f32 %v2375, %v2520
    %v2522 = vpop.f32.mrf.mxu0
    %2523 = vmatprep.mubr.f32.mxu0 0.0
    %v2524 = vand.u32 %v2278, 4294901760
    %2525 = vmatmul.mubr.f32.gmra.mxu0 %v2524
    %v2526 = vpop.f32.mrf.mxu0
    %v2527 = vadd.f32 %v2385, %v2526
    %v2528 = vpop.f32.mrf.mxu0
    %2529 = vmatprep.mubr.f32.mxu0 0.0
    %v2530 = vand.u32 %v2281, 4294901760
    %2531 = vmatmul.mubr.f32.gmra.mxu0 %v2530
    %v2532 = vpop.f32.mrf.mxu0
    %v2533 = vadd.f32 %v2395, %v2532
    %v2534 = vpop.f32.mrf.mxu0
    %2535 = vmatprep.mubr.f32.mxu0 0.0
    %v2536 = vand.u32 %v2284, 4294901760
    %2537 = vmatmul.mubr.f32.gmra.mxu0 %v2536
    %v2538 = vpop.f32.mrf.mxu0
    %v2539 = vadd.f32 %v2405, %v2538
    %v2540 = vpop.f32.mrf.mxu0
    %2541 = vmatprep.mubr.f32.mxu0 0.0
    %v2542 = vand.u32 %v2287, 4294901760
    %2543 = vmatmul.mubr.f32.gmra.mxu0 %v2542
    %v2544 = vpop.f32.mrf.mxu0
    %v2545 = vadd.f32 %v2415, %v2544
    %v2546 = vpop.f32.mrf.mxu0
    %2547 = vmatprep.mubr.f32.mxu0 0.0
    %v2548 = vand.u32 %v2290, 4294901760
    %2549 = vmatmul.mubr.f32.gmra.mxu0 %v2548
    %v2550 = vpop.f32.mrf.mxu0
    %v2551 = vadd.f32 %v2425, %v2550
    %v2552 = vpop.f32.mrf.mxu0
    %2553 = vmatprep.mubr.f32.mxu0 0.0
    %v2554 = vand.u32 %v2293, 4294901760
    %2555 = vmatmul.mubr.f32.gmra.mxu0 %v2554
    %v2556 = vpop.f32.mrf.mxu0
    %v2557 = vadd.f32 %v2435, %v2556
    %v2558 = vpop.f32.mrf.mxu0
    %2559 = vmatprep.mubr.f32.mxu0 0.0
    %v2560 = vand.u32 %v2296, 4294901760
    %2561 = vmatmul.mubr.f32.gmra.mxu0 %v2560
    %v2562 = vpop.f32.mrf.mxu0
    %v2563 = vadd.f32 %v2445, %v2562
    %v2564 = vpop.f32.mrf.mxu0
    %2565 = vdwg.mxu0
    %2566 = vmatprep.subr.mxu0 0.0
    %2567 = vmatpush1.msra.mxu0 0.0
    %2568 = vmatprep.subr.mxu0 0.0
    %2569 = vmatpush1.msra.mxu0 0.0
    %2570 = vmatprep.subr.mxu0 0.0
    %2571 = vmatpush1.msra.mxu0 0.0
    %2572 = vmatprep.subr.mxu0 0.0
    %2573 = vmatpush1.msra.mxu0 0.0
    %2574 = vmatprep.subr.mxu0 0.0
    %2575 = vmatpush1.msra.mxu0 0.0
    %2576 = vmatprep.subr.mxu0 0.0
    %2577 = vmatpush1.msra.mxu0 0.0
    %2578 = vmatprep.subr.mxu0 0.0
    %2579 = vmatpush1.msra.mxu0 0.0
    %2580 = vmatprep.subr.mxu0 0.0
    %2581 = vmatpush1.msra.mxu0 0.0
    %2582 = vmatprep.subr.mxu0 0.0
    %2583 = vmatpush1.msra.mxu0 0.0
    %2584 = vmatprep.subr.mxu0 0.0
    %2585 = vmatpush1.msra.mxu0 0.0
    %2586 = vmatprep.subr.mxu0 0.0
    %2587 = vmatpush1.msra.mxu0 0.0
    %2588 = vmatprep.subr.mxu0 0.0
    %2589 = vmatpush1.msra.mxu0 0.0
    %2590 = vmatprep.subr.mxu0 0.0
    %2591 = vmatpush1.msra.mxu0 0.0
    %2592 = vmatprep.subr.mxu0 0.0
    %2593 = vmatpush1.msra.mxu0 0.0
    %2594 = vmatprep.subr.mxu0 0.0
    %2595 = vmatpush1.msra.mxu0 0.0
    %2596 = vmatprep.subr.mxu0 0.0
    %v2597 = vand.u32 %v2300, 4294901760
    %v2598 = vsub.f32 %v2300, %v2597
    %2599 = vmatpush1.msra.mxu0 %v2598
    %2600 = vmatprep.subr.mxu0 0.0
    %2601 = vmatpush2.msra.mxu0 0.0
    %2602 = vmatprep.subr.mxu0 0.0
    %2603 = vmatpush2.msra.mxu0 0.0
    %2604 = vmatprep.subr.mxu0 0.0
    %2605 = vmatpush2.msra.mxu0 0.0
    %2606 = vmatprep.subr.mxu0 0.0
    %2607 = vmatpush2.msra.mxu0 0.0
    %2608 = vmatprep.subr.mxu0 0.0
    %2609 = vmatpush2.msra.mxu0 0.0
    %2610 = vmatprep.subr.mxu0 0.0
    %2611 = vmatpush2.msra.mxu0 0.0
    %2612 = vmatprep.subr.mxu0 0.0
    %2613 = vmatpush2.msra.mxu0 0.0
    %2614 = vmatprep.subr.mxu0 0.0
    %2615 = vmatpush2.msra.mxu0 0.0
    %2616 = vmatprep.subr.mxu0 0.0
    %2617 = vmatpush2.msra.mxu0 0.0
    %2618 = vmatprep.subr.mxu0 0.0
    %2619 = vmatpush2.msra.mxu0 0.0
    %2620 = vmatprep.subr.mxu0 0.0
    %2621 = vmatpush2.msra.mxu0 0.0
    %2622 = vmatprep.subr.mxu0 0.0
    %2623 = vmatpush2.msra.mxu0 0.0
    %2624 = vmatprep.subr.mxu0 0.0
    %2625 = vmatpush2.msra.mxu0 0.0
    %2626 = vmatprep.subr.mxu0 0.0
    %2627 = vmatpush2.msra.mxu0 0.0
    %2628 = vmatprep.subr.mxu0 0.0
    %2629 = vmatpush2.msra.mxu0 0.0
    %2630 = vmatprep.subr.mxu0 0.0
    %2631 = vmatpush2.msra.mxu0 0.0
    %2632 = vmatprep.mubr.f32.mxu0 0.0
    %v2633 = vand.u32 %v2275, 4294901760
    %v2634 = vsub.f32 %v2275, %v2633
    %2635 = vmatmul.mubr.f32.gmra.mxu0 %v2634
    %v2636 = vpop.f32.mrf.mxu0
    %v2637 = vadd.f32 %v2521, %v2636
    %v2638 = vpop.f32.mrf.mxu0
    %2639 = vmatprep.mubr.f32.mxu0 0.0
    %v2640 = vand.u32 %v2278, 4294901760
    %v2641 = vsub.f32 %v2278, %v2640
    %2642 = vmatmul.mubr.f32.gmra.mxu0 %v2641
    %v2643 = vpop.f32.mrf.mxu0
    %v2644 = vadd.f32 %v2527, %v2643
    %v2645 = vpop.f32.mrf.mxu0
    %2646 = vmatprep.mubr.f32.mxu0 0.0
    %v2647 = vand.u32 %v2281, 4294901760
    %v2648 = vsub.f32 %v2281, %v2647
    %2649 = vmatmul.mubr.f32.gmra.mxu0 %v2648
    %v2650 = vpop.f32.mrf.mxu0
    %v2651 = vadd.f32 %v2533, %v2650
    %v2652 = vpop.f32.mrf.mxu0
    %2653 = vmatprep.mubr.f32.mxu0 0.0
    %v2654 = vand.u32 %v2284, 4294901760
    %v2655 = vsub.f32 %v2284, %v2654
    %2656 = vmatmul.mubr.f32.gmra.mxu0 %v2655
    %v2657 = vpop.f32.mrf.mxu0
    %v2658 = vadd.f32 %v2539, %v2657
    %v2659 = vpop.f32.mrf.mxu0
    %2660 = vmatprep.mubr.f32.mxu0 0.0
    %v2661 = vand.u32 %v2287, 4294901760
    %v2662 = vsub.f32 %v2287, %v2661
    %2663 = vmatmul.mubr.f32.gmra.mxu0 %v2662
    %v2664 = vpop.f32.mrf.mxu0
    %v2665 = vadd.f32 %v2545, %v2664
    %v2666 = vpop.f32.mrf.mxu0
    %2667 = vmatprep.mubr.f32.mxu0 0.0
    %v2668 = vand.u32 %v2290, 4294901760
    %v2669 = vsub.f32 %v2290, %v2668
    %2670 = vmatmul.mubr.f32.gmra.mxu0 %v2669
    %v2671 = vpop.f32.mrf.mxu0
    %v2672 = vadd.f32 %v2551, %v2671
    %v2673 = vpop.f32.mrf.mxu0
    %2674 = vmatprep.mubr.f32.mxu0 0.0
    %v2675 = vand.u32 %v2293, 4294901760
    %v2676 = vsub.f32 %v2293, %v2675
    %2677 = vmatmul.mubr.f32.gmra.mxu0 %v2676
    %v2678 = vpop.f32.mrf.mxu0
    %v2679 = vadd.f32 %v2557, %v2678
    %v2680 = vpop.f32.mrf.mxu0
    %2681 = vmatprep.mubr.f32.mxu0 0.0
    %v2682 = vand.u32 %v2296, 4294901760
    %v2683 = vsub.f32 %v2296, %v2682
    %2684 = vmatmul.mubr.f32.gmra.mxu0 %v2683
    %v2685 = vpop.f32.mrf.mxu0
    %v2686 = vadd.f32 %v2563, %v2685
    %v2687 = vpop.f32.mrf.mxu0
    %2688 = vdwg.mxu0
    %2689 = vmatprep.subr.mxu0 0.0
    %2690 = vmatpush1.msra.mxu0 0.0
    %2691 = vmatprep.subr.mxu0 0.0
    %2692 = vmatpush1.msra.mxu0 0.0
    %2693 = vmatprep.subr.mxu0 0.0
    %2694 = vmatpush1.msra.mxu0 0.0
    %2695 = vmatprep.subr.mxu0 0.0
    %2696 = vmatpush1.msra.mxu0 0.0
    %2697 = vmatprep.subr.mxu0 0.0
    %2698 = vmatpush1.msra.mxu0 0.0
    %2699 = vmatprep.subr.mxu0 0.0
    %2700 = vmatpush1.msra.mxu0 0.0
    %2701 = vmatprep.subr.mxu0 0.0
    %2702 = vmatpush1.msra.mxu0 0.0
    %2703 = vmatprep.subr.mxu0 0.0
    %2704 = vmatpush1.msra.mxu0 0.0
    %2705 = vmatprep.subr.mxu0 0.0
    %2706 = vmatpush1.msra.mxu0 0.0
    %2707 = vmatprep.subr.mxu0 0.0
    %2708 = vmatpush1.msra.mxu0 0.0
    %2709 = vmatprep.subr.mxu0 0.0
    %2710 = vmatpush1.msra.mxu0 0.0
    %2711 = vmatprep.subr.mxu0 0.0
    %2712 = vmatpush1.msra.mxu0 0.0
    %2713 = vmatprep.subr.mxu0 0.0
    %2714 = vmatpush1.msra.mxu0 0.0
    %2715 = vmatprep.subr.mxu0 0.0
    %2716 = vmatpush1.msra.mxu0 0.0
    %2717 = vmatprep.subr.mxu0 0.0
    %2718 = vmatpush1.msra.mxu0 0.0
    %2719 = vmatprep.subr.mxu0 0.0
    %v2720 = vand.u32 %v2300, 4294901760
    %2721 = vmatpush1.msra.mxu0 %v2720
    %2722 = vmatprep.subr.mxu0 0.0
    %2723 = vmatpush2.msra.mxu0 0.0
    %2724 = vmatprep.subr.mxu0 0.0
    %2725 = vmatpush2.msra.mxu0 0.0
    %2726 = vmatprep.subr.mxu0 0.0
    %2727 = vmatpush2.msra.mxu0 0.0
    %2728 = vmatprep.subr.mxu0 0.0
    %2729 = vmatpush2.msra.mxu0 0.0
    %2730 = vmatprep.subr.mxu0 0.0
    %2731 = vmatpush2.msra.mxu0 0.0
    %2732 = vmatprep.subr.mxu0 0.0
    %2733 = vmatpush2.msra.mxu0 0.0
    %2734 = vmatprep.subr.mxu0 0.0
    %2735 = vmatpush2.msra.mxu0 0.0
    %2736 = vmatprep.subr.mxu0 0.0
    %2737 = vmatpush2.msra.mxu0 0.0
    %2738 = vmatprep.subr.mxu0 0.0
    %2739 = vmatpush2.msra.mxu0 0.0
    %2740 = vmatprep.subr.mxu0 0.0
    %2741 = vmatpush2.msra.mxu0 0.0
    %2742 = vmatprep.subr.mxu0 0.0
    %2743 = vmatpush2.msra.mxu0 0.0
    %2744 = vmatprep.subr.mxu0 0.0
    %2745 = vmatpush2.msra.mxu0 0.0
    %2746 = vmatprep.subr.mxu0 0.0
    %2747 = vmatpush2.msra.mxu0 0.0
    %2748 = vmatprep.subr.mxu0 0.0
    %2749 = vmatpush2.msra.mxu0 0.0
    %2750 = vmatprep.subr.mxu0 0.0
    %2751 = vmatpush2.msra.mxu0 0.0
    %2752 = vmatprep.subr.mxu0 0.0
    %2753 = vmatpush2.msra.mxu0 0.0
    %2754 = vmatprep.mubr.f32.mxu0 0.0
    %v2755 = vand.u32 %v2275, 4294901760
    %v2756 = vsub.f32 %v2275, %v2755
    %v2757 = vand.u32 %v2756, 4294901760
    %2758 = vmatmul.mubr.f32.gmra.mxu0 %v2757
    %v2759 = vpop.f32.mrf.mxu0
    %v2760 = vadd.f32 %v2637, %v2759
    %v2761 = vpop.f32.mrf.mxu0
    %2762 = vmatprep.mubr.f32.mxu0 0.0
    %v2763 = vand.u32 %v2278, 4294901760
    %v2764 = vsub.f32 %v2278, %v2763
    %v2765 = vand.u32 %v2764, 4294901760
    %2766 = vmatmul.mubr.f32.gmra.mxu0 %v2765
    %v2767 = vpop.f32.mrf.mxu0
    %v2768 = vadd.f32 %v2644, %v2767
    %v2769 = vpop.f32.mrf.mxu0
    %2770 = vmatprep.mubr.f32.mxu0 0.0
    %v2771 = vand.u32 %v2281, 4294901760
    %v2772 = vsub.f32 %v2281, %v2771
    %v2773 = vand.u32 %v2772, 4294901760
    %2774 = vmatmul.mubr.f32.gmra.mxu0 %v2773
    %v2775 = vpop.f32.mrf.mxu0
    %v2776 = vadd.f32 %v2651, %v2775
    %v2777 = vpop.f32.mrf.mxu0
    %2778 = vmatprep.mubr.f32.mxu0 0.0
    %v2779 = vand.u32 %v2284, 4294901760
    %v2780 = vsub.f32 %v2284, %v2779
    %v2781 = vand.u32 %v2780, 4294901760
    %2782 = vmatmul.mubr.f32.gmra.mxu0 %v2781
    %v2783 = vpop.f32.mrf.mxu0
    %v2784 = vadd.f32 %v2658, %v2783
    %v2785 = vpop.f32.mrf.mxu0
    %2786 = vmatprep.mubr.f32.mxu0 0.0
    %v2787 = vand.u32 %v2287, 4294901760
    %v2788 = vsub.f32 %v2287, %v2787
    %v2789 = vand.u32 %v2788, 4294901760
    %2790 = vmatmul.mubr.f32.gmra.mxu0 %v2789
    %v2791 = vpop.f32.mrf.mxu0
    %v2792 = vadd.f32 %v2665, %v2791
    %v2793 = vpop.f32.mrf.mxu0
    %2794 = vmatprep.mubr.f32.mxu0 0.0
    %v2795 = vand.u32 %v2290, 4294901760
    %v2796 = vsub.f32 %v2290, %v2795
    %v2797 = vand.u32 %v2796, 4294901760
    %2798 = vmatmul.mubr.f32.gmra.mxu0 %v2797
    %v2799 = vpop.f32.mrf.mxu0
    %v2800 = vadd.f32 %v2672, %v2799
    %v2801 = vpop.f32.mrf.mxu0
    %2802 = vmatprep.mubr.f32.mxu0 0.0
    %v2803 = vand.u32 %v2293, 4294901760
    %v2804 = vsub.f32 %v2293, %v2803
    %v2805 = vand.u32 %v2804, 4294901760
    %2806 = vmatmul.mubr.f32.gmra.mxu0 %v2805
    %v2807 = vpop.f32.mrf.mxu0
    %v2808 = vadd.f32 %v2679, %v2807
    %v2809 = vpop.f32.mrf.mxu0
    %2810 = vmatprep.mubr.f32.mxu0 0.0
    %v2811 = vand.u32 %v2296, 4294901760
    %v2812 = vsub.f32 %v2296, %v2811
    %v2813 = vand.u32 %v2812, 4294901760
    %2814 = vmatmul.mubr.f32.gmra.mxu0 %v2813
    %v2815 = vpop.f32.mrf.mxu0
    %v2816 = vadd.f32 %v2686, %v2815
    %v2817 = vpop.f32.mrf.mxu0
    %2818 = vdwg.mxu0
    %2819 = vmatprep.subr.mxu0 0.0
    %2820 = vmatpush1.msra.mxu0 0.0
    %2821 = vmatprep.subr.mxu0 0.0
    %2822 = vmatpush1.msra.mxu0 0.0
    %2823 = vmatprep.subr.mxu0 0.0
    %2824 = vmatpush1.msra.mxu0 0.0
    %2825 = vmatprep.subr.mxu0 0.0
    %2826 = vmatpush1.msra.mxu0 0.0
    %2827 = vmatprep.subr.mxu0 0.0
    %2828 = vmatpush1.msra.mxu0 0.0
    %2829 = vmatprep.subr.mxu0 0.0
    %2830 = vmatpush1.msra.mxu0 0.0
    %2831 = vmatprep.subr.mxu0 0.0
    %2832 = vmatpush1.msra.mxu0 0.0
    %2833 = vmatprep.subr.mxu0 0.0
    %2834 = vmatpush1.msra.mxu0 0.0
    %2835 = vmatprep.subr.mxu0 0.0
    %2836 = vmatpush1.msra.mxu0 0.0
    %2837 = vmatprep.subr.mxu0 0.0
    %2838 = vmatpush1.msra.mxu0 0.0
    %2839 = vmatprep.subr.mxu0 0.0
    %2840 = vmatpush1.msra.mxu0 0.0
    %2841 = vmatprep.subr.mxu0 0.0
    %2842 = vmatpush1.msra.mxu0 0.0
    %2843 = vmatprep.subr.mxu0 0.0
    %2844 = vmatpush1.msra.mxu0 0.0
    %2845 = vmatprep.subr.mxu0 0.0
    %2846 = vmatpush1.msra.mxu0 0.0
    %2847 = vmatprep.subr.mxu0 0.0
    %2848 = vmatpush1.msra.mxu0 0.0
    %2849 = vmatprep.subr.mxu0 0.0
    %v2850 = vand.u32 %v2300, 4294901760
    %v2851 = vsub.f32 %v2300, %v2850
    %v2852 = vand.u32 %v2851, 4294901760
    %2853 = vmatpush1.msra.mxu0 %v2852
    %2854 = vmatprep.subr.mxu0 0.0
    %2855 = vmatpush2.msra.mxu0 0.0
    %2856 = vmatprep.subr.mxu0 0.0
    %2857 = vmatpush2.msra.mxu0 0.0
    %2858 = vmatprep.subr.mxu0 0.0
    %2859 = vmatpush2.msra.mxu0 0.0
    %2860 = vmatprep.subr.mxu0 0.0
    %2861 = vmatpush2.msra.mxu0 0.0
    %2862 = vmatprep.subr.mxu0 0.0
    %2863 = vmatpush2.msra.mxu0 0.0
    %2864 = vmatprep.subr.mxu0 0.0
    %2865 = vmatpush2.msra.mxu0 0.0
    %2866 = vmatprep.subr.mxu0 0.0
    %2867 = vmatpush2.msra.mxu0 0.0
    %2868 = vmatprep.subr.mxu0 0.0
    %2869 = vmatpush2.msra.mxu0 0.0
    %2870 = vmatprep.subr.mxu0 0.0
    %2871 = vmatpush2.msra.mxu0 0.0
    %2872 = vmatprep.subr.mxu0 0.0
    %2873 = vmatpush2.msra.mxu0 0.0
    %2874 = vmatprep.subr.mxu0 0.0
    %2875 = vmatpush2.msra.mxu0 0.0
    %2876 = vmatprep.subr.mxu0 0.0
    %2877 = vmatpush2.msra.mxu0 0.0
    %2878 = vmatprep.subr.mxu0 0.0
    %2879 = vmatpush2.msra.mxu0 0.0
    %2880 = vmatprep.subr.mxu0 0.0
    %2881 = vmatpush2.msra.mxu0 0.0
    %2882 = vmatprep.subr.mxu0 0.0
    %2883 = vmatpush2.msra.mxu0 0.0
    %2884 = vmatprep.subr.mxu0 0.0
    %2885 = vmatpush2.msra.mxu0 0.0
    %2886 = vmatprep.mubr.f32.mxu0 0.0
    %v2887 = vand.u32 %v2275, 4294901760
    %2888 = vmatmul.mubr.f32.gmra.mxu0 %v2887
    %v2889 = vpop.f32.mrf.mxu0
    %v2890 = vadd.f32 %v2760, %v2889
    %v2891 = vpop.f32.mrf.mxu0
    %2892 = vmatprep.mubr.f32.mxu0 0.0
    %v2893 = vand.u32 %v2278, 4294901760
    %2894 = vmatmul.mubr.f32.gmra.mxu0 %v2893
    %v2895 = vpop.f32.mrf.mxu0
    %v2896 = vadd.f32 %v2768, %v2895
    %v2897 = vpop.f32.mrf.mxu0
    %2898 = vmatprep.mubr.f32.mxu0 0.0
    %v2899 = vand.u32 %v2281, 4294901760
    %2900 = vmatmul.mubr.f32.gmra.mxu0 %v2899
    %v2901 = vpop.f32.mrf.mxu0
    %v2902 = vadd.f32 %v2776, %v2901
    %v2903 = vpop.f32.mrf.mxu0
    %2904 = vmatprep.mubr.f32.mxu0 0.0
    %v2905 = vand.u32 %v2284, 4294901760
    %2906 = vmatmul.mubr.f32.gmra.mxu0 %v2905
    %v2907 = vpop.f32.mrf.mxu0
    %v2908 = vadd.f32 %v2784, %v2907
    %v2909 = vpop.f32.mrf.mxu0
    %2910 = vmatprep.mubr.f32.mxu0 0.0
    %v2911 = vand.u32 %v2287, 4294901760
    %2912 = vmatmul.mubr.f32.gmra.mxu0 %v2911
    %v2913 = vpop.f32.mrf.mxu0
    %v2914 = vadd.f32 %v2792, %v2913
    %v2915 = vpop.f32.mrf.mxu0
    %2916 = vmatprep.mubr.f32.mxu0 0.0
    %v2917 = vand.u32 %v2290, 4294901760
    %2918 = vmatmul.mubr.f32.gmra.mxu0 %v2917
    %v2919 = vpop.f32.mrf.mxu0
    %v2920 = vadd.f32 %v2800, %v2919
    %v2921 = vpop.f32.mrf.mxu0
    %2922 = vmatprep.mubr.f32.mxu0 0.0
    %v2923 = vand.u32 %v2293, 4294901760
    %2924 = vmatmul.mubr.f32.gmra.mxu0 %v2923
    %v2925 = vpop.f32.mrf.mxu0
    %v2926 = vadd.f32 %v2808, %v2925
    %v2927 = vpop.f32.mrf.mxu0
    %2928 = vmatprep.mubr.f32.mxu0 0.0
    %v2929 = vand.u32 %v2296, 4294901760
    %2930 = vmatmul.mubr.f32.gmra.mxu0 %v2929
    %v2931 = vpop.f32.mrf.mxu0
    %v2932 = vadd.f32 %v2816, %v2931
    %v2933 = vpop.f32.mrf.mxu0
    %2934 = vdwg.mxu0
    %2935 = vmatprep.subr.mxu0 0.0
    %2936 = vmatpush1.msra.mxu0 0.0
    %2937 = vmatprep.subr.mxu0 0.0
    %2938 = vmatpush1.msra.mxu0 0.0
    %2939 = vmatprep.subr.mxu0 0.0
    %2940 = vmatpush1.msra.mxu0 0.0
    %2941 = vmatprep.subr.mxu0 0.0
    %2942 = vmatpush1.msra.mxu0 0.0
    %2943 = vmatprep.subr.mxu0 0.0
    %2944 = vmatpush1.msra.mxu0 0.0
    %2945 = vmatprep.subr.mxu0 0.0
    %2946 = vmatpush1.msra.mxu0 0.0
    %2947 = vmatprep.subr.mxu0 0.0
    %2948 = vmatpush1.msra.mxu0 0.0
    %2949 = vmatprep.subr.mxu0 0.0
    %2950 = vmatpush1.msra.mxu0 0.0
    %2951 = vmatprep.subr.mxu0 0.0
    %2952 = vmatpush1.msra.mxu0 0.0
    %2953 = vmatprep.subr.mxu0 0.0
    %2954 = vmatpush1.msra.mxu0 0.0
    %2955 = vmatprep.subr.mxu0 0.0
    %2956 = vmatpush1.msra.mxu0 0.0
    %2957 = vmatprep.subr.mxu0 0.0
    %2958 = vmatpush1.msra.mxu0 0.0
    %2959 = vmatprep.subr.mxu0 0.0
    %2960 = vmatpush1.msra.mxu0 0.0
    %2961 = vmatprep.subr.mxu0 0.0
    %2962 = vmatpush1.msra.mxu0 0.0
    %2963 = vmatprep.subr.mxu0 0.0
    %2964 = vmatpush1.msra.mxu0 0.0
    %2965 = vmatprep.subr.mxu0 0.0
    %v2966 = vand.u32 %v2300, 4294901760
    %2967 = vmatpush1.msra.mxu0 %v2966
    %2968 = vmatprep.subr.mxu0 0.0
    %2969 = vmatpush2.msra.mxu0 0.0
    %2970 = vmatprep.subr.mxu0 0.0
    %2971 = vmatpush2.msra.mxu0 0.0
    %2972 = vmatprep.subr.mxu0 0.0
    %2973 = vmatpush2.msra.mxu0 0.0
    %2974 = vmatprep.subr.mxu0 0.0
    %2975 = vmatpush2.msra.mxu0 0.0
    %2976 = vmatprep.subr.mxu0 0.0
    %2977 = vmatpush2.msra.mxu0 0.0
    %2978 = vmatprep.subr.mxu0 0.0
    %2979 = vmatpush2.msra.mxu0 0.0
    %2980 = vmatprep.subr.mxu0 0.0
    %2981 = vmatpush2.msra.mxu0 0.0
    %2982 = vmatprep.subr.mxu0 0.0
    %2983 = vmatpush2.msra.mxu0 0.0
    %2984 = vmatprep.subr.mxu0 0.0
    %2985 = vmatpush2.msra.mxu0 0.0
    %2986 = vmatprep.subr.mxu0 0.0
    %2987 = vmatpush2.msra.mxu0 0.0
    %2988 = vmatprep.subr.mxu0 0.0
    %2989 = vmatpush2.msra.mxu0 0.0
    %2990 = vmatprep.subr.mxu0 0.0
    %2991 = vmatpush2.msra.mxu0 0.0
    %2992 = vmatprep.subr.mxu0 0.0
    %2993 = vmatpush2.msra.mxu0 0.0
    %2994 = vmatprep.subr.mxu0 0.0
    %2995 = vmatpush2.msra.mxu0 0.0
    %2996 = vmatprep.subr.mxu0 0.0
    %2997 = vmatpush2.msra.mxu0 0.0
    %2998 = vmatprep.subr.mxu0 0.0
    %2999 = vmatpush2.msra.mxu0 0.0
    %3000 = vmatprep.mubr.f32.mxu0 0.0
    %v3001 = vand.u32 %v2275, 4294901760
    %3002 = vmatmul.mubr.f32.gmra.mxu0 %v3001
    %v3003 = vpop.f32.mrf.mxu0
    %v3004 = vadd.f32 %v2890, %v3003
    %v3005 = vpop.f32.mrf.mxu0
    %3006 = vmatprep.mubr.f32.mxu0 0.0
    %v3007 = vand.u32 %v2278, 4294901760
    %3008 = vmatmul.mubr.f32.gmra.mxu0 %v3007
    %v3009 = vpop.f32.mrf.mxu0
    %v3010 = vadd.f32 %v2896, %v3009
    %v3011 = vpop.f32.mrf.mxu0
    %3012 = vmatprep.mubr.f32.mxu0 0.0
    %v3013 = vand.u32 %v2281, 4294901760
    %3014 = vmatmul.mubr.f32.gmra.mxu0 %v3013
    %v3015 = vpop.f32.mrf.mxu0
    %v3016 = vadd.f32 %v2902, %v3015
    %v3017 = vpop.f32.mrf.mxu0
    %3018 = vmatprep.mubr.f32.mxu0 0.0
    %v3019 = vand.u32 %v2284, 4294901760
    %3020 = vmatmul.mubr.f32.gmra.mxu0 %v3019
    %v3021 = vpop.f32.mrf.mxu0
    %v3022 = vadd.f32 %v2908, %v3021
    %v3023 = vpop.f32.mrf.mxu0
    %3024 = vmatprep.mubr.f32.mxu0 0.0
    %v3025 = vand.u32 %v2287, 4294901760
    %3026 = vmatmul.mubr.f32.gmra.mxu0 %v3025
    %v3027 = vpop.f32.mrf.mxu0
    %v3028 = vadd.f32 %v2914, %v3027
    %v3029 = vpop.f32.mrf.mxu0
    %3030 = vmatprep.mubr.f32.mxu0 0.0
    %v3031 = vand.u32 %v2290, 4294901760
    %3032 = vmatmul.mubr.f32.gmra.mxu0 %v3031
    %v3033 = vpop.f32.mrf.mxu0
    %v3034 = vadd.f32 %v2920, %v3033
    %v3035 = vpop.f32.mrf.mxu0
    %3036 = vmatprep.mubr.f32.mxu0 0.0
    %v3037 = vand.u32 %v2293, 4294901760
    %3038 = vmatmul.mubr.f32.gmra.mxu0 %v3037
    %v3039 = vpop.f32.mrf.mxu0
    %v3040 = vadd.f32 %v2926, %v3039
    %v3041 = vpop.f32.mrf.mxu0
    %3042 = vmatprep.mubr.f32.mxu0 0.0
    %v3043 = vand.u32 %v2296, 4294901760
    %3044 = vmatmul.mubr.f32.gmra.mxu0 %v3043
    %v3045 = vpop.f32.mrf.mxu0
    %v3046 = vadd.f32 %v2932, %v3045
    %v3047 = vpop.f32.mrf.mxu0
    %3048 = vdwg.mxu0
    %v3049 = vmax.f32 %v3004, 0.0
    %v3050 = vmax.f32 %v3010, 0.0
    %v3051 = vmax.f32 %v3016, 0.0
    %v3052 = vmax.f32 %v3022, 0.0
    %v3053 = vmax.f32 %v3028, 0.0
    %v3054 = vmax.f32 %v3034, 0.0
    %v3055 = vmax.f32 %v3040, 0.0
    %v3056 = vmax.f32 %v3046, 0.0
    %v3057 = vld [vmem:[#allocation6 + $0x120] sm:$0x7]
    %v3059 = vsel %vm769, %v3057, 0
    %3061 = vmatprep.subr.mxu0 0.0
    %3062 = vmatpush1.msra.mxu0 0.0
    %3063 = vmatprep.subr.mxu0 0.0
    %3064 = vmatpush1.msra.mxu0 0.0
    %3065 = vmatprep.subr.mxu0 0.0
    %3066 = vmatpush1.msra.mxu0 0.0
    %3067 = vmatprep.subr.mxu0 0.0
    %3068 = vmatpush1.msra.mxu0 0.0
    %3069 = vmatprep.subr.mxu0 0.0
    %3070 = vmatpush1.msra.mxu0 0.0
    %3071 = vmatprep.subr.mxu0 0.0
    %3072 = vmatpush1.msra.mxu0 0.0
    %3073 = vmatprep.subr.mxu0 0.0
    %3074 = vmatpush1.msra.mxu0 0.0
    %3075 = vmatprep.subr.mxu0 0.0
    %3076 = vmatpush1.msra.mxu0 0.0
    %3077 = vmatprep.subr.mxu0 0.0
    %v3078 = vand.u32 %v3056, 4294901760
    %3079 = vmatpush1.msra.mxu0 %v3078
    %3080 = vmatprep.subr.mxu0 0.0
    %v3081 = vand.u32 %v3055, 4294901760
    %3082 = vmatpush1.msra.mxu0 %v3081
    %3083 = vmatprep.subr.mxu0 0.0
    %v3084 = vand.u32 %v3054, 4294901760
    %3085 = vmatpush1.msra.mxu0 %v3084
    %3086 = vmatprep.subr.mxu0 0.0
    %v3087 = vand.u32 %v3053, 4294901760
    %3088 = vmatpush1.msra.mxu0 %v3087
    %3089 = vmatprep.subr.mxu0 0.0
    %v3090 = vand.u32 %v3052, 4294901760
    %3091 = vmatpush1.msra.mxu0 %v3090
    %3092 = vmatprep.subr.mxu0 0.0
    %v3093 = vand.u32 %v3051, 4294901760
    %3094 = vmatpush1.msra.mxu0 %v3093
    %3095 = vmatprep.subr.mxu0 0.0
    %v3096 = vand.u32 %v3050, 4294901760
    %3097 = vmatpush1.msra.mxu0 %v3096
    %3098 = vmatprep.subr.mxu0 0.0
    %v3099 = vand.u32 %v3049, 4294901760
    %3100 = vmatpush1.msra.mxu0 %v3099
    %3101 = vmatprep.subr.mxu0 0.0
    %3102 = vmatpush2.msra.mxu0 0.0
    %3103 = vmatprep.subr.mxu0 0.0
    %3104 = vmatpush2.msra.mxu0 0.0
    %3105 = vmatprep.subr.mxu0 0.0
    %3106 = vmatpush2.msra.mxu0 0.0
    %3107 = vmatprep.subr.mxu0 0.0
    %3108 = vmatpush2.msra.mxu0 0.0
    %3109 = vmatprep.subr.mxu0 0.0
    %3110 = vmatpush2.msra.mxu0 0.0
    %3111 = vmatprep.subr.mxu0 0.0
    %3112 = vmatpush2.msra.mxu0 0.0
    %3113 = vmatprep.subr.mxu0 0.0
    %3114 = vmatpush2.msra.mxu0 0.0
    %3115 = vmatprep.subr.mxu0 0.0
    %3116 = vmatpush2.msra.mxu0 0.0
    %3117 = vmatprep.subr.mxu0 0.0
    %3118 = vmatpush2.msra.mxu0 0.0
    %3119 = vmatprep.subr.mxu0 0.0
    %3120 = vmatpush2.msra.mxu0 0.0
    %3121 = vmatprep.subr.mxu0 0.0
    %3122 = vmatpush2.msra.mxu0 0.0
    %3123 = vmatprep.subr.mxu0 0.0
    %3124 = vmatpush2.msra.mxu0 0.0
    %3125 = vmatprep.subr.mxu0 0.0
    %3126 = vmatpush2.msra.mxu0 0.0
    %3127 = vmatprep.subr.mxu0 0.0
    %3128 = vmatpush2.msra.mxu0 0.0
    %3129 = vmatprep.subr.mxu0 0.0
    %3130 = vmatpush2.msra.mxu0 0.0
    %3131 = vmatprep.subr.mxu0 0.0
    %3132 = vmatpush2.msra.mxu0 0.0
    %3133 = vmatprep.mubr.f32.mxu0 0.0
    %v3134 = vand.u32 %v3059, 4294901760
    %v3135 = vsub.f32 %v3059, %v3134
    %v3136 = vand.u32 %v3135, 4294901760
    %v3137 = vsub.f32 %v3135, %v3136
    %v3138 = vand.u32 %v3137, 4294901760
    %3139 = vmatmul.mubr.f32.gmra.mxu0 %v3138
    %v3140 = vpop.f32.mrf.mxu0
    %v3141 = vadd.f32 0.0, %v3140
    %v3142 = vpop.f32.mrf.mxu0
    %3143 = vdwg.mxu0
    %3144 = vmatprep.subr.mxu0 0.0
    %3145 = vmatpush1.msra.mxu0 0.0
    %3146 = vmatprep.subr.mxu0 0.0
    %3147 = vmatpush1.msra.mxu0 0.0
    %3148 = vmatprep.subr.mxu0 0.0
    %3149 = vmatpush1.msra.mxu0 0.0
    %3150 = vmatprep.subr.mxu0 0.0
    %3151 = vmatpush1.msra.mxu0 0.0
    %3152 = vmatprep.subr.mxu0 0.0
    %3153 = vmatpush1.msra.mxu0 0.0
    %3154 = vmatprep.subr.mxu0 0.0
    %3155 = vmatpush1.msra.mxu0 0.0
    %3156 = vmatprep.subr.mxu0 0.0
    %3157 = vmatpush1.msra.mxu0 0.0
    %3158 = vmatprep.subr.mxu0 0.0
    %3159 = vmatpush1.msra.mxu0 0.0
    %3160 = vmatprep.subr.mxu0 0.0
    %v3161 = vand.u32 %v3056, 4294901760
    %v3162 = vsub.f32 %v3056, %v3161
    %v3163 = vand.u32 %v3162, 4294901760
    %v3164 = vsub.f32 %v3162, %v3163
    %v3165 = vand.u32 %v3164, 4294901760
    %3166 = vmatpush1.msra.mxu0 %v3165
    %3167 = vmatprep.subr.mxu0 0.0
    %v3168 = vand.u32 %v3055, 4294901760
    %v3169 = vsub.f32 %v3055, %v3168
    %v3170 = vand.u32 %v3169, 4294901760
    %v3171 = vsub.f32 %v3169, %v3170
    %v3172 = vand.u32 %v3171, 4294901760
    %3173 = vmatpush1.msra.mxu0 %v3172
    %3174 = vmatprep.subr.mxu0 0.0
    %v3175 = vand.u32 %v3054, 4294901760
    %v3176 = vsub.f32 %v3054, %v3175
    %v3177 = vand.u32 %v3176, 4294901760
    %v3178 = vsub.f32 %v3176, %v3177
    %v3179 = vand.u32 %v3178, 4294901760
    %3180 = vmatpush1.msra.mxu0 %v3179
    %3181 = vmatprep.subr.mxu0 0.0
    %v3182 = vand.u32 %v3053, 4294901760
    %v3183 = vsub.f32 %v3053, %v3182
    %v3184 = vand.u32 %v3183, 4294901760
    %v3185 = vsub.f32 %v3183, %v3184
    %v3186 = vand.u32 %v3185, 4294901760
    %3187 = vmatpush1.msra.mxu0 %v3186
    %3188 = vmatprep.subr.mxu0 0.0
    %v3189 = vand.u32 %v3052, 4294901760
    %v3190 = vsub.f32 %v3052, %v3189
    %v3191 = vand.u32 %v3190, 4294901760
    %v3192 = vsub.f32 %v3190, %v3191
    %v3193 = vand.u32 %v3192, 4294901760
    %3194 = vmatpush1.msra.mxu0 %v3193
    %3195 = vmatprep.subr.mxu0 0.0
    %v3196 = vand.u32 %v3051, 4294901760
    %v3197 = vsub.f32 %v3051, %v3196
    %v3198 = vand.u32 %v3197, 4294901760
    %v3199 = vsub.f32 %v3197, %v3198
    %v3200 = vand.u32 %v3199, 4294901760
    %3201 = vmatpush1.msra.mxu0 %v3200
    %3202 = vmatprep.subr.mxu0 0.0
    %v3203 = vand.u32 %v3050, 4294901760
    %v3204 = vsub.f32 %v3050, %v3203
    %v3205 = vand.u32 %v3204, 4294901760
    %v3206 = vsub.f32 %v3204, %v3205
    %v3207 = vand.u32 %v3206, 4294901760
    %3208 = vmatpush1.msra.mxu0 %v3207
    %3209 = vmatprep.subr.mxu0 0.0
    %v3210 = vand.u32 %v3049, 4294901760
    %v3211 = vsub.f32 %v3049, %v3210
    %v3212 = vand.u32 %v3211, 4294901760
    %v3213 = vsub.f32 %v3211, %v3212
    %v3214 = vand.u32 %v3213, 4294901760
    %3215 = vmatpush1.msra.mxu0 %v3214
    %3216 = vmatprep.subr.mxu0 0.0
    %3217 = vmatpush2.msra.mxu0 0.0
    %3218 = vmatprep.subr.mxu0 0.0
    %3219 = vmatpush2.msra.mxu0 0.0
    %3220 = vmatprep.subr.mxu0 0.0
    %3221 = vmatpush2.msra.mxu0 0.0
    %3222 = vmatprep.subr.mxu0 0.0
    %3223 = vmatpush2.msra.mxu0 0.0
    %3224 = vmatprep.subr.mxu0 0.0
    %3225 = vmatpush2.msra.mxu0 0.0
    %3226 = vmatprep.subr.mxu0 0.0
    %3227 = vmatpush2.msra.mxu0 0.0
    %3228 = vmatprep.subr.mxu0 0.0
    %3229 = vmatpush2.msra.mxu0 0.0
    %3230 = vmatprep.subr.mxu0 0.0
    %3231 = vmatpush2.msra.mxu0 0.0
    %3232 = vmatprep.subr.mxu0 0.0
    %3233 = vmatpush2.msra.mxu0 0.0
    %3234 = vmatprep.subr.mxu0 0.0
    %3235 = vmatpush2.msra.mxu0 0.0
    %3236 = vmatprep.subr.mxu0 0.0
    %3237 = vmatpush2.msra.mxu0 0.0
    %3238 = vmatprep.subr.mxu0 0.0
    %3239 = vmatpush2.msra.mxu0 0.0
    %3240 = vmatprep.subr.mxu0 0.0
    %3241 = vmatpush2.msra.mxu0 0.0
    %3242 = vmatprep.subr.mxu0 0.0
    %3243 = vmatpush2.msra.mxu0 0.0
    %3244 = vmatprep.subr.mxu0 0.0
    %3245 = vmatpush2.msra.mxu0 0.0
    %3246 = vmatprep.subr.mxu0 0.0
    %3247 = vmatpush2.msra.mxu0 0.0
    %3248 = vmatprep.mubr.f32.mxu0 0.0
    %v3249 = vand.u32 %v3059, 4294901760
    %3250 = vmatmul.mubr.f32.gmra.mxu0 %v3249
    %v3251 = vpop.f32.mrf.mxu0
    %v3252 = vadd.f32 %v3141, %v3251
    %v3253 = vpop.f32.mrf.mxu0
    %3254 = vdwg.mxu0
    %3255 = vmatprep.subr.mxu0 0.0
    %3256 = vmatpush1.msra.mxu0 0.0
    %3257 = vmatprep.subr.mxu0 0.0
    %3258 = vmatpush1.msra.mxu0 0.0
    %3259 = vmatprep.subr.mxu0 0.0
    %3260 = vmatpush1.msra.mxu0 0.0
    %3261 = vmatprep.subr.mxu0 0.0
    %3262 = vmatpush1.msra.mxu0 0.0
    %3263 = vmatprep.subr.mxu0 0.0
    %3264 = vmatpush1.msra.mxu0 0.0
    %3265 = vmatprep.subr.mxu0 0.0
    %3266 = vmatpush1.msra.mxu0 0.0
    %3267 = vmatprep.subr.mxu0 0.0
    %3268 = vmatpush1.msra.mxu0 0.0
    %3269 = vmatprep.subr.mxu0 0.0
    %3270 = vmatpush1.msra.mxu0 0.0
    %3271 = vmatprep.subr.mxu0 0.0
    %v3272 = vand.u32 %v3056, 4294901760
    %v3273 = vsub.f32 %v3056, %v3272
    %3274 = vmatpush1.msra.mxu0 %v3273
    %3275 = vmatprep.subr.mxu0 0.0
    %v3276 = vand.u32 %v3055, 4294901760
    %v3277 = vsub.f32 %v3055, %v3276
    %3278 = vmatpush1.msra.mxu0 %v3277
    %3279 = vmatprep.subr.mxu0 0.0
    %v3280 = vand.u32 %v3054, 4294901760
    %v3281 = vsub.f32 %v3054, %v3280
    %3282 = vmatpush1.msra.mxu0 %v3281
    %3283 = vmatprep.subr.mxu0 0.0
    %v3284 = vand.u32 %v3053, 4294901760
    %v3285 = vsub.f32 %v3053, %v3284
    %3286 = vmatpush1.msra.mxu0 %v3285
    %3287 = vmatprep.subr.mxu0 0.0
    %v3288 = vand.u32 %v3052, 4294901760
    %v3289 = vsub.f32 %v3052, %v3288
    %3290 = vmatpush1.msra.mxu0 %v3289
    %3291 = vmatprep.subr.mxu0 0.0
    %v3292 = vand.u32 %v3051, 4294901760
    %v3293 = vsub.f32 %v3051, %v3292
    %3294 = vmatpush1.msra.mxu0 %v3293
    %3295 = vmatprep.subr.mxu0 0.0
    %v3296 = vand.u32 %v3050, 4294901760
    %v3297 = vsub.f32 %v3050, %v3296
    %3298 = vmatpush1.msra.mxu0 %v3297
    %3299 = vmatprep.subr.mxu0 0.0
    %v3300 = vand.u32 %v3049, 4294901760
    %v3301 = vsub.f32 %v3049, %v3300
    %3302 = vmatpush1.msra.mxu0 %v3301
    %3303 = vmatprep.subr.mxu0 0.0
    %3304 = vmatpush2.msra.mxu0 0.0
    %3305 = vmatprep.subr.mxu0 0.0
    %3306 = vmatpush2.msra.mxu0 0.0
    %3307 = vmatprep.subr.mxu0 0.0
    %3308 = vmatpush2.msra.mxu0 0.0
    %3309 = vmatprep.subr.mxu0 0.0
    %3310 = vmatpush2.msra.mxu0 0.0
    %3311 = vmatprep.subr.mxu0 0.0
    %3312 = vmatpush2.msra.mxu0 0.0
    %3313 = vmatprep.subr.mxu0 0.0
    %3314 = vmatpush2.msra.mxu0 0.0
    %3315 = vmatprep.subr.mxu0 0.0
    %3316 = vmatpush2.msra.mxu0 0.0
    %3317 = vmatprep.subr.mxu0 0.0
    %3318 = vmatpush2.msra.mxu0 0.0
    %3319 = vmatprep.subr.mxu0 0.0
    %3320 = vmatpush2.msra.mxu0 0.0
    %3321 = vmatprep.subr.mxu0 0.0
    %3322 = vmatpush2.msra.mxu0 0.0
    %3323 = vmatprep.subr.mxu0 0.0
    %3324 = vmatpush2.msra.mxu0 0.0
    %3325 = vmatprep.subr.mxu0 0.0
    %3326 = vmatpush2.msra.mxu0 0.0
    %3327 = vmatprep.subr.mxu0 0.0
    %3328 = vmatpush2.msra.mxu0 0.0
    %3329 = vmatprep.subr.mxu0 0.0
    %3330 = vmatpush2.msra.mxu0 0.0
    %3331 = vmatprep.subr.mxu0 0.0
    %3332 = vmatpush2.msra.mxu0 0.0
    %3333 = vmatprep.subr.mxu0 0.0
    %3334 = vmatpush2.msra.mxu0 0.0
    %3335 = vmatprep.mubr.f32.mxu0 0.0
    %v3336 = vand.u32 %v3059, 4294901760
    %v3337 = vsub.f32 %v3059, %v3336
    %3338 = vmatmul.mubr.f32.gmra.mxu0 %v3337
    %v3339 = vpop.f32.mrf.mxu0
    %v3340 = vadd.f32 %v3252, %v3339
    %v3341 = vpop.f32.mrf.mxu0
    %3342 = vdwg.mxu0
    %3343 = vmatprep.subr.mxu0 0.0
    %3344 = vmatpush1.msra.mxu0 0.0
    %3345 = vmatprep.subr.mxu0 0.0
    %3346 = vmatpush1.msra.mxu0 0.0
    %3347 = vmatprep.subr.mxu0 0.0
    %3348 = vmatpush1.msra.mxu0 0.0
    %3349 = vmatprep.subr.mxu0 0.0
    %3350 = vmatpush1.msra.mxu0 0.0
    %3351 = vmatprep.subr.mxu0 0.0
    %3352 = vmatpush1.msra.mxu0 0.0
    %3353 = vmatprep.subr.mxu0 0.0
    %3354 = vmatpush1.msra.mxu0 0.0
    %3355 = vmatprep.subr.mxu0 0.0
    %3356 = vmatpush1.msra.mxu0 0.0
    %3357 = vmatprep.subr.mxu0 0.0
    %3358 = vmatpush1.msra.mxu0 0.0
    %3359 = vmatprep.subr.mxu0 0.0
    %v3360 = vand.u32 %v3056, 4294901760
    %3361 = vmatpush1.msra.mxu0 %v3360
    %3362 = vmatprep.subr.mxu0 0.0
    %v3363 = vand.u32 %v3055, 4294901760
    %3364 = vmatpush1.msra.mxu0 %v3363
    %3365 = vmatprep.subr.mxu0 0.0
    %v3366 = vand.u32 %v3054, 4294901760
    %3367 = vmatpush1.msra.mxu0 %v3366
    %3368 = vmatprep.subr.mxu0 0.0
    %v3369 = vand.u32 %v3053, 4294901760
    %3370 = vmatpush1.msra.mxu0 %v3369
    %3371 = vmatprep.subr.mxu0 0.0
    %v3372 = vand.u32 %v3052, 4294901760
    %3373 = vmatpush1.msra.mxu0 %v3372
    %3374 = vmatprep.subr.mxu0 0.0
    %v3375 = vand.u32 %v3051, 4294901760
    %3376 = vmatpush1.msra.mxu0 %v3375
    %3377 = vmatprep.subr.mxu0 0.0
    %v3378 = vand.u32 %v3050, 4294901760
    %3379 = vmatpush1.msra.mxu0 %v3378
    %3380 = vmatprep.subr.mxu0 0.0
    %v3381 = vand.u32 %v3049, 4294901760
    %3382 = vmatpush1.msra.mxu0 %v3381
    %3383 = vmatprep.subr.mxu0 0.0
    %3384 = vmatpush2.msra.mxu0 0.0
    %3385 = vmatprep.subr.mxu0 0.0
    %3386 = vmatpush2.msra.mxu0 0.0
    %3387 = vmatprep.subr.mxu0 0.0
    %3388 = vmatpush2.msra.mxu0 0.0
    %3389 = vmatprep.subr.mxu0 0.0
    %3390 = vmatpush2.msra.mxu0 0.0
    %3391 = vmatprep.subr.mxu0 0.0
    %3392 = vmatpush2.msra.mxu0 0.0
    %3393 = vmatprep.subr.mxu0 0.0
    %3394 = vmatpush2.msra.mxu0 0.0
    %3395 = vmatprep.subr.mxu0 0.0
    %3396 = vmatpush2.msra.mxu0 0.0
    %3397 = vmatprep.subr.mxu0 0.0
    %3398 = vmatpush2.msra.mxu0 0.0
    %3399 = vmatprep.subr.mxu0 0.0
    %3400 = vmatpush2.msra.mxu0 0.0
    %3401 = vmatprep.subr.mxu0 0.0
    %3402 = vmatpush2.msra.mxu0 0.0
    %3403 = vmatprep.subr.mxu0 0.0
    %3404 = vmatpush2.msra.mxu0 0.0
    %3405 = vmatprep.subr.mxu0 0.0
    %3406 = vmatpush2.msra.mxu0 0.0
    %3407 = vmatprep.subr.mxu0 0.0
    %3408 = vmatpush2.msra.mxu0 0.0
    %3409 = vmatprep.subr.mxu0 0.0
    %3410 = vmatpush2.msra.mxu0 0.0
    %3411 = vmatprep.subr.mxu0 0.0
    %3412 = vmatpush2.msra.mxu0 0.0
    %3413 = vmatprep.subr.mxu0 0.0
    %3414 = vmatpush2.msra.mxu0 0.0
    %3415 = vmatprep.mubr.f32.mxu0 0.0
    %v3416 = vand.u32 %v3059, 4294901760
    %v3417 = vsub.f32 %v3059, %v3416
    %v3418 = vand.u32 %v3417, 4294901760
    %3419 = vmatmul.mubr.f32.gmra.mxu0 %v3418
    %v3420 = vpop.f32.mrf.mxu0
    %v3421 = vadd.f32 %v3340, %v3420
    %v3422 = vpop.f32.mrf.mxu0
    %3423 = vdwg.mxu0
    %3424 = vmatprep.subr.mxu0 0.0
    %3425 = vmatpush1.msra.mxu0 0.0
    %3426 = vmatprep.subr.mxu0 0.0
    %3427 = vmatpush1.msra.mxu0 0.0
    %3428 = vmatprep.subr.mxu0 0.0
    %3429 = vmatpush1.msra.mxu0 0.0
    %3430 = vmatprep.subr.mxu0 0.0
    %3431 = vmatpush1.msra.mxu0 0.0
    %3432 = vmatprep.subr.mxu0 0.0
    %3433 = vmatpush1.msra.mxu0 0.0
    %3434 = vmatprep.subr.mxu0 0.0
    %3435 = vmatpush1.msra.mxu0 0.0
    %3436 = vmatprep.subr.mxu0 0.0
    %3437 = vmatpush1.msra.mxu0 0.0
    %3438 = vmatprep.subr.mxu0 0.0
    %3439 = vmatpush1.msra.mxu0 0.0
    %3440 = vmatprep.subr.mxu0 0.0
    %v3441 = vand.u32 %v3056, 4294901760
    %v3442 = vsub.f32 %v3056, %v3441
    %v3443 = vand.u32 %v3442, 4294901760
    %3444 = vmatpush1.msra.mxu0 %v3443
    %3445 = vmatprep.subr.mxu0 0.0
    %v3446 = vand.u32 %v3055, 4294901760
    %v3447 = vsub.f32 %v3055, %v3446
    %v3448 = vand.u32 %v3447, 4294901760
    %3449 = vmatpush1.msra.mxu0 %v3448
    %3450 = vmatprep.subr.mxu0 0.0
    %v3451 = vand.u32 %v3054, 4294901760
    %v3452 = vsub.f32 %v3054, %v3451
    %v3453 = vand.u32 %v3452, 4294901760
    %3454 = vmatpush1.msra.mxu0 %v3453
    %3455 = vmatprep.subr.mxu0 0.0
    %v3456 = vand.u32 %v3053, 4294901760
    %v3457 = vsub.f32 %v3053, %v3456
    %v3458 = vand.u32 %v3457, 4294901760
    %3459 = vmatpush1.msra.mxu0 %v3458
    %3460 = vmatprep.subr.mxu0 0.0
    %v3461 = vand.u32 %v3052, 4294901760
    %v3462 = vsub.f32 %v3052, %v3461
    %v3463 = vand.u32 %v3462, 4294901760
    %3464 = vmatpush1.msra.mxu0 %v3463
    %3465 = vmatprep.subr.mxu0 0.0
    %v3466 = vand.u32 %v3051, 4294901760
    %v3467 = vsub.f32 %v3051, %v3466
    %v3468 = vand.u32 %v3467, 4294901760
    %3469 = vmatpush1.msra.mxu0 %v3468
    %3470 = vmatprep.subr.mxu0 0.0
    %v3471 = vand.u32 %v3050, 4294901760
    %v3472 = vsub.f32 %v3050, %v3471
    %v3473 = vand.u32 %v3472, 4294901760
    %3474 = vmatpush1.msra.mxu0 %v3473
    %3475 = vmatprep.subr.mxu0 0.0
    %v3476 = vand.u32 %v3049, 4294901760
    %v3477 = vsub.f32 %v3049, %v3476
    %v3478 = vand.u32 %v3477, 4294901760
    %3479 = vmatpush1.msra.mxu0 %v3478
    %3480 = vmatprep.subr.mxu0 0.0
    %3481 = vmatpush2.msra.mxu0 0.0
    %3482 = vmatprep.subr.mxu0 0.0
    %3483 = vmatpush2.msra.mxu0 0.0
    %3484 = vmatprep.subr.mxu0 0.0
    %3485 = vmatpush2.msra.mxu0 0.0
    %3486 = vmatprep.subr.mxu0 0.0
    %3487 = vmatpush2.msra.mxu0 0.0
    %3488 = vmatprep.subr.mxu0 0.0
    %3489 = vmatpush2.msra.mxu0 0.0
    %3490 = vmatprep.subr.mxu0 0.0
    %3491 = vmatpush2.msra.mxu0 0.0
    %3492 = vmatprep.subr.mxu0 0.0
    %3493 = vmatpush2.msra.mxu0 0.0
    %3494 = vmatprep.subr.mxu0 0.0
    %3495 = vmatpush2.msra.mxu0 0.0
    %3496 = vmatprep.subr.mxu0 0.0
    %3497 = vmatpush2.msra.mxu0 0.0
    %3498 = vmatprep.subr.mxu0 0.0
    %3499 = vmatpush2.msra.mxu0 0.0
    %3500 = vmatprep.subr.mxu0 0.0
    %3501 = vmatpush2.msra.mxu0 0.0
    %3502 = vmatprep.subr.mxu0 0.0
    %3503 = vmatpush2.msra.mxu0 0.0
    %3504 = vmatprep.subr.mxu0 0.0
    %3505 = vmatpush2.msra.mxu0 0.0
    %3506 = vmatprep.subr.mxu0 0.0
    %3507 = vmatpush2.msra.mxu0 0.0
    %3508 = vmatprep.subr.mxu0 0.0
    %3509 = vmatpush2.msra.mxu0 0.0
    %3510 = vmatprep.subr.mxu0 0.0
    %3511 = vmatpush2.msra.mxu0 0.0
    %3512 = vmatprep.mubr.f32.mxu0 0.0
    %v3513 = vand.u32 %v3059, 4294901760
    %3514 = vmatmul.mubr.f32.gmra.mxu0 %v3513
    %v3515 = vpop.f32.mrf.mxu0
    %v3516 = vadd.f32 %v3421, %v3515
    %v3517 = vpop.f32.mrf.mxu0
    %3518 = vdwg.mxu0
    %3519 = vmatprep.subr.mxu0 0.0
    %3520 = vmatpush1.msra.mxu0 0.0
    %3521 = vmatprep.subr.mxu0 0.0
    %3522 = vmatpush1.msra.mxu0 0.0
    %3523 = vmatprep.subr.mxu0 0.0
    %3524 = vmatpush1.msra.mxu0 0.0
    %3525 = vmatprep.subr.mxu0 0.0
    %3526 = vmatpush1.msra.mxu0 0.0
    %3527 = vmatprep.subr.mxu0 0.0
    %3528 = vmatpush1.msra.mxu0 0.0
    %3529 = vmatprep.subr.mxu0 0.0
    %3530 = vmatpush1.msra.mxu0 0.0
    %3531 = vmatprep.subr.mxu0 0.0
    %3532 = vmatpush1.msra.mxu0 0.0
    %3533 = vmatprep.subr.mxu0 0.0
    %3534 = vmatpush1.msra.mxu0 0.0
    %3535 = vmatprep.subr.mxu0 0.0
    %v3536 = vand.u32 %v3056, 4294901760
    %3537 = vmatpush1.msra.mxu0 %v3536
    %3538 = vmatprep.subr.mxu0 0.0
    %v3539 = vand.u32 %v3055, 4294901760
    %3540 = vmatpush1.msra.mxu0 %v3539
    %3541 = vmatprep.subr.mxu0 0.0
    %v3542 = vand.u32 %v3054, 4294901760
    %3543 = vmatpush1.msra.mxu0 %v3542
    %3544 = vmatprep.subr.mxu0 0.0
    %v3545 = vand.u32 %v3053, 4294901760
    %3546 = vmatpush1.msra.mxu0 %v3545
    %3547 = vmatprep.subr.mxu0 0.0
    %v3548 = vand.u32 %v3052, 4294901760
    %3549 = vmatpush1.msra.mxu0 %v3548
    %3550 = vmatprep.subr.mxu0 0.0
    %v3551 = vand.u32 %v3051, 4294901760
    %3552 = vmatpush1.msra.mxu0 %v3551
    %3553 = vmatprep.subr.mxu0 0.0
    %v3554 = vand.u32 %v3050, 4294901760
    %3555 = vmatpush1.msra.mxu0 %v3554
    %3556 = vmatprep.subr.mxu0 0.0
    %v3557 = vand.u32 %v3049, 4294901760
    %3558 = vmatpush1.msra.mxu0 %v3557
    %3559 = vmatprep.subr.mxu0 0.0
    %3560 = vmatpush2.msra.mxu0 0.0
    %3561 = vmatprep.subr.mxu0 0.0
    %3562 = vmatpush2.msra.mxu0 0.0
    %3563 = vmatprep.subr.mxu0 0.0
    %3564 = vmatpush2.msra.mxu0 0.0
    %3565 = vmatprep.subr.mxu0 0.0
    %3566 = vmatpush2.msra.mxu0 0.0
    %3567 = vmatprep.subr.mxu0 0.0
    %3568 = vmatpush2.msra.mxu0 0.0
    %3569 = vmatprep.subr.mxu0 0.0
    %3570 = vmatpush2.msra.mxu0 0.0
    %3571 = vmatprep.subr.mxu0 0.0
    %3572 = vmatpush2.msra.mxu0 0.0
    %3573 = vmatprep.subr.mxu0 0.0
    %3574 = vmatpush2.msra.mxu0 0.0
    %3575 = vmatprep.subr.mxu0 0.0
    %3576 = vmatpush2.msra.mxu0 0.0
    %3577 = vmatprep.subr.mxu0 0.0
    %3578 = vmatpush2.msra.mxu0 0.0
    %3579 = vmatprep.subr.mxu0 0.0
    %3580 = vmatpush2.msra.mxu0 0.0
    %3581 = vmatprep.subr.mxu0 0.0
    %3582 = vmatpush2.msra.mxu0 0.0
    %3583 = vmatprep.subr.mxu0 0.0
    %3584 = vmatpush2.msra.mxu0 0.0
    %3585 = vmatprep.subr.mxu0 0.0
    %3586 = vmatpush2.msra.mxu0 0.0
    %3587 = vmatprep.subr.mxu0 0.0
    %3588 = vmatpush2.msra.mxu0 0.0
    %3589 = vmatprep.subr.mxu0 0.0
    %3590 = vmatpush2.msra.mxu0 0.0
    %3591 = vmatprep.mubr.f32.mxu0 0.0
    %v3592 = vand.u32 %v3059, 4294901760
    %3593 = vmatmul.mubr.f32.gmra.mxu0 %v3592
    %v3594 = vpop.f32.mrf.mxu0
    %v3595 = vadd.f32 %v3516, %v3594
    %v3596 = vpop.f32.mrf.mxu0
    %3597 = vdwg.mxu0
    %3599 = vrot.lane.b32.xlu0 %v3595, 1
    %v3600 = vpop.permute.xlu0 %3599
    %v3602 = vsel %vm2234, 0.0, %v3600
    %3603 = vrot.lane.b32.xlu0 %v3595, 127
    %v3604 = vpop.permute.xlu0 %3603
    %v3606 = vsel %vm2239, %v3604, 0.0
    %v3607 = vrot.slane %v3595, 1
    %v3609 = vadd.f32 %v3602, %v3607
    %v3611 = vrot.slane %v3606, 2
    %v3613 = vadd.f32 %v3609, %v3611
    %3614 = vrot.lane.b32.xlu0 %v3595, 97
    %v3615 = vpop.permute.xlu0 %3614
    %v3617 = vsel %vm2234, 0.0, %v3615
    %3618 = vrot.lane.b32.xlu0 %v3595, 95
    %v3619 = vpop.permute.xlu0 %3618
    %v3621 = vsel %vm2239, %v3619, 0.0
    %3622 = vrot.lane.b32.xlu0 %v3607, 96
    %v3623 = vpop.permute.xlu0 %3622
    %v3625 = vadd.f32 %v3617, %v3623
    %v3627 = vrot.slane %v3621, 2
    %v3629 = vadd.f32 %v3625, %v3627
    %v3631 = vrot.slane %v3629, 7
    %v3633 = vsel %vm2246, %v3613, %v3631
    %v3634 = vstv %s1851
    %v3635 = vadd.f32 %v3633, %v3634
    %v3636 = vadd.f32 %v2229, %v3635
    %v3637 = vsel %vm1864, %v3636, 0.0
    %3638 = vadd.xlane.f32.xlu0 %v3637
    %v3639 = vpop.xlane.xlu0 %3638
    %v3640 = vmul.f32 %v3639, %v2209
    %v3641 = vsub.f32 %v3636, %v3640
    %v3642 = vmul.f32 %v3641, %v3641
    %v3643 = vsel %vm1864, %v3642, 0.0
    %3644 = vadd.xlane.f32.xlu0 %v3643
    %v3645 = vpop.xlane.xlu0 %3644
    %v3646 = vmul.f32 %v3645, %v2209
    %v3647 = vadd.f32 %v3646, 1e-05
    %v3648 = vrsqrt.pop %v3647
    %v3649 = vmul.f32 %v3641, %v3648
    %v3650 = vlaneseq
    %v3651 = vshrl.u32 %v3650, 7
    %v3652 = vsub.s32 2, %v3651
    %v3653 = vrot.slane %v2205, %v3652
    %v3654 = vmul.f32 %v3649, %v3653
    %v3655 = vlaneseq
    %v3656 = vshrl.u32 %v3655, 7
    %v3657 = vsub.s32 3, %v3656
    %v3658 = vrot.slane %v2205, %v3657
    %v3659 = vadd.f32 %v3654, %v3658
    %s3660 = sld [smem:[#allocation2 + $0x10]]
    %s3661 = sld [smem:[#allocation2 + $0x11]]
    %s3662 = sld [smem:[#allocation2 + $0x12]]
    %s3663 = sld [smem:[#allocation2 + $0x13]]
    %s3664 = sld [smem:[#allocation2 + $0x14]]
    %s3665 = sld [smem:[#allocation2 + $0x15]]
    %s3666 = sld [smem:[#allocation2 + $0x16]]
    %s3667 = sld [smem:[#allocation2 + $0x17]]
    %s3668 = sld [smem:[#allocation2 + $0x18]]
    %v3669 = vstv %s3660
    %v3670 = vmul.f32 %v3659, %v3669
    %v3671 = vstv %s3663
    %v3672 = vadd.f32 %v3670, %v3671
    %v3673 = vstv %s3661
    %v3674 = vmul.f32 %v3659, %v3673
    %v3675 = vstv %s3664
    %v3676 = vadd.f32 %v3674, %v3675
    %v3677 = vstv %s3662
    %v3678 = vmul.f32 %v3659, %v3677
    %v3679 = vstv %s3665
    %v3680 = vadd.f32 %v3678, %v3679
    %v3681 = vsel %vm1864, %v3676, -inf
    %3682 = vmax.xlane.f32.xlu0 %v3681
    %v3683 = vpop.xlane.xlu0 %3682
    %v3684 = vsel %vm1864, %v3676, inf
    %3685 = vmin.xlane.f32.xlu0 %v3684
    %v3686 = vpop.xlane.xlu0 %3685
    %vm3687 = vcmp.ge.f32.partialorder %v3672, 0.0
    %v3688 = vmul.f32 %v3672, %v3683
    %v3689 = vmul.f32 %v3672, %v3686
    %v3690 = vsel %vm3687, %v3688, %v3689
    %v3691 = vlaneseq
    %v3692 = vshrl.u32 %v3691, 7
    %v3693 = vsub.s32 0, %v3692
    %v3694 = vrot.slane %v3672, %v3693
    %3696 = vbcast.lane.b32.xlu0 %v3694, 256
    %v3697 = vpop.permute.xlu0 %3696
    %s3699 = sor.u32 256, 8
    %3700 = vbcast.lane.b32.xlu0 %v3694, %s3699
    %v3701 = vpop.permute.xlu0 %3700
    %s3703 = sor.u32 256, 16
    %3704 = vbcast.lane.b32.xlu0 %v3694, %s3703
    %v3705 = vpop.permute.xlu0 %3704
    %s3707 = sor.u32 256, 24
    %3708 = vbcast.lane.b32.xlu0 %v3694, %s3707
    %v3709 = vpop.permute.xlu0 %3708
    %v3710 = vlaneseq
    %v3711 = vshrl.u32 %v3710, 7
    %v3712 = vsub.s32 1, %v3711
    %v3713 = vrot.slane %v3672, %v3712
    %3715 = vbcast.lane.b32.xlu0 %v3713, 256
    %v3716 = vpop.permute.xlu0 %3715
    %s3718 = sor.u32 256, 8
    %3719 = vbcast.lane.b32.xlu0 %v3713, %s3718
    %v3720 = vpop.permute.xlu0 %3719
    %s3722 = sor.u32 256, 16
    %3723 = vbcast.lane.b32.xlu0 %v3713, %s3722
    %v3724 = vpop.permute.xlu0 %3723
    %s3726 = sor.u32 256, 24
    %3727 = vbcast.lane.b32.xlu0 %v3713, %s3726
    %v3728 = vpop.permute.xlu0 %3727
    %v3731 = vunpack.c.l.s4 1966171168
    %v3732 = vunpack.c.0.s8 %v3731
    %v3733 = vlaneseq
    %v3734 = vshrl.u32 %v3733, 7
    %v3735 = vsub.s32 %v3732, %v3734
    %v3736 = vrot.slane %v3676, %v3735
    %v3737 = vcombine.high %v3736, %v3736
    %v3739 = vunpack.c.l.s4 1966171168
    %v3740 = vunpack.c.0.s8 %v3739
    %v3741 = vlaneseq
    %v3742 = vshrl.u32 %v3741, 7
    %v3743 = vsub.s32 %v3740, %v3742
    %v3744 = vrot.slane %v3736, %v3743
    %v3746 = vunpack.c.l.s4 1966171168
    %v3747 = vunpack.c.0.s8 %v3746
    %v3748 = vlaneseq
    %v3749 = vshrl.u32 %v3748, 7
    %v3750 = vsub.s32 %v3747, %v3749
    %v3751 = vrot.slane %v3737, %v3750
    %v3752 = vlaneseq
    %v3753 = vshrl.u32 %v3752, 7
    %v3754 = vsub.s32 0, %v3753
    %v3755 = vrot.slane %v3744, %v3754
    %v3756 = vlaneseq
    %v3757 = vshrl.u32 %v3756, 7
    %v3758 = vsub.s32 0, %v3757
    %v3759 = vrot.slane %v3751, %v3758
    %v3762 = vmul.f32 %v3697, %v3755
    %v3763 = vmul.f32 %v3701, %v3755
    %v3764 = vmul.f32 %v3705, %v3755
    %v3765 = vmul.f32 %v3709, %v3755
    %v3766 = vmul.f32 %v3716, %v3759
    %v3767 = vmul.f32 %v3720, %v3759
    %v3768 = vmul.f32 %v3724, %v3759
    %v3769 = vmul.f32 %v3728, %v3759
    %v3770 = vlaneseq
    %v3771 = vshrl.u32 %v3770, 7
    %v3772 = vsub.s32 0, %v3771
    %v3773 = vrot.slane %v3690, %v3772
    %3775 = vbcast.lane.b32.xlu0 %v3773, 256
    %v3776 = vpop.permute.xlu0 %3775
    %s3778 = sor.u32 256, 8
    %3779 = vbcast.lane.b32.xlu0 %v3773, %s3778
    %v3780 = vpop.permute.xlu0 %3779
    %s3782 = sor.u32 256, 16
    %3783 = vbcast.lane.b32.xlu0 %v3773, %s3782
    %v3784 = vpop.permute.xlu0 %3783
    %s3786 = sor.u32 256, 24
    %3787 = vbcast.lane.b32.xlu0 %v3773, %s3786
    %v3788 = vpop.permute.xlu0 %3787
    %v3789 = vlaneseq
    %v3790 = vshrl.u32 %v3789, 7
    %v3791 = vsub.s32 1, %v3790
    %v3792 = vrot.slane %v3690, %v3791
    %3794 = vbcast.lane.b32.xlu0 %v3792, 256
    %v3795 = vpop.permute.xlu0 %3794
    %s3797 = sor.u32 256, 8
    %3798 = vbcast.lane.b32.xlu0 %v3792, %s3797
    %v3799 = vpop.permute.xlu0 %3798
    %s3801 = sor.u32 256, 16
    %3802 = vbcast.lane.b32.xlu0 %v3792, %s3801
    %v3803 = vpop.permute.xlu0 %3802
    %s3805 = sor.u32 256, 24
    %3806 = vbcast.lane.b32.xlu0 %v3792, %s3805
    %v3807 = vpop.permute.xlu0 %3806
    %v3808 = vsub.f32 %v3762, %v3776
    %v3809 = vsub.f32 %v3763, %v3780
    %v3810 = vsub.f32 %v3764, %v3784
    %v3811 = vsub.f32 %v3765, %v3788
    %v3812 = vsub.f32 %v3766, %v3795
    %v3813 = vsub.f32 %v3767, %v3799
    %v3814 = vsub.f32 %v3768, %v3803
    %v3815 = vsub.f32 %v3769, %v3807
    %v3816 = vmul.f32 %v3808, 1.442695
    %v3817 = vpow.pop %v3816
    %v3818 = vmul.f32 %v3809, 1.442695
    %v3819 = vpow.pop %v3818
    %v3820 = vmul.f32 %v3810, 1.442695
    %v3821 = vpow.pop %v3820
    %v3822 = vmul.f32 %v3811, 1.442695
    %v3823 = vpow.pop %v3822
    %v3824 = vmul.f32 %v3812, 1.442695
    %v3825 = vpow.pop %v3824
    %v3826 = vmul.f32 %v3813, 1.442695
    %v3827 = vpow.pop %v3826
    %v3828 = vmul.f32 %v3814, 1.442695
    %v3829 = vpow.pop %v3828
    %v3830 = vmul.f32 %v3815, 1.442695
    %v3831 = vpow.pop %v3830
    %v3832 = vsel %vm1315, %v3817, 0.0
    %3833 = vadd.xlane.f32.xlu0 %v3832
    %v3834 = vpop.xlane.xlu0 %3833
    %v3835 = vsel %vm1315, %v3819, 0.0
    %3836 = vadd.xlane.f32.xlu0 %v3835
    %v3837 = vpop.xlane.xlu0 %3836
    %v3838 = vsel %vm1315, %v3821, 0.0
    %3839 = vadd.xlane.f32.xlu0 %v3838
    %v3840 = vpop.xlane.xlu0 %3839
    %v3841 = vsel %vm1315, %v3823, 0.0
    %3842 = vadd.xlane.f32.xlu0 %v3841
    %v3843 = vpop.xlane.xlu0 %3842
    %v3844 = vsel %vm1315, %v3825, 0.0
    %3845 = vadd.xlane.f32.xlu0 %v3844
    %v3846 = vpop.xlane.xlu0 %3845
    %v3847 = vsel %vm1315, %v3827, 0.0
    %3848 = vadd.xlane.f32.xlu0 %v3847
    %v3849 = vpop.xlane.xlu0 %3848
    %v3850 = vsel %vm1315, %v3829, 0.0
    %3851 = vadd.xlane.f32.xlu0 %v3850
    %v3852 = vpop.xlane.xlu0 %3851
    %v3853 = vsel %vm1315, %v3831, 0.0
    %3854 = vadd.xlane.f32.xlu0 %v3853
    %v3855 = vpop.xlane.xlu0 %3854
    %v3858 = vunpack.c.l.s4 1966171168
    %v3859 = vunpack.c.0.s8 %v3858
    %v3860 = vlaneseq
    %v3861 = vshrl.u32 %v3860, 7
    %v3862 = vsub.s32 %v3859, %v3861
    %v3863 = vrot.slane %v3680, %v3862
    %v3864 = vcombine.high %v3863, %v3863
    %v3866 = vunpack.c.l.s4 1966171168
    %v3867 = vunpack.c.0.s8 %v3866
    %v3868 = vlaneseq
    %v3869 = vshrl.u32 %v3868, 7
    %v3870 = vsub.s32 %v3867, %v3869
    %v3871 = vrot.slane %v3863, %v3870
    %v3873 = vunpack.c.l.s4 1966171168
    %v3874 = vunpack.c.0.s8 %v3873
    %v3875 = vlaneseq
    %v3876 = vshrl.u32 %v3875, 7
    %v3877 = vsub.s32 %v3874, %v3876
    %v3878 = vrot.slane %v3864, %v3877
    %v3879 = vlaneseq
    %v3880 = vshrl.u32 %v3879, 7
    %v3881 = vsub.s32 0, %v3880
    %v3882 = vrot.slane %v3871, %v3881
    %v3883 = vlaneseq
    %v3884 = vshrl.u32 %v3883, 7
    %v3885 = vsub.s32 0, %v3884
    %v3886 = vrot.slane %v3878, %v3885
    %v3889 = vmul.f32 %v3817, %v3882
    %v3890 = vmul.f32 %v3819, %v3882
    %v3891 = vmul.f32 %v3821, %v3882
    %v3892 = vmul.f32 %v3823, %v3882
    %v3893 = vmul.f32 %v3825, %v3886
    %v3894 = vmul.f32 %v3827, %v3886
    %v3895 = vmul.f32 %v3829, %v3886
    %v3896 = vmul.f32 %v3831, %v3886
    %v3897 = vsel %vm1315, %v3889, 0.0
    %3898 = vadd.xlane.f32.xlu0 %v3897
    %v3899 = vpop.xlane.xlu0 %3898
    %v3900 = vsel %vm1315, %v3890, 0.0
    %3901 = vadd.xlane.f32.xlu0 %v3900
    %v3902 = vpop.xlane.xlu0 %3901
    %v3903 = vsel %vm1315, %v3891, 0.0
    %3904 = vadd.xlane.f32.xlu0 %v3903
    %v3905 = vpop.xlane.xlu0 %3904
    %v3906 = vsel %vm1315, %v3892, 0.0
    %3907 = vadd.xlane.f32.xlu0 %v3906
    %v3908 = vpop.xlane.xlu0 %3907
    %v3909 = vsel %vm1315, %v3893, 0.0
    %3910 = vadd.xlane.f32.xlu0 %v3909
    %v3911 = vpop.xlane.xlu0 %3910
    %v3912 = vsel %vm1315, %v3894, 0.0
    %3913 = vadd.xlane.f32.xlu0 %v3912
    %v3914 = vpop.xlane.xlu0 %3913
    %v3915 = vsel %vm1315, %v3895, 0.0
    %3916 = vadd.xlane.f32.xlu0 %v3915
    %v3917 = vpop.xlane.xlu0 %3916
    %v3918 = vsel %vm1315, %v3896, 0.0
    %3919 = vadd.xlane.f32.xlu0 %v3918
    %v3920 = vpop.xlane.xlu0 %3919
    %v3921 = vrcp.pop %v3834
    %v3922 = vmul.f32 %v3899, %v3921
    %v3923 = vrcp.pop %v3837
    %v3924 = vmul.f32 %v3902, %v3923
    %v3925 = vrcp.pop %v3840
    %v3926 = vmul.f32 %v3905, %v3925
    %v3927 = vrcp.pop %v3843
    %v3928 = vmul.f32 %v3908, %v3927
    %v3929 = vrcp.pop %v3846
    %v3930 = vmul.f32 %v3911, %v3929
    %v3931 = vrcp.pop %v3849
    %v3932 = vmul.f32 %v3914, %v3931
    %v3933 = vrcp.pop %v3852
    %v3934 = vmul.f32 %v3917, %v3933
    %v3935 = vrcp.pop %v3855
    %v3936 = vmul.f32 %v3920, %v3935
    %v3937 = vstv %s3666
    %v3938 = vmul.f32 %v3922, %v3937
    %v3939 = vmul.f32 %v3924, %v3937
    %v3940 = vmul.f32 %v3926, %v3937
    %v3941 = vmul.f32 %v3928, %v3937
    %v3942 = vmul.f32 %v3930, %v3937
    %v3943 = vmul.f32 %v3932, %v3937
    %v3944 = vmul.f32 %v3934, %v3937
    %v3945 = vmul.f32 %v3936, %v3937
    %v3946 = vstv %s3667
    %v3947 = vadd.f32 %v3938, %v3946
    %v3948 = vadd.f32 %v3939, %v3946
    %v3949 = vadd.f32 %v3940, %v3946
    %v3950 = vadd.f32 %v3941, %v3946
    %v3951 = vadd.f32 %v3942, %v3946
    %v3952 = vadd.f32 %v3943, %v3946
    %v3953 = vadd.f32 %v3944, %v3946
    %v3954 = vadd.f32 %v3945, %v3946
    %v3955 = vmul.f32 %v3947, 2.0
    %v3956 = vmul.f32 %v3948, 2.0
    %v3957 = vmul.f32 %v3949, 2.0
    %v3958 = vmul.f32 %v3950, 2.0
    %v3959 = vmul.f32 %v3951, 2.0
    %v3960 = vmul.f32 %v3952, 2.0
    %v3961 = vmul.f32 %v3953, 2.0
    %v3962 = vmul.f32 %v3954, 2.0
    %v3971 = vlaneseq
    %v3972 = vshrl.u32 %v3971, 7
    %v3973 = vsub.s32 %v2156, %v3972
    %v3974 = vrot.slane %v3955, %v3973
    %v3975 = vlaneseq
    %v3976 = vshrl.u32 %v3975, 7
    %v3977 = vsub.s32 %v2161, %v3976
    %v3978 = vrot.slane %v3956, %v3977
    %v3979 = vsel %vm2166, %v3978, %v3974
    %v3980 = vlaneseq
    %v3981 = vshrl.u32 %v3980, 7
    %v3982 = vsub.s32 %v2168, %v3981
    %v3983 = vrot.slane %v3957, %v3982
    %v3984 = vsel %vm2173, %v3983, %v3979
    %v3985 = vlaneseq
    %v3986 = vshrl.u32 %v3985, 7
    %v3987 = vsub.s32 %v2175, %v3986
    %v3988 = vrot.slane %v3958, %v3987
    %v3989 = vsel %vm2180, %v3988, %v3984
    %v3990 = vlaneseq
    %v3991 = vshrl.u32 %v3990, 7
    %v3992 = vsub.s32 %v2156, %v3991
    %v3993 = vrot.slane %v3959, %v3992
    %v3994 = vlaneseq
    %v3995 = vshrl.u32 %v3994, 7
    %v3996 = vsub.s32 %v2161, %v3995
    %v3997 = vrot.slane %v3960, %v3996
    %v3998 = vsel %vm2166, %v3997, %v3993
    %v3999 = vlaneseq
    %v4000 = vshrl.u32 %v3999, 7
    %v4001 = vsub.s32 %v2168, %v4000
    %v4002 = vrot.slane %v3961, %v4001
    %v4003 = vsel %vm2173, %v4002, %v3998
    %v4004 = vlaneseq
    %v4005 = vshrl.u32 %v4004, 7
    %v4006 = vsub.s32 %v2175, %v4005
    %v4007 = vrot.slane %v3962, %v4006
    %v4008 = vsel %vm2180, %v4007, %v4003
    %v4009 = vsel %vm2201, %v4008, %v3989
    %v4011 = vadd.f32 %v3659, %v4009
    %v4012 = vld [vmem:[#allocation6 + $0x138] sm:$0xf]
    %v4013 = vsel %vm1864, %v4011, 0.0
    %4014 = vadd.xlane.f32.xlu0 %v4013
    %v4015 = vpop.xlane.xlu0 %4014
    %v4016 = vmul.f32 %v4015, %v2209
    %v4017 = vsub.f32 %v4011, %v4016
    %v4018 = vmul.f32 %v4017, %v4017
    %v4019 = vsel %vm1864, %v4018, 0.0
    %4020 = vadd.xlane.f32.xlu0 %v4019
    %v4021 = vpop.xlane.xlu0 %4020
    %v4022 = vmul.f32 %v4021, %v2209
    %v4023 = vadd.f32 %v4022, 1e-05
    %v4024 = vrsqrt.pop %v4023
    %v4025 = vmul.f32 %v4017, %v4024
    %v4026 = vlaneseq
    %v4027 = vshrl.u32 %v4026, 7
    %v4028 = vsub.s32 0, %v4027
    %v4029 = vrot.slane %v4012, %v4028
    %v4030 = vmul.f32 %v4025, %v4029
    %v4031 = vlaneseq
    %v4032 = vshrl.u32 %v4031, 7
    %v4033 = vsub.s32 1, %v4032
    %v4034 = vrot.slane %v4012, %v4033
    %v4035 = vadd.f32 %v4030, %v4034
    %4037 = vrot.lane.b32.xlu0 %v4035, 1
    %v4038 = vpop.permute.xlu0 %4037
    %v4040 = vsel %vm2234, 0.0, %v4038
    %4041 = vrot.lane.b32.xlu0 %v4035, 127
    %v4042 = vpop.permute.xlu0 %4041
    %v4044 = vsel %vm2239, %v4042, 0.0
    %v4045 = vrot.slane %v4035, 7
    %v4048 = vrot.slane %v4044, 6
    %v4050 = vsel %vm2246, %v4040, %v4045
    %v4051 = vsel %vm2248, %v4050, %v4048
    %v4052 = vsel %vm2250, %v4051, 1.0
    %v4054 = vrot.slane %v4040, 1
    %v4056 = vrot.slane %v4044, 7
    %v4058 = vsel %vm2246, %v4054, %v4035
    %v4059 = vsel %vm2248, %v4058, %v4056
    %v4060 = vsel %vm2250, %v4059, 1.0
    %4062 = vrot.lane.b32.xlu0 %v4060, 32
    %v4063 = vpop.permute.xlu0 %4062
    %v4065 = vsel %vm1315, %v4052, %v4063
    %v4066 = vld [vmem:[#allocation6 + $0xe0] sm:$0xff]
    %v4067 = vld [vmem:[#allocation6 + $0xe8] sm:$0xff]
    %v4068 = vld [vmem:[#allocation6 + $0xf0] sm:$0xff]
    %v4069 = vld [vmem:[#allocation6 + $0xf8] sm:$0xff]
    %v4070 = vld [vmem:[#allocation6 + $0x100] sm:$0xff]
    %v4071 = vld [vmem:[#allocation6 + $0x108] sm:$0xff]
    %v4072 = vld [vmem:[#allocation6 + $0x110] sm:$0xff]
    %v4073 = vld [vmem:[#allocation6 + $0x118] sm:$0xff]
    %v4075 = vsel %vm2273, %v4066, 0
    %v4078 = vsel %vm2273, %v4067, 0
    %v4081 = vsel %vm2273, %v4068, 0
    %v4084 = vsel %vm2273, %v4069, 0
    %v4087 = vsel %vm2273, %v4070, 0
    %v4090 = vsel %vm2273, %v4071, 0
    %v4093 = vsel %vm2273, %v4072, 0
    %v4096 = vsel %vm2273, %v4073, 0
    %v4099 = vsel %vm2298, %v4065, 0
    %4101 = vmatprep.subr.mxu0 0.0
    %4102 = vmatpush1.msra.mxu0 0.0
    %4103 = vmatprep.subr.mxu0 0.0
    %4104 = vmatpush1.msra.mxu0 0.0
    %4105 = vmatprep.subr.mxu0 0.0
    %4106 = vmatpush1.msra.mxu0 0.0
    %4107 = vmatprep.subr.mxu0 0.0
    %4108 = vmatpush1.msra.mxu0 0.0
    %4109 = vmatprep.subr.mxu0 0.0
    %4110 = vmatpush1.msra.mxu0 0.0
    %4111 = vmatprep.subr.mxu0 0.0
    %4112 = vmatpush1.msra.mxu0 0.0
    %4113 = vmatprep.subr.mxu0 0.0
    %4114 = vmatpush1.msra.mxu0 0.0
    %4115 = vmatprep.subr.mxu0 0.0
    %4116 = vmatpush1.msra.mxu0 0.0
    %4117 = vmatprep.subr.mxu0 0.0
    %4118 = vmatpush1.msra.mxu0 0.0
    %4119 = vmatprep.subr.mxu0 0.0
    %4120 = vmatpush1.msra.mxu0 0.0
    %4121 = vmatprep.subr.mxu0 0.0
    %4122 = vmatpush1.msra.mxu0 0.0
    %4123 = vmatprep.subr.mxu0 0.0
    %4124 = vmatpush1.msra.mxu0 0.0
    %4125 = vmatprep.subr.mxu0 0.0
    %4126 = vmatpush1.msra.mxu0 0.0
    %4127 = vmatprep.subr.mxu0 0.0
    %4128 = vmatpush1.msra.mxu0 0.0
    %4129 = vmatprep.subr.mxu0 0.0
    %4130 = vmatpush1.msra.mxu0 0.0
    %4131 = vmatprep.subr.mxu0 0.0
    %v4132 = vand.u32 %v4099, 4294901760
    %4133 = vmatpush1.msra.mxu0 %v4132
    %4134 = vmatprep.subr.mxu0 0.0
    %4135 = vmatpush2.msra.mxu0 0.0
    %4136 = vmatprep.subr.mxu0 0.0
    %4137 = vmatpush2.msra.mxu0 0.0
    %4138 = vmatprep.subr.mxu0 0.0
    %4139 = vmatpush2.msra.mxu0 0.0
    %4140 = vmatprep.subr.mxu0 0.0
    %4141 = vmatpush2.msra.mxu0 0.0
    %4142 = vmatprep.subr.mxu0 0.0
    %4143 = vmatpush2.msra.mxu0 0.0
    %4144 = vmatprep.subr.mxu0 0.0
    %4145 = vmatpush2.msra.mxu0 0.0
    %4146 = vmatprep.subr.mxu0 0.0
    %4147 = vmatpush2.msra.mxu0 0.0
    %4148 = vmatprep.subr.mxu0 0.0
    %4149 = vmatpush2.msra.mxu0 0.0
    %4150 = vmatprep.subr.mxu0 0.0
    %4151 = vmatpush2.msra.mxu0 0.0
    %4152 = vmatprep.subr.mxu0 0.0
    %4153 = vmatpush2.msra.mxu0 0.0
    %4154 = vmatprep.subr.mxu0 0.0
    %4155 = vmatpush2.msra.mxu0 0.0
    %4156 = vmatprep.subr.mxu0 0.0
    %4157 = vmatpush2.msra.mxu0 0.0
    %4158 = vmatprep.subr.mxu0 0.0
    %4159 = vmatpush2.msra.mxu0 0.0
    %4160 = vmatprep.subr.mxu0 0.0
    %4161 = vmatpush2.msra.mxu0 0.0
    %4162 = vmatprep.subr.mxu0 0.0
    %4163 = vmatpush2.msra.mxu0 0.0
    %4164 = vmatprep.subr.mxu0 0.0
    %4165 = vmatpush2.msra.mxu0 0.0
    %4166 = vmatprep.mubr.f32.mxu0 0.0
    %v4167 = vand.u32 %v4075, 4294901760
    %v4168 = vsub.f32 %v4075, %v4167
    %v4169 = vand.u32 %v4168, 4294901760
    %v4170 = vsub.f32 %v4168, %v4169
    %v4171 = vand.u32 %v4170, 4294901760
    %4172 = vmatmul.mubr.f32.gmra.mxu0 %v4171
    %v4173 = vpop.f32.mrf.mxu0
    %v4174 = vadd.f32 0.0, %v4173
    %v4175 = vpop.f32.mrf.mxu0
    %4176 = vmatprep.mubr.f32.mxu0 0.0
    %v4177 = vand.u32 %v4078, 4294901760
    %v4178 = vsub.f32 %v4078, %v4177
    %v4179 = vand.u32 %v4178, 4294901760
    %v4180 = vsub.f32 %v4178, %v4179
    %v4181 = vand.u32 %v4180, 4294901760
    %4182 = vmatmul.mubr.f32.gmra.mxu0 %v4181
    %v4183 = vpop.f32.mrf.mxu0
    %v4184 = vadd.f32 0.0, %v4183
    %v4185 = vpop.f32.mrf.mxu0
    %4186 = vmatprep.mubr.f32.mxu0 0.0
    %v4187 = vand.u32 %v4081, 4294901760
    %v4188 = vsub.f32 %v4081, %v4187
    %v4189 = vand.u32 %v4188, 4294901760
    %v4190 = vsub.f32 %v4188, %v4189
    %v4191 = vand.u32 %v4190, 4294901760
    %4192 = vmatmul.mubr.f32.gmra.mxu0 %v4191
    %v4193 = vpop.f32.mrf.mxu0
    %v4194 = vadd.f32 0.0, %v4193
    %v4195 = vpop.f32.mrf.mxu0
    %4196 = vmatprep.mubr.f32.mxu0 0.0
    %v4197 = vand.u32 %v4084, 4294901760
    %v4198 = vsub.f32 %v4084, %v4197
    %v4199 = vand.u32 %v4198, 4294901760
    %v4200 = vsub.f32 %v4198, %v4199
    %v4201 = vand.u32 %v4200, 4294901760
    %4202 = vmatmul.mubr.f32.gmra.mxu0 %v4201
    %v4203 = vpop.f32.mrf.mxu0
    %v4204 = vadd.f32 0.0, %v4203
    %v4205 = vpop.f32.mrf.mxu0
    %4206 = vmatprep.mubr.f32.mxu0 0.0
    %v4207 = vand.u32 %v4087, 4294901760
    %v4208 = vsub.f32 %v4087, %v4207
    %v4209 = vand.u32 %v4208, 4294901760
    %v4210 = vsub.f32 %v4208, %v4209
    %v4211 = vand.u32 %v4210, 4294901760
    %4212 = vmatmul.mubr.f32.gmra.mxu0 %v4211
    %v4213 = vpop.f32.mrf.mxu0
    %v4214 = vadd.f32 0.0, %v4213
    %v4215 = vpop.f32.mrf.mxu0
    %4216 = vmatprep.mubr.f32.mxu0 0.0
    %v4217 = vand.u32 %v4090, 4294901760
    %v4218 = vsub.f32 %v4090, %v4217
    %v4219 = vand.u32 %v4218, 4294901760
    %v4220 = vsub.f32 %v4218, %v4219
    %v4221 = vand.u32 %v4220, 4294901760
    %4222 = vmatmul.mubr.f32.gmra.mxu0 %v4221
    %v4223 = vpop.f32.mrf.mxu0
    %v4224 = vadd.f32 0.0, %v4223
    %v4225 = vpop.f32.mrf.mxu0
    %4226 = vmatprep.mubr.f32.mxu0 0.0
    %v4227 = vand.u32 %v4093, 4294901760
    %v4228 = vsub.f32 %v4093, %v4227
    %v4229 = vand.u32 %v4228, 4294901760
    %v4230 = vsub.f32 %v4228, %v4229
    %v4231 = vand.u32 %v4230, 4294901760
    %4232 = vmatmul.mubr.f32.gmra.mxu0 %v4231
    %v4233 = vpop.f32.mrf.mxu0
    %v4234 = vadd.f32 0.0, %v4233
    %v4235 = vpop.f32.mrf.mxu0
    %4236 = vmatprep.mubr.f32.mxu0 0.0
    %v4237 = vand.u32 %v4096, 4294901760
    %v4238 = vsub.f32 %v4096, %v4237
    %v4239 = vand.u32 %v4238, 4294901760
    %v4240 = vsub.f32 %v4238, %v4239
    %v4241 = vand.u32 %v4240, 4294901760
    %4242 = vmatmul.mubr.f32.gmra.mxu0 %v4241
    %v4243 = vpop.f32.mrf.mxu0
    %v4244 = vadd.f32 0.0, %v4243
    %v4245 = vpop.f32.mrf.mxu0
    %4246 = vdwg.mxu0
    %4247 = vmatprep.subr.mxu0 0.0
    %4248 = vmatpush1.msra.mxu0 0.0
    %4249 = vmatprep.subr.mxu0 0.0
    %4250 = vmatpush1.msra.mxu0 0.0
    %4251 = vmatprep.subr.mxu0 0.0
    %4252 = vmatpush1.msra.mxu0 0.0
    %4253 = vmatprep.subr.mxu0 0.0
    %4254 = vmatpush1.msra.mxu0 0.0
    %4255 = vmatprep.subr.mxu0 0.0
    %4256 = vmatpush1.msra.mxu0 0.0
    %4257 = vmatprep.subr.mxu0 0.0
    %4258 = vmatpush1.msra.mxu0 0.0
    %4259 = vmatprep.subr.mxu0 0.0
    %4260 = vmatpush1.msra.mxu0 0.0
    %4261 = vmatprep.subr.mxu0 0.0
    %4262 = vmatpush1.msra.mxu0 0.0
    %4263 = vmatprep.subr.mxu0 0.0
    %4264 = vmatpush1.msra.mxu0 0.0
    %4265 = vmatprep.subr.mxu0 0.0
    %4266 = vmatpush1.msra.mxu0 0.0
    %4267 = vmatprep.subr.mxu0 0.0
    %4268 = vmatpush1.msra.mxu0 0.0
    %4269 = vmatprep.subr.mxu0 0.0
    %4270 = vmatpush1.msra.mxu0 0.0
    %4271 = vmatprep.subr.mxu0 0.0
    %4272 = vmatpush1.msra.mxu0 0.0
    %4273 = vmatprep.subr.mxu0 0.0
    %4274 = vmatpush1.msra.mxu0 0.0
    %4275 = vmatprep.subr.mxu0 0.0
    %4276 = vmatpush1.msra.mxu0 0.0
    %4277 = vmatprep.subr.mxu0 0.0
    %v4278 = vand.u32 %v4099, 4294901760
    %v4279 = vsub.f32 %v4099, %v4278
    %v4280 = vand.u32 %v4279, 4294901760
    %v4281 = vsub.f32 %v4279, %v4280
    %v4282 = vand.u32 %v4281, 4294901760
    %4283 = vmatpush1.msra.mxu0 %v4282
    %4284 = vmatprep.subr.mxu0 0.0
    %4285 = vmatpush2.msra.mxu0 0.0
    %4286 = vmatprep.subr.mxu0 0.0
    %4287 = vmatpush2.msra.mxu0 0.0
    %4288 = vmatprep.subr.mxu0 0.0
    %4289 = vmatpush2.msra.mxu0 0.0
    %4290 = vmatprep.subr.mxu0 0.0
    %4291 = vmatpush2.msra.mxu0 0.0
    %4292 = vmatprep.subr.mxu0 0.0
    %4293 = vmatpush2.msra.mxu0 0.0
    %4294 = vmatprep.subr.mxu0 0.0
    %4295 = vmatpush2.msra.mxu0 0.0
    %4296 = vmatprep.subr.mxu0 0.0
    %4297 = vmatpush2.msra.mxu0 0.0
    %4298 = vmatprep.subr.mxu0 0.0
    %4299 = vmatpush2.msra.mxu0 0.0
    %4300 = vmatprep.subr.mxu0 0.0
    %4301 = vmatpush2.msra.mxu0 0.0
    %4302 = vmatprep.subr.mxu0 0.0
    %4303 = vmatpush2.msra.mxu0 0.0
    %4304 = vmatprep.subr.mxu0 0.0
    %4305 = vmatpush2.msra.mxu0 0.0
    %4306 = vmatprep.subr.mxu0 0.0
    %4307 = vmatpush2.msra.mxu0 0.0
    %4308 = vmatprep.subr.mxu0 0.0
    %4309 = vmatpush2.msra.mxu0 0.0
    %4310 = vmatprep.subr.mxu0 0.0
    %4311 = vmatpush2.msra.mxu0 0.0
    %4312 = vmatprep.subr.mxu0 0.0
    %4313 = vmatpush2.msra.mxu0 0.0
    %4314 = vmatprep.subr.mxu0 0.0
    %4315 = vmatpush2.msra.mxu0 0.0
    %4316 = vmatprep.mubr.f32.mxu0 0.0
    %v4317 = vand.u32 %v4075, 4294901760
    %4318 = vmatmul.mubr.f32.gmra.mxu0 %v4317
    %v4319 = vpop.f32.mrf.mxu0
    %v4320 = vadd.f32 %v4174, %v4319
    %v4321 = vpop.f32.mrf.mxu0
    %4322 = vmatprep.mubr.f32.mxu0 0.0
    %v4323 = vand.u32 %v4078, 4294901760
    %4324 = vmatmul.mubr.f32.gmra.mxu0 %v4323
    %v4325 = vpop.f32.mrf.mxu0
    %v4326 = vadd.f32 %v4184, %v4325
    %v4327 = vpop.f32.mrf.mxu0
    %4328 = vmatprep.mubr.f32.mxu0 0.0
    %v4329 = vand.u32 %v4081, 4294901760
    %4330 = vmatmul.mubr.f32.gmra.mxu0 %v4329
    %v4331 = vpop.f32.mrf.mxu0
    %v4332 = vadd.f32 %v4194, %v4331
    %v4333 = vpop.f32.mrf.mxu0
    %4334 = vmatprep.mubr.f32.mxu0 0.0
    %v4335 = vand.u32 %v4084, 4294901760
    %4336 = vmatmul.mubr.f32.gmra.mxu0 %v4335
    %v4337 = vpop.f32.mrf.mxu0
    %v4338 = vadd.f32 %v4204, %v4337
    %v4339 = vpop.f32.mrf.mxu0
    %4340 = vmatprep.mubr.f32.mxu0 0.0
    %v4341 = vand.u32 %v4087, 4294901760
    %4342 = vmatmul.mubr.f32.gmra.mxu0 %v4341
    %v4343 = vpop.f32.mrf.mxu0
    %v4344 = vadd.f32 %v4214, %v4343
    %v4345 = vpop.f32.mrf.mxu0
    %4346 = vmatprep.mubr.f32.mxu0 0.0
    %v4347 = vand.u32 %v4090, 4294901760
    %4348 = vmatmul.mubr.f32.gmra.mxu0 %v4347
    %v4349 = vpop.f32.mrf.mxu0
    %v4350 = vadd.f32 %v4224, %v4349
    %v4351 = vpop.f32.mrf.mxu0
    %4352 = vmatprep.mubr.f32.mxu0 0.0
    %v4353 = vand.u32 %v4093, 4294901760
    %4354 = vmatmul.mubr.f32.gmra.mxu0 %v4353
    %v4355 = vpop.f32.mrf.mxu0
    %v4356 = vadd.f32 %v4234, %v4355
    %v4357 = vpop.f32.mrf.mxu0
    %4358 = vmatprep.mubr.f32.mxu0 0.0
    %v4359 = vand.u32 %v4096, 4294901760
    %4360 = vmatmul.mubr.f32.gmra.mxu0 %v4359
    %v4361 = vpop.f32.mrf.mxu0
    %v4362 = vadd.f32 %v4244, %v4361
    %v4363 = vpop.f32.mrf.mxu0
    %4364 = vdwg.mxu0
    %4365 = vmatprep.subr.mxu0 0.0
    %4366 = vmatpush1.msra.mxu0 0.0
    %4367 = vmatprep.subr.mxu0 0.0
    %4368 = vmatpush1.msra.mxu0 0.0
    %4369 = vmatprep.subr.mxu0 0.0
    %4370 = vmatpush1.msra.mxu0 0.0
    %4371 = vmatprep.subr.mxu0 0.0
    %4372 = vmatpush1.msra.mxu0 0.0
    %4373 = vmatprep.subr.mxu0 0.0
    %4374 = vmatpush1.msra.mxu0 0.0
    %4375 = vmatprep.subr.mxu0 0.0
    %4376 = vmatpush1.msra.mxu0 0.0
    %4377 = vmatprep.subr.mxu0 0.0
    %4378 = vmatpush1.msra.mxu0 0.0
    %4379 = vmatprep.subr.mxu0 0.0
    %4380 = vmatpush1.msra.mxu0 0.0
    %4381 = vmatprep.subr.mxu0 0.0
    %4382 = vmatpush1.msra.mxu0 0.0
    %4383 = vmatprep.subr.mxu0 0.0
    %4384 = vmatpush1.msra.mxu0 0.0
    %4385 = vmatprep.subr.mxu0 0.0
    %4386 = vmatpush1.msra.mxu0 0.0
    %4387 = vmatprep.subr.mxu0 0.0
    %4388 = vmatpush1.msra.mxu0 0.0
    %4389 = vmatprep.subr.mxu0 0.0
    %4390 = vmatpush1.msra.mxu0 0.0
    %4391 = vmatprep.subr.mxu0 0.0
    %4392 = vmatpush1.msra.mxu0 0.0
    %4393 = vmatprep.subr.mxu0 0.0
    %4394 = vmatpush1.msra.mxu0 0.0
    %4395 = vmatprep.subr.mxu0 0.0
    %v4396 = vand.u32 %v4099, 4294901760
    %v4397 = vsub.f32 %v4099, %v4396
    %4398 = vmatpush1.msra.mxu0 %v4397
    %4399 = vmatprep.subr.mxu0 0.0
    %4400 = vmatpush2.msra.mxu0 0.0
    %4401 = vmatprep.subr.mxu0 0.0
    %4402 = vmatpush2.msra.mxu0 0.0
    %4403 = vmatprep.subr.mxu0 0.0
    %4404 = vmatpush2.msra.mxu0 0.0
    %4405 = vmatprep.subr.mxu0 0.0
    %4406 = vmatpush2.msra.mxu0 0.0
    %4407 = vmatprep.subr.mxu0 0.0
    %4408 = vmatpush2.msra.mxu0 0.0
    %4409 = vmatprep.subr.mxu0 0.0
    %4410 = vmatpush2.msra.mxu0 0.0
    %4411 = vmatprep.subr.mxu0 0.0
    %4412 = vmatpush2.msra.mxu0 0.0
    %4413 = vmatprep.subr.mxu0 0.0
    %4414 = vmatpush2.msra.mxu0 0.0
    %4415 = vmatprep.subr.mxu0 0.0
    %4416 = vmatpush2.msra.mxu0 0.0
    %4417 = vmatprep.subr.mxu0 0.0
    %4418 = vmatpush2.msra.mxu0 0.0
    %4419 = vmatprep.subr.mxu0 0.0
    %4420 = vmatpush2.msra.mxu0 0.0
    %4421 = vmatprep.subr.mxu0 0.0
    %4422 = vmatpush2.msra.mxu0 0.0
    %4423 = vmatprep.subr.mxu0 0.0
    %4424 = vmatpush2.msra.mxu0 0.0
    %4425 = vmatprep.subr.mxu0 0.0
    %4426 = vmatpush2.msra.mxu0 0.0
    %4427 = vmatprep.subr.mxu0 0.0
    %4428 = vmatpush2.msra.mxu0 0.0
    %4429 = vmatprep.subr.mxu0 0.0
    %4430 = vmatpush2.msra.mxu0 0.0
    %4431 = vmatprep.mubr.f32.mxu0 0.0
    %v4432 = vand.u32 %v4075, 4294901760
    %v4433 = vsub.f32 %v4075, %v4432
    %4434 = vmatmul.mubr.f32.gmra.mxu0 %v4433
    %v4435 = vpop.f32.mrf.mxu0
    %v4436 = vadd.f32 %v4320, %v4435
    %v4437 = vpop.f32.mrf.mxu0
    %4438 = vmatprep.mubr.f32.mxu0 0.0
    %v4439 = vand.u32 %v4078, 4294901760
    %v4440 = vsub.f32 %v4078, %v4439
    %4441 = vmatmul.mubr.f32.gmra.mxu0 %v4440
    %v4442 = vpop.f32.mrf.mxu0
    %v4443 = vadd.f32 %v4326, %v4442
    %v4444 = vpop.f32.mrf.mxu0
    %4445 = vmatprep.mubr.f32.mxu0 0.0
    %v4446 = vand.u32 %v4081, 4294901760
    %v4447 = vsub.f32 %v4081, %v4446
    %4448 = vmatmul.mubr.f32.gmra.mxu0 %v4447
    %v4449 = vpop.f32.mrf.mxu0
    %v4450 = vadd.f32 %v4332, %v4449
    %v4451 = vpop.f32.mrf.mxu0
    %4452 = vmatprep.mubr.f32.mxu0 0.0
    %v4453 = vand.u32 %v4084, 4294901760
    %v4454 = vsub.f32 %v4084, %v4453
    %4455 = vmatmul.mubr.f32.gmra.mxu0 %v4454
    %v4456 = vpop.f32.mrf.mxu0
    %v4457 = vadd.f32 %v4338, %v4456
    %v4458 = vpop.f32.mrf.mxu0
    %4459 = vmatprep.mubr.f32.mxu0 0.0
    %v4460 = vand.u32 %v4087, 4294901760
    %v4461 = vsub.f32 %v4087, %v4460
    %4462 = vmatmul.mubr.f32.gmra.mxu0 %v4461
    %v4463 = vpop.f32.mrf.mxu0
    %v4464 = vadd.f32 %v4344, %v4463
    %v4465 = vpop.f32.mrf.mxu0
    %4466 = vmatprep.mubr.f32.mxu0 0.0
    %v4467 = vand.u32 %v4090, 4294901760
    %v4468 = vsub.f32 %v4090, %v4467
    %4469 = vmatmul.mubr.f32.gmra.mxu0 %v4468
    %v4470 = vpop.f32.mrf.mxu0
    %v4471 = vadd.f32 %v4350, %v4470
    %v4472 = vpop.f32.mrf.mxu0
    %4473 = vmatprep.mubr.f32.mxu0 0.0
    %v4474 = vand.u32 %v4093, 4294901760
    %v4475 = vsub.f32 %v4093, %v4474
    %4476 = vmatmul.mubr.f32.gmra.mxu0 %v4475
    %v4477 = vpop.f32.mrf.mxu0
    %v4478 = vadd.f32 %v4356, %v4477
    %v4479 = vpop.f32.mrf.mxu0
    %4480 = vmatprep.mubr.f32.mxu0 0.0
    %v4481 = vand.u32 %v4096, 4294901760
    %v4482 = vsub.f32 %v4096, %v4481
    %4483 = vmatmul.mubr.f32.gmra.mxu0 %v4482
    %v4484 = vpop.f32.mrf.mxu0
    %v4485 = vadd.f32 %v4362, %v4484
    %v4486 = vpop.f32.mrf.mxu0
    %4487 = vdwg.mxu0
    %4488 = vmatprep.subr.mxu0 0.0
    %4489 = vmatpush1.msra.mxu0 0.0
    %4490 = vmatprep.subr.mxu0 0.0
    %4491 = vmatpush1.msra.mxu0 0.0
    %4492 = vmatprep.subr.mxu0 0.0
    %4493 = vmatpush1.msra.mxu0 0.0
    %4494 = vmatprep.subr.mxu0 0.0
    %4495 = vmatpush1.msra.mxu0 0.0
    %4496 = vmatprep.subr.mxu0 0.0
    %4497 = vmatpush1.msra.mxu0 0.0
    %4498 = vmatprep.subr.mxu0 0.0
    %4499 = vmatpush1.msra.mxu0 0.0
    %4500 = vmatprep.subr.mxu0 0.0
    %4501 = vmatpush1.msra.mxu0 0.0
    %4502 = vmatprep.subr.mxu0 0.0
    %4503 = vmatpush1.msra.mxu0 0.0
    %4504 = vmatprep.subr.mxu0 0.0
    %4505 = vmatpush1.msra.mxu0 0.0
    %4506 = vmatprep.subr.mxu0 0.0
    %4507 = vmatpush1.msra.mxu0 0.0
    %4508 = vmatprep.subr.mxu0 0.0
    %4509 = vmatpush1.msra.mxu0 0.0
    %4510 = vmatprep.subr.mxu0 0.0
    %4511 = vmatpush1.msra.mxu0 0.0
    %4512 = vmatprep.subr.mxu0 0.0
    %4513 = vmatpush1.msra.mxu0 0.0
    %4514 = vmatprep.subr.mxu0 0.0
    %4515 = vmatpush1.msra.mxu0 0.0
    %4516 = vmatprep.subr.mxu0 0.0
    %4517 = vmatpush1.msra.mxu0 0.0
    %4518 = vmatprep.subr.mxu0 0.0
    %v4519 = vand.u32 %v4099, 4294901760
    %4520 = vmatpush1.msra.mxu0 %v4519
    %4521 = vmatprep.subr.mxu0 0.0
    %4522 = vmatpush2.msra.mxu0 0.0
    %4523 = vmatprep.subr.mxu0 0.0
    %4524 = vmatpush2.msra.mxu0 0.0
    %4525 = vmatprep.subr.mxu0 0.0
    %4526 = vmatpush2.msra.mxu0 0.0
    %4527 = vmatprep.subr.mxu0 0.0
    %4528 = vmatpush2.msra.mxu0 0.0
    %4529 = vmatprep.subr.mxu0 0.0
    %4530 = vmatpush2.msra.mxu0 0.0
    %4531 = vmatprep.subr.mxu0 0.0
    %4532 = vmatpush2.msra.mxu0 0.0
    %4533 = vmatprep.subr.mxu0 0.0
    %4534 = vmatpush2.msra.mxu0 0.0
    %4535 = vmatprep.subr.mxu0 0.0
    %4536 = vmatpush2.msra.mxu0 0.0
    %4537 = vmatprep.subr.mxu0 0.0
    %4538 = vmatpush2.msra.mxu0 0.0
    %4539 = vmatprep.subr.mxu0 0.0
    %4540 = vmatpush2.msra.mxu0 0.0
    %4541 = vmatprep.subr.mxu0 0.0
    %4542 = vmatpush2.msra.mxu0 0.0
    %4543 = vmatprep.subr.mxu0 0.0
    %4544 = vmatpush2.msra.mxu0 0.0
    %4545 = vmatprep.subr.mxu0 0.0
    %4546 = vmatpush2.msra.mxu0 0.0
    %4547 = vmatprep.subr.mxu0 0.0
    %4548 = vmatpush2.msra.mxu0 0.0
    %4549 = vmatprep.subr.mxu0 0.0
    %4550 = vmatpush2.msra.mxu0 0.0
    %4551 = vmatprep.subr.mxu0 0.0
    %4552 = vmatpush2.msra.mxu0 0.0
    %4553 = vmatprep.mubr.f32.mxu0 0.0
    %v4554 = vand.u32 %v4075, 4294901760
    %v4555 = vsub.f32 %v4075, %v4554
    %v4556 = vand.u32 %v4555, 4294901760
    %4557 = vmatmul.mubr.f32.gmra.mxu0 %v4556
    %v4558 = vpop.f32.mrf.mxu0
    %v4559 = vadd.f32 %v4436, %v4558
    %v4560 = vpop.f32.mrf.mxu0
    %4561 = vmatprep.mubr.f32.mxu0 0.0
    %v4562 = vand.u32 %v4078, 4294901760
    %v4563 = vsub.f32 %v4078, %v4562
    %v4564 = vand.u32 %v4563, 4294901760
    %4565 = vmatmul.mubr.f32.gmra.mxu0 %v4564
    %v4566 = vpop.f32.mrf.mxu0
    %v4567 = vadd.f32 %v4443, %v4566
    %v4568 = vpop.f32.mrf.mxu0
    %4569 = vmatprep.mubr.f32.mxu0 0.0
    %v4570 = vand.u32 %v4081, 4294901760
    %v4571 = vsub.f32 %v4081, %v4570
    %v4572 = vand.u32 %v4571, 4294901760
    %4573 = vmatmul.mubr.f32.gmra.mxu0 %v4572
    %v4574 = vpop.f32.mrf.mxu0
    %v4575 = vadd.f32 %v4450, %v4574
    %v4576 = vpop.f32.mrf.mxu0
    %4577 = vmatprep.mubr.f32.mxu0 0.0
    %v4578 = vand.u32 %v4084, 4294901760
    %v4579 = vsub.f32 %v4084, %v4578
    %v4580 = vand.u32 %v4579, 4294901760
    %4581 = vmatmul.mubr.f32.gmra.mxu0 %v4580
    %v4582 = vpop.f32.mrf.mxu0
    %v4583 = vadd.f32 %v4457, %v4582
    %v4584 = vpop.f32.mrf.mxu0
    %4585 = vmatprep.mubr.f32.mxu0 0.0
    %v4586 = vand.u32 %v4087, 4294901760
    %v4587 = vsub.f32 %v4087, %v4586
    %v4588 = vand.u32 %v4587, 4294901760
    %4589 = vmatmul.mubr.f32.gmra.mxu0 %v4588
    %v4590 = vpop.f32.mrf.mxu0
    %v4591 = vadd.f32 %v4464, %v4590
    %v4592 = vpop.f32.mrf.mxu0
    %4593 = vmatprep.mubr.f32.mxu0 0.0
    %v4594 = vand.u32 %v4090, 4294901760
    %v4595 = vsub.f32 %v4090, %v4594
    %v4596 = vand.u32 %v4595, 4294901760
    %4597 = vmatmul.mubr.f32.gmra.mxu0 %v4596
    %v4598 = vpop.f32.mrf.mxu0
    %v4599 = vadd.f32 %v4471, %v4598
    %v4600 = vpop.f32.mrf.mxu0
    %4601 = vmatprep.mubr.f32.mxu0 0.0
    %v4602 = vand.u32 %v4093, 4294901760
    %v4603 = vsub.f32 %v4093, %v4602
    %v4604 = vand.u32 %v4603, 4294901760
    %4605 = vmatmul.mubr.f32.gmra.mxu0 %v4604
    %v4606 = vpop.f32.mrf.mxu0
    %v4607 = vadd.f32 %v4478, %v4606
    %v4608 = vpop.f32.mrf.mxu0
    %4609 = vmatprep.mubr.f32.mxu0 0.0
    %v4610 = vand.u32 %v4096, 4294901760
    %v4611 = vsub.f32 %v4096, %v4610
    %v4612 = vand.u32 %v4611, 4294901760
    %4613 = vmatmul.mubr.f32.gmra.mxu0 %v4612
    %v4614 = vpop.f32.mrf.mxu0
    %v4615 = vadd.f32 %v4485, %v4614
    %v4616 = vpop.f32.mrf.mxu0
    %4617 = vdwg.mxu0
    %4618 = vmatprep.subr.mxu0 0.0
    %4619 = vmatpush1.msra.mxu0 0.0
    %4620 = vmatprep.subr.mxu0 0.0
    %4621 = vmatpush1.msra.mxu0 0.0
    %4622 = vmatprep.subr.mxu0 0.0
    %4623 = vmatpush1.msra.mxu0 0.0
    %4624 = vmatprep.subr.mxu0 0.0
    %4625 = vmatpush1.msra.mxu0 0.0
    %4626 = vmatprep.subr.mxu0 0.0
    %4627 = vmatpush1.msra.mxu0 0.0
    %4628 = vmatprep.subr.mxu0 0.0
    %4629 = vmatpush1.msra.mxu0 0.0
    %4630 = vmatprep.subr.mxu0 0.0
    %4631 = vmatpush1.msra.mxu0 0.0
    %4632 = vmatprep.subr.mxu0 0.0
    %4633 = vmatpush1.msra.mxu0 0.0
    %4634 = vmatprep.subr.mxu0 0.0
    %4635 = vmatpush1.msra.mxu0 0.0
    %4636 = vmatprep.subr.mxu0 0.0
    %4637 = vmatpush1.msra.mxu0 0.0
    %4638 = vmatprep.subr.mxu0 0.0
    %4639 = vmatpush1.msra.mxu0 0.0
    %4640 = vmatprep.subr.mxu0 0.0
    %4641 = vmatpush1.msra.mxu0 0.0
    %4642 = vmatprep.subr.mxu0 0.0
    %4643 = vmatpush1.msra.mxu0 0.0
    %4644 = vmatprep.subr.mxu0 0.0
    %4645 = vmatpush1.msra.mxu0 0.0
    %4646 = vmatprep.subr.mxu0 0.0
    %4647 = vmatpush1.msra.mxu0 0.0
    %4648 = vmatprep.subr.mxu0 0.0
    %v4649 = vand.u32 %v4099, 4294901760
    %v4650 = vsub.f32 %v4099, %v4649
    %v4651 = vand.u32 %v4650, 4294901760
    %4652 = vmatpush1.msra.mxu0 %v4651
    %4653 = vmatprep.subr.mxu0 0.0
    %4654 = vmatpush2.msra.mxu0 0.0
    %4655 = vmatprep.subr.mxu0 0.0
    %4656 = vmatpush2.msra.mxu0 0.0
    %4657 = vmatprep.subr.mxu0 0.0
    %4658 = vmatpush2.msra.mxu0 0.0
    %4659 = vmatprep.subr.mxu0 0.0
    %4660 = vmatpush2.msra.mxu0 0.0
    %4661 = vmatprep.subr.mxu0 0.0
    %4662 = vmatpush2.msra.mxu0 0.0
    %4663 = vmatprep.subr.mxu0 0.0
    %4664 = vmatpush2.msra.mxu0 0.0
    %4665 = vmatprep.subr.mxu0 0.0
    %4666 = vmatpush2.msra.mxu0 0.0
    %4667 = vmatprep.subr.mxu0 0.0
    %4668 = vmatpush2.msra.mxu0 0.0
    %4669 = vmatprep.subr.mxu0 0.0
    %4670 = vmatpush2.msra.mxu0 0.0
    %4671 = vmatprep.subr.mxu0 0.0
    %4672 = vmatpush2.msra.mxu0 0.0
    %4673 = vmatprep.subr.mxu0 0.0
    %4674 = vmatpush2.msra.mxu0 0.0
    %4675 = vmatprep.subr.mxu0 0.0
    %4676 = vmatpush2.msra.mxu0 0.0
    %4677 = vmatprep.subr.mxu0 0.0
    %4678 = vmatpush2.msra.mxu0 0.0
    %4679 = vmatprep.subr.mxu0 0.0
    %4680 = vmatpush2.msra.mxu0 0.0
    %4681 = vmatprep.subr.mxu0 0.0
    %4682 = vmatpush2.msra.mxu0 0.0
    %4683 = vmatprep.subr.mxu0 0.0
    %4684 = vmatpush2.msra.mxu0 0.0
    %4685 = vmatprep.mubr.f32.mxu0 0.0
    %v4686 = vand.u32 %v4075, 4294901760
    %4687 = vmatmul.mubr.f32.gmra.mxu0 %v4686
    %v4688 = vpop.f32.mrf.mxu0
    %v4689 = vadd.f32 %v4559, %v4688
    %v4690 = vpop.f32.mrf.mxu0
    %4691 = vmatprep.mubr.f32.mxu0 0.0
    %v4692 = vand.u32 %v4078, 4294901760
    %4693 = vmatmul.mubr.f32.gmra.mxu0 %v4692
    %v4694 = vpop.f32.mrf.mxu0
    %v4695 = vadd.f32 %v4567, %v4694
    %v4696 = vpop.f32.mrf.mxu0
    %4697 = vmatprep.mubr.f32.mxu0 0.0
    %v4698 = vand.u32 %v4081, 4294901760
    %4699 = vmatmul.mubr.f32.gmra.mxu0 %v4698
    %v4700 = vpop.f32.mrf.mxu0
    %v4701 = vadd.f32 %v4575, %v4700
    %v4702 = vpop.f32.mrf.mxu0
    %4703 = vmatprep.mubr.f32.mxu0 0.0
    %v4704 = vand.u32 %v4084, 4294901760
    %4705 = vmatmul.mubr.f32.gmra.mxu0 %v4704
    %v4706 = vpop.f32.mrf.mxu0
    %v4707 = vadd.f32 %v4583, %v4706
    %v4708 = vpop.f32.mrf.mxu0
    %4709 = vmatprep.mubr.f32.mxu0 0.0
    %v4710 = vand.u32 %v4087, 4294901760
    %4711 = vmatmul.mubr.f32.gmra.mxu0 %v4710
    %v4712 = vpop.f32.mrf.mxu0
    %v4713 = vadd.f32 %v4591, %v4712
    %v4714 = vpop.f32.mrf.mxu0
    %4715 = vmatprep.mubr.f32.mxu0 0.0
    %v4716 = vand.u32 %v4090, 4294901760
    %4717 = vmatmul.mubr.f32.gmra.mxu0 %v4716
    %v4718 = vpop.f32.mrf.mxu0
    %v4719 = vadd.f32 %v4599, %v4718
    %v4720 = vpop.f32.mrf.mxu0
    %4721 = vmatprep.mubr.f32.mxu0 0.0
    %v4722 = vand.u32 %v4093, 4294901760
    %4723 = vmatmul.mubr.f32.gmra.mxu0 %v4722
    %v4724 = vpop.f32.mrf.mxu0
    %v4725 = vadd.f32 %v4607, %v4724
    %v4726 = vpop.f32.mrf.mxu0
    %4727 = vmatprep.mubr.f32.mxu0 0.0
    %v4728 = vand.u32 %v4096, 4294901760
    %4729 = vmatmul.mubr.f32.gmra.mxu0 %v4728
    %v4730 = vpop.f32.mrf.mxu0
    %v4731 = vadd.f32 %v4615, %v4730
    %v4732 = vpop.f32.mrf.mxu0
    %4733 = vdwg.mxu0
    %4734 = vmatprep.subr.mxu0 0.0
    %4735 = vmatpush1.msra.mxu0 0.0
    %4736 = vmatprep.subr.mxu0 0.0
    %4737 = vmatpush1.msra.mxu0 0.0
    %4738 = vmatprep.subr.mxu0 0.0
    %4739 = vmatpush1.msra.mxu0 0.0
    %4740 = vmatprep.subr.mxu0 0.0
    %4741 = vmatpush1.msra.mxu0 0.0
    %4742 = vmatprep.subr.mxu0 0.0
    %4743 = vmatpush1.msra.mxu0 0.0
    %4744 = vmatprep.subr.mxu0 0.0
    %4745 = vmatpush1.msra.mxu0 0.0
    %4746 = vmatprep.subr.mxu0 0.0
    %4747 = vmatpush1.msra.mxu0 0.0
    %4748 = vmatprep.subr.mxu0 0.0
    %4749 = vmatpush1.msra.mxu0 0.0
    %4750 = vmatprep.subr.mxu0 0.0
    %4751 = vmatpush1.msra.mxu0 0.0
    %4752 = vmatprep.subr.mxu0 0.0
    %4753 = vmatpush1.msra.mxu0 0.0
    %4754 = vmatprep.subr.mxu0 0.0
    %4755 = vmatpush1.msra.mxu0 0.0
    %4756 = vmatprep.subr.mxu0 0.0
    %4757 = vmatpush1.msra.mxu0 0.0
    %4758 = vmatprep.subr.mxu0 0.0
    %4759 = vmatpush1.msra.mxu0 0.0
    %4760 = vmatprep.subr.mxu0 0.0
    %4761 = vmatpush1.msra.mxu0 0.0
    %4762 = vmatprep.subr.mxu0 0.0
    %4763 = vmatpush1.msra.mxu0 0.0
    %4764 = vmatprep.subr.mxu0 0.0
    %v4765 = vand.u32 %v4099, 4294901760
    %4766 = vmatpush1.msra.mxu0 %v4765
    %4767 = vmatprep.subr.mxu0 0.0
    %4768 = vmatpush2.msra.mxu0 0.0
    %4769 = vmatprep.subr.mxu0 0.0
    %4770 = vmatpush2.msra.mxu0 0.0
    %4771 = vmatprep.subr.mxu0 0.0
    %4772 = vmatpush2.msra.mxu0 0.0
    %4773 = vmatprep.subr.mxu0 0.0
    %4774 = vmatpush2.msra.mxu0 0.0
    %4775 = vmatprep.subr.mxu0 0.0
    %4776 = vmatpush2.msra.mxu0 0.0
    %4777 = vmatprep.subr.mxu0 0.0
    %4778 = vmatpush2.msra.mxu0 0.0
    %4779 = vmatprep.subr.mxu0 0.0
    %4780 = vmatpush2.msra.mxu0 0.0
    %4781 = vmatprep.subr.mxu0 0.0
    %4782 = vmatpush2.msra.mxu0 0.0
    %4783 = vmatprep.subr.mxu0 0.0
    %4784 = vmatpush2.msra.mxu0 0.0
    %4785 = vmatprep.subr.mxu0 0.0
    %4786 = vmatpush2.msra.mxu0 0.0
    %4787 = vmatprep.subr.mxu0 0.0
    %4788 = vmatpush2.msra.mxu0 0.0
    %4789 = vmatprep.subr.mxu0 0.0
    %4790 = vmatpush2.msra.mxu0 0.0
    %4791 = vmatprep.subr.mxu0 0.0
    %4792 = vmatpush2.msra.mxu0 0.0
    %4793 = vmatprep.subr.mxu0 0.0
    %4794 = vmatpush2.msra.mxu0 0.0
    %4795 = vmatprep.subr.mxu0 0.0
    %4796 = vmatpush2.msra.mxu0 0.0
    %4797 = vmatprep.subr.mxu0 0.0
    %4798 = vmatpush2.msra.mxu0 0.0
    %4799 = vmatprep.mubr.f32.mxu0 0.0
    %v4800 = vand.u32 %v4075, 4294901760
    %4801 = vmatmul.mubr.f32.gmra.mxu0 %v4800
    %v4802 = vpop.f32.mrf.mxu0
    %v4803 = vadd.f32 %v4689, %v4802
    %v4804 = vpop.f32.mrf.mxu0
    %4805 = vmatprep.mubr.f32.mxu0 0.0
    %v4806 = vand.u32 %v4078, 4294901760
    %4807 = vmatmul.mubr.f32.gmra.mxu0 %v4806
    %v4808 = vpop.f32.mrf.mxu0
    %v4809 = vadd.f32 %v4695, %v4808
    %v4810 = vpop.f32.mrf.mxu0
    %4811 = vmatprep.mubr.f32.mxu0 0.0
    %v4812 = vand.u32 %v4081, 4294901760
    %4813 = vmatmul.mubr.f32.gmra.mxu0 %v4812
    %v4814 = vpop.f32.mrf.mxu0
    %v4815 = vadd.f32 %v4701, %v4814
    %v4816 = vpop.f32.mrf.mxu0
    %4817 = vmatprep.mubr.f32.mxu0 0.0
    %v4818 = vand.u32 %v4084, 4294901760
    %4819 = vmatmul.mubr.f32.gmra.mxu0 %v4818
    %v4820 = vpop.f32.mrf.mxu0
    %v4821 = vadd.f32 %v4707, %v4820
    %v4822 = vpop.f32.mrf.mxu0
    %4823 = vmatprep.mubr.f32.mxu0 0.0
    %v4824 = vand.u32 %v4087, 4294901760
    %4825 = vmatmul.mubr.f32.gmra.mxu0 %v4824
    %v4826 = vpop.f32.mrf.mxu0
    %v4827 = vadd.f32 %v4713, %v4826
    %v4828 = vpop.f32.mrf.mxu0
    %4829 = vmatprep.mubr.f32.mxu0 0.0
    %v4830 = vand.u32 %v4090, 4294901760
    %4831 = vmatmul.mubr.f32.gmra.mxu0 %v4830
    %v4832 = vpop.f32.mrf.mxu0
    %v4833 = vadd.f32 %v4719, %v4832
    %v4834 = vpop.f32.mrf.mxu0
    %4835 = vmatprep.mubr.f32.mxu0 0.0
    %v4836 = vand.u32 %v4093, 4294901760
    %4837 = vmatmul.mubr.f32.gmra.mxu0 %v4836
    %v4838 = vpop.f32.mrf.mxu0
    %v4839 = vadd.f32 %v4725, %v4838
    %v4840 = vpop.f32.mrf.mxu0
    %4841 = vmatprep.mubr.f32.mxu0 0.0
    %v4842 = vand.u32 %v4096, 4294901760
    %4843 = vmatmul.mubr.f32.gmra.mxu0 %v4842
    %v4844 = vpop.f32.mrf.mxu0
    %v4845 = vadd.f32 %v4731, %v4844
    %v4846 = vpop.f32.mrf.mxu0
    %4847 = vdwg.mxu0
    %v4848 = vmax.f32 %v4803, 0.0
    %v4849 = vmax.f32 %v4809, 0.0
    %v4850 = vmax.f32 %v4815, 0.0
    %v4851 = vmax.f32 %v4821, 0.0
    %v4852 = vmax.f32 %v4827, 0.0
    %v4853 = vmax.f32 %v4833, 0.0
    %v4854 = vmax.f32 %v4839, 0.0
    %v4855 = vmax.f32 %v4845, 0.0
    %v4856 = vld [vmem:[#allocation6 + $0x128] sm:$0x7]
    %v4858 = vsel %vm769, %v4856, 0
    %4860 = vmatprep.subr.mxu0 0.0
    %4861 = vmatpush1.msra.mxu0 0.0
    %4862 = vmatprep.subr.mxu0 0.0
    %4863 = vmatpush1.msra.mxu0 0.0
    %4864 = vmatprep.subr.mxu0 0.0
    %4865 = vmatpush1.msra.mxu0 0.0
    %4866 = vmatprep.subr.mxu0 0.0
    %4867 = vmatpush1.msra.mxu0 0.0
    %4868 = vmatprep.subr.mxu0 0.0
    %4869 = vmatpush1.msra.mxu0 0.0
    %4870 = vmatprep.subr.mxu0 0.0
    %4871 = vmatpush1.msra.mxu0 0.0
    %4872 = vmatprep.subr.mxu0 0.0
    %4873 = vmatpush1.msra.mxu0 0.0
    %4874 = vmatprep.subr.mxu0 0.0
    %4875 = vmatpush1.msra.mxu0 0.0
    %4876 = vmatprep.subr.mxu0 0.0
    %v4877 = vand.u32 %v4855, 4294901760
    %4878 = vmatpush1.msra.mxu0 %v4877
    %4879 = vmatprep.subr.mxu0 0.0
    %v4880 = vand.u32 %v4854, 4294901760
    %4881 = vmatpush1.msra.mxu0 %v4880
    %4882 = vmatprep.subr.mxu0 0.0
    %v4883 = vand.u32 %v4853, 4294901760
    %4884 = vmatpush1.msra.mxu0 %v4883
    %4885 = vmatprep.subr.mxu0 0.0
    %v4886 = vand.u32 %v4852, 4294901760
    %4887 = vmatpush1.msra.mxu0 %v4886
    %4888 = vmatprep.subr.mxu0 0.0
    %v4889 = vand.u32 %v4851, 4294901760
    %4890 = vmatpush1.msra.mxu0 %v4889
    %4891 = vmatprep.subr.mxu0 0.0
    %v4892 = vand.u32 %v4850, 4294901760
    %4893 = vmatpush1.msra.mxu0 %v4892
    %4894 = vmatprep.subr.mxu0 0.0
    %v4895 = vand.u32 %v4849, 4294901760
    %4896 = vmatpush1.msra.mxu0 %v4895
    %4897 = vmatprep.subr.mxu0 0.0
    %v4898 = vand.u32 %v4848, 4294901760
    %4899 = vmatpush1.msra.mxu0 %v4898
    %4900 = vmatprep.subr.mxu0 0.0
    %4901 = vmatpush2.msra.mxu0 0.0
    %4902 = vmatprep.subr.mxu0 0.0
    %4903 = vmatpush2.msra.mxu0 0.0
    %4904 = vmatprep.subr.mxu0 0.0
    %4905 = vmatpush2.msra.mxu0 0.0
    %4906 = vmatprep.subr.mxu0 0.0
    %4907 = vmatpush2.msra.mxu0 0.0
    %4908 = vmatprep.subr.mxu0 0.0
    %4909 = vmatpush2.msra.mxu0 0.0
    %4910 = vmatprep.subr.mxu0 0.0
    %4911 = vmatpush2.msra.mxu0 0.0
    %4912 = vmatprep.subr.mxu0 0.0
    %4913 = vmatpush2.msra.mxu0 0.0
    %4914 = vmatprep.subr.mxu0 0.0
    %4915 = vmatpush2.msra.mxu0 0.0
    %4916 = vmatprep.subr.mxu0 0.0
    %4917 = vmatpush2.msra.mxu0 0.0
    %4918 = vmatprep.subr.mxu0 0.0
    %4919 = vmatpush2.msra.mxu0 0.0
    %4920 = vmatprep.subr.mxu0 0.0
    %4921 = vmatpush2.msra.mxu0 0.0
    %4922 = vmatprep.subr.mxu0 0.0
    %4923 = vmatpush2.msra.mxu0 0.0
    %4924 = vmatprep.subr.mxu0 0.0
    %4925 = vmatpush2.msra.mxu0 0.0
    %4926 = vmatprep.subr.mxu0 0.0
    %4927 = vmatpush2.msra.mxu0 0.0
    %4928 = vmatprep.subr.mxu0 0.0
    %4929 = vmatpush2.msra.mxu0 0.0
    %4930 = vmatprep.subr.mxu0 0.0
    %4931 = vmatpush2.msra.mxu0 0.0
    %4932 = vmatprep.mubr.f32.mxu0 0.0
    %v4933 = vand.u32 %v4858, 4294901760
    %v4934 = vsub.f32 %v4858, %v4933
    %v4935 = vand.u32 %v4934, 4294901760
    %v4936 = vsub.f32 %v4934, %v4935
    %v4937 = vand.u32 %v4936, 4294901760
    %4938 = vmatmul.mubr.f32.gmra.mxu0 %v4937
    %v4939 = vpop.f32.mrf.mxu0
    %v4940 = vadd.f32 0.0, %v4939
    %v4941 = vpop.f32.mrf.mxu0
    %4942 = vdwg.mxu0
    %4943 = vmatprep.subr.mxu0 0.0
    %4944 = vmatpush1.msra.mxu0 0.0
    %4945 = vmatprep.subr.mxu0 0.0
    %4946 = vmatpush1.msra.mxu0 0.0
    %4947 = vmatprep.subr.mxu0 0.0
    %4948 = vmatpush1.msra.mxu0 0.0
    %4949 = vmatprep.subr.mxu0 0.0
    %4950 = vmatpush1.msra.mxu0 0.0
    %4951 = vmatprep.subr.mxu0 0.0
    %4952 = vmatpush1.msra.mxu0 0.0
    %4953 = vmatprep.subr.mxu0 0.0
    %4954 = vmatpush1.msra.mxu0 0.0
    %4955 = vmatprep.subr.mxu0 0.0
    %4956 = vmatpush1.msra.mxu0 0.0
    %4957 = vmatprep.subr.mxu0 0.0
    %4958 = vmatpush1.msra.mxu0 0.0
    %4959 = vmatprep.subr.mxu0 0.0
    %v4960 = vand.u32 %v4855, 4294901760
    %v4961 = vsub.f32 %v4855, %v4960
    %v4962 = vand.u32 %v4961, 4294901760
    %v4963 = vsub.f32 %v4961, %v4962
    %v4964 = vand.u32 %v4963, 4294901760
    %4965 = vmatpush1.msra.mxu0 %v4964
    %4966 = vmatprep.subr.mxu0 0.0
    %v4967 = vand.u32 %v4854, 4294901760
    %v4968 = vsub.f32 %v4854, %v4967
    %v4969 = vand.u32 %v4968, 4294901760
    %v4970 = vsub.f32 %v4968, %v4969
    %v4971 = vand.u32 %v4970, 4294901760
    %4972 = vmatpush1.msra.mxu0 %v4971
    %4973 = vmatprep.subr.mxu0 0.0
    %v4974 = vand.u32 %v4853, 4294901760
    %v4975 = vsub.f32 %v4853, %v4974
    %v4976 = vand.u32 %v4975, 4294901760
    %v4977 = vsub.f32 %v4975, %v4976
    %v4978 = vand.u32 %v4977, 4294901760
    %4979 = vmatpush1.msra.mxu0 %v4978
    %4980 = vmatprep.subr.mxu0 0.0
    %v4981 = vand.u32 %v4852, 4294901760
    %v4982 = vsub.f32 %v4852, %v4981
    %v4983 = vand.u32 %v4982, 4294901760
    %v4984 = vsub.f32 %v4982, %v4983
    %v4985 = vand.u32 %v4984, 4294901760
    %4986 = vmatpush1.msra.mxu0 %v4985
    %4987 = vmatprep.subr.mxu0 0.0
    %v4988 = vand.u32 %v4851, 4294901760
    %v4989 = vsub.f32 %v4851, %v4988
    %v4990 = vand.u32 %v4989, 4294901760
    %v4991 = vsub.f32 %v4989, %v4990
    %v4992 = vand.u32 %v4991, 4294901760
    %4993 = vmatpush1.msra.mxu0 %v4992
    %4994 = vmatprep.subr.mxu0 0.0
    %v4995 = vand.u32 %v4850, 4294901760
    %v4996 = vsub.f32 %v4850, %v4995
    %v4997 = vand.u32 %v4996, 4294901760
    %v4998 = vsub.f32 %v4996, %v4997
    %v4999 = vand.u32 %v4998, 4294901760
    %5000 = vmatpush1.msra.mxu0 %v4999
    %5001 = vmatprep.subr.mxu0 0.0
    %v5002 = vand.u32 %v4849, 4294901760
    %v5003 = vsub.f32 %v4849, %v5002
    %v5004 = vand.u32 %v5003, 4294901760
    %v5005 = vsub.f32 %v5003, %v5004
    %v5006 = vand.u32 %v5005, 4294901760
    %5007 = vmatpush1.msra.mxu0 %v5006
    %5008 = vmatprep.subr.mxu0 0.0
    %v5009 = vand.u32 %v4848, 4294901760
    %v5010 = vsub.f32 %v4848, %v5009
    %v5011 = vand.u32 %v5010, 4294901760
    %v5012 = vsub.f32 %v5010, %v5011
    %v5013 = vand.u32 %v5012, 4294901760
    %5014 = vmatpush1.msra.mxu0 %v5013
    %5015 = vmatprep.subr.mxu0 0.0
    %5016 = vmatpush2.msra.mxu0 0.0
    %5017 = vmatprep.subr.mxu0 0.0
    %5018 = vmatpush2.msra.mxu0 0.0
    %5019 = vmatprep.subr.mxu0 0.0
    %5020 = vmatpush2.msra.mxu0 0.0
    %5021 = vmatprep.subr.mxu0 0.0
    %5022 = vmatpush2.msra.mxu0 0.0
    %5023 = vmatprep.subr.mxu0 0.0
    %5024 = vmatpush2.msra.mxu0 0.0
    %5025 = vmatprep.subr.mxu0 0.0
    %5026 = vmatpush2.msra.mxu0 0.0
    %5027 = vmatprep.subr.mxu0 0.0
    %5028 = vmatpush2.msra.mxu0 0.0
    %5029 = vmatprep.subr.mxu0 0.0
    %5030 = vmatpush2.msra.mxu0 0.0
    %5031 = vmatprep.subr.mxu0 0.0
    %5032 = vmatpush2.msra.mxu0 0.0
    %5033 = vmatprep.subr.mxu0 0.0
    %5034 = vmatpush2.msra.mxu0 0.0
    %5035 = vmatprep.subr.mxu0 0.0
    %5036 = vmatpush2.msra.mxu0 0.0
    %5037 = vmatprep.subr.mxu0 0.0
    %5038 = vmatpush2.msra.mxu0 0.0
    %5039 = vmatprep.subr.mxu0 0.0
    %5040 = vmatpush2.msra.mxu0 0.0
    %5041 = vmatprep.subr.mxu0 0.0
    %5042 = vmatpush2.msra.mxu0 0.0
    %5043 = vmatprep.subr.mxu0 0.0
    %5044 = vmatpush2.msra.mxu0 0.0
    %5045 = vmatprep.subr.mxu0 0.0
    %5046 = vmatpush2.msra.mxu0 0.0
    %5047 = vmatprep.mubr.f32.mxu0 0.0
    %v5048 = vand.u32 %v4858, 4294901760
    %5049 = vmatmul.mubr.f32.gmra.mxu0 %v5048
    %v5050 = vpop.f32.mrf.mxu0
    %v5051 = vadd.f32 %v4940, %v5050
    %v5052 = vpop.f32.mrf.mxu0
    %5053 = vdwg.mxu0
    %5054 = vmatprep.subr.mxu0 0.0
    %5055 = vmatpush1.msra.mxu0 0.0
    %5056 = vmatprep.subr.mxu0 0.0
    %5057 = vmatpush1.msra.mxu0 0.0
    %5058 = vmatprep.subr.mxu0 0.0
    %5059 = vmatpush1.msra.mxu0 0.0
    %5060 = vmatprep.subr.mxu0 0.0
    %5061 = vmatpush1.msra.mxu0 0.0
    %5062 = vmatprep.subr.mxu0 0.0
    %5063 = vmatpush1.msra.mxu0 0.0
    %5064 = vmatprep.subr.mxu0 0.0
    %5065 = vmatpush1.msra.mxu0 0.0
    %5066 = vmatprep.subr.mxu0 0.0
    %5067 = vmatpush1.msra.mxu0 0.0
    %5068 = vmatprep.subr.mxu0 0.0
    %5069 = vmatpush1.msra.mxu0 0.0
    %5070 = vmatprep.subr.mxu0 0.0
    %v5071 = vand.u32 %v4855, 4294901760
    %v5072 = vsub.f32 %v4855, %v5071
    %5073 = vmatpush1.msra.mxu0 %v5072
    %5074 = vmatprep.subr.mxu0 0.0
    %v5075 = vand.u32 %v4854, 4294901760
    %v5076 = vsub.f32 %v4854, %v5075
    %5077 = vmatpush1.msra.mxu0 %v5076
    %5078 = vmatprep.subr.mxu0 0.0
    %v5079 = vand.u32 %v4853, 4294901760
    %v5080 = vsub.f32 %v4853, %v5079
    %5081 = vmatpush1.msra.mxu0 %v5080
    %5082 = vmatprep.subr.mxu0 0.0
    %v5083 = vand.u32 %v4852, 4294901760
    %v5084 = vsub.f32 %v4852, %v5083
    %5085 = vmatpush1.msra.mxu0 %v5084
    %5086 = vmatprep.subr.mxu0 0.0
    %v5087 = vand.u32 %v4851, 4294901760
    %v5088 = vsub.f32 %v4851, %v5087
    %5089 = vmatpush1.msra.mxu0 %v5088
    %5090 = vmatprep.subr.mxu0 0.0
    %v5091 = vand.u32 %v4850, 4294901760
    %v5092 = vsub.f32 %v4850, %v5091
    %5093 = vmatpush1.msra.mxu0 %v5092
    %5094 = vmatprep.subr.mxu0 0.0
    %v5095 = vand.u32 %v4849, 4294901760
    %v5096 = vsub.f32 %v4849, %v5095
    %5097 = vmatpush1.msra.mxu0 %v5096
    %5098 = vmatprep.subr.mxu0 0.0
    %v5099 = vand.u32 %v4848, 4294901760
    %v5100 = vsub.f32 %v4848, %v5099
    %5101 = vmatpush1.msra.mxu0 %v5100
    %5102 = vmatprep.subr.mxu0 0.0
    %5103 = vmatpush2.msra.mxu0 0.0
    %5104 = vmatprep.subr.mxu0 0.0
    %5105 = vmatpush2.msra.mxu0 0.0
    %5106 = vmatprep.subr.mxu0 0.0
    %5107 = vmatpush2.msra.mxu0 0.0
    %5108 = vmatprep.subr.mxu0 0.0
    %5109 = vmatpush2.msra.mxu0 0.0
    %5110 = vmatprep.subr.mxu0 0.0
    %5111 = vmatpush2.msra.mxu0 0.0
    %5112 = vmatprep.subr.mxu0 0.0
    %5113 = vmatpush2.msra.mxu0 0.0
    %5114 = vmatprep.subr.mxu0 0.0
    %5115 = vmatpush2.msra.mxu0 0.0
    %5116 = vmatprep.subr.mxu0 0.0
    %5117 = vmatpush2.msra.mxu0 0.0
    %5118 = vmatprep.subr.mxu0 0.0
    %5119 = vmatpush2.msra.mxu0 0.0
    %5120 = vmatprep.subr.mxu0 0.0
    %5121 = vmatpush2.msra.mxu0 0.0
    %5122 = vmatprep.subr.mxu0 0.0
    %5123 = vmatpush2.msra.mxu0 0.0
    %5124 = vmatprep.subr.mxu0 0.0
    %5125 = vmatpush2.msra.mxu0 0.0
    %5126 = vmatprep.subr.mxu0 0.0
    %5127 = vmatpush2.msra.mxu0 0.0
    %5128 = vmatprep.subr.mxu0 0.0
    %5129 = vmatpush2.msra.mxu0 0.0
    %5130 = vmatprep.subr.mxu0 0.0
    %5131 = vmatpush2.msra.mxu0 0.0
    %5132 = vmatprep.subr.mxu0 0.0
    %5133 = vmatpush2.msra.mxu0 0.0
    %5134 = vmatprep.mubr.f32.mxu0 0.0
    %v5135 = vand.u32 %v4858, 4294901760
    %v5136 = vsub.f32 %v4858, %v5135
    %5137 = vmatmul.mubr.f32.gmra.mxu0 %v5136
    %v5138 = vpop.f32.mrf.mxu0
    %v5139 = vadd.f32 %v5051, %v5138
    %v5140 = vpop.f32.mrf.mxu0
    %5141 = vdwg.mxu0
    %5142 = vmatprep.subr.mxu0 0.0
    %5143 = vmatpush1.msra.mxu0 0.0
    %5144 = vmatprep.subr.mxu0 0.0
    %5145 = vmatpush1.msra.mxu0 0.0
    %5146 = vmatprep.subr.mxu0 0.0
    %5147 = vmatpush1.msra.mxu0 0.0
    %5148 = vmatprep.subr.mxu0 0.0
    %5149 = vmatpush1.msra.mxu0 0.0
    %5150 = vmatprep.subr.mxu0 0.0
    %5151 = vmatpush1.msra.mxu0 0.0
    %5152 = vmatprep.subr.mxu0 0.0
    %5153 = vmatpush1.msra.mxu0 0.0
    %5154 = vmatprep.subr.mxu0 0.0
    %5155 = vmatpush1.msra.mxu0 0.0
    %5156 = vmatprep.subr.mxu0 0.0
    %5157 = vmatpush1.msra.mxu0 0.0
    %5158 = vmatprep.subr.mxu0 0.0
    %v5159 = vand.u32 %v4855, 4294901760
    %5160 = vmatpush1.msra.mxu0 %v5159
    %5161 = vmatprep.subr.mxu0 0.0
    %v5162 = vand.u32 %v4854, 4294901760
    %5163 = vmatpush1.msra.mxu0 %v5162
    %5164 = vmatprep.subr.mxu0 0.0
    %v5165 = vand.u32 %v4853, 4294901760
    %5166 = vmatpush1.msra.mxu0 %v5165
    %5167 = vmatprep.subr.mxu0 0.0
    %v5168 = vand.u32 %v4852, 4294901760
    %5169 = vmatpush1.msra.mxu0 %v5168
    %5170 = vmatprep.subr.mxu0 0.0
    %v5171 = vand.u32 %v4851, 4294901760
    %5172 = vmatpush1.msra.mxu0 %v5171
    %5173 = vmatprep.subr.mxu0 0.0
    %v5174 = vand.u32 %v4850, 4294901760
    %5175 = vmatpush1.msra.mxu0 %v5174
    %5176 = vmatprep.subr.mxu0 0.0
    %v5177 = vand.u32 %v4849, 4294901760
    %5178 = vmatpush1.msra.mxu0 %v5177
    %5179 = vmatprep.subr.mxu0 0.0
    %v5180 = vand.u32 %v4848, 4294901760
    %5181 = vmatpush1.msra.mxu0 %v5180
    %5182 = vmatprep.subr.mxu0 0.0
    %5183 = vmatpush2.msra.mxu0 0.0
    %5184 = vmatprep.subr.mxu0 0.0
    %5185 = vmatpush2.msra.mxu0 0.0
    %5186 = vmatprep.subr.mxu0 0.0
    %5187 = vmatpush2.msra.mxu0 0.0
    %5188 = vmatprep.subr.mxu0 0.0
    %5189 = vmatpush2.msra.mxu0 0.0
    %5190 = vmatprep.subr.mxu0 0.0
    %5191 = vmatpush2.msra.mxu0 0.0
    %5192 = vmatprep.subr.mxu0 0.0
    %5193 = vmatpush2.msra.mxu0 0.0
    %5194 = vmatprep.subr.mxu0 0.0
    %5195 = vmatpush2.msra.mxu0 0.0
    %5196 = vmatprep.subr.mxu0 0.0
    %5197 = vmatpush2.msra.mxu0 0.0
    %5198 = vmatprep.subr.mxu0 0.0
    %5199 = vmatpush2.msra.mxu0 0.0
    %5200 = vmatprep.subr.mxu0 0.0
    %5201 = vmatpush2.msra.mxu0 0.0
    %5202 = vmatprep.subr.mxu0 0.0
    %5203 = vmatpush2.msra.mxu0 0.0
    %5204 = vmatprep.subr.mxu0 0.0
    %5205 = vmatpush2.msra.mxu0 0.0
    %5206 = vmatprep.subr.mxu0 0.0
    %5207 = vmatpush2.msra.mxu0 0.0
    %5208 = vmatprep.subr.mxu0 0.0
    %5209 = vmatpush2.msra.mxu0 0.0
    %5210 = vmatprep.subr.mxu0 0.0
    %5211 = vmatpush2.msra.mxu0 0.0
    %5212 = vmatprep.subr.mxu0 0.0
    %5213 = vmatpush2.msra.mxu0 0.0
    %5214 = vmatprep.mubr.f32.mxu0 0.0
    %v5215 = vand.u32 %v4858, 4294901760
    %v5216 = vsub.f32 %v4858, %v5215
    %v5217 = vand.u32 %v5216, 4294901760
    %5218 = vmatmul.mubr.f32.gmra.mxu0 %v5217
    %v5219 = vpop.f32.mrf.mxu0
    %v5220 = vadd.f32 %v5139, %v5219
    %v5221 = vpop.f32.mrf.mxu0
    %5222 = vdwg.mxu0
    %5223 = vmatprep.subr.mxu0 0.0
    %5224 = vmatpush1.msra.mxu0 0.0
    %5225 = vmatprep.subr.mxu0 0.0
    %5226 = vmatpush1.msra.mxu0 0.0
    %5227 = vmatprep.subr.mxu0 0.0
    %5228 = vmatpush1.msra.mxu0 0.0
    %5229 = vmatprep.subr.mxu0 0.0
    %5230 = vmatpush1.msra.mxu0 0.0
    %5231 = vmatprep.subr.mxu0 0.0
    %5232 = vmatpush1.msra.mxu0 0.0
    %5233 = vmatprep.subr.mxu0 0.0
    %5234 = vmatpush1.msra.mxu0 0.0
    %5235 = vmatprep.subr.mxu0 0.0
    %5236 = vmatpush1.msra.mxu0 0.0
    %5237 = vmatprep.subr.mxu0 0.0
    %5238 = vmatpush1.msra.mxu0 0.0
    %5239 = vmatprep.subr.mxu0 0.0
    %v5240 = vand.u32 %v4855, 4294901760
    %v5241 = vsub.f32 %v4855, %v5240
    %v5242 = vand.u32 %v5241, 4294901760
    %5243 = vmatpush1.msra.mxu0 %v5242
    %5244 = vmatprep.subr.mxu0 0.0
    %v5245 = vand.u32 %v4854, 4294901760
    %v5246 = vsub.f32 %v4854, %v5245
    %v5247 = vand.u32 %v5246, 4294901760
    %5248 = vmatpush1.msra.mxu0 %v5247
    %5249 = vmatprep.subr.mxu0 0.0
    %v5250 = vand.u32 %v4853, 4294901760
    %v5251 = vsub.f32 %v4853, %v5250
    %v5252 = vand.u32 %v5251, 4294901760
    %5253 = vmatpush1.msra.mxu0 %v5252
    %5254 = vmatprep.subr.mxu0 0.0
    %v5255 = vand.u32 %v4852, 4294901760
    %v5256 = vsub.f32 %v4852, %v5255
    %v5257 = vand.u32 %v5256, 4294901760
    %5258 = vmatpush1.msra.mxu0 %v5257
    %5259 = vmatprep.subr.mxu0 0.0
    %v5260 = vand.u32 %v4851, 4294901760
    %v5261 = vsub.f32 %v4851, %v5260
    %v5262 = vand.u32 %v5261, 4294901760
    %5263 = vmatpush1.msra.mxu0 %v5262
    %5264 = vmatprep.subr.mxu0 0.0
    %v5265 = vand.u32 %v4850, 4294901760
    %v5266 = vsub.f32 %v4850, %v5265
    %v5267 = vand.u32 %v5266, 4294901760
    %5268 = vmatpush1.msra.mxu0 %v5267
    %5269 = vmatprep.subr.mxu0 0.0
    %v5270 = vand.u32 %v4849, 4294901760
    %v5271 = vsub.f32 %v4849, %v5270
    %v5272 = vand.u32 %v5271, 4294901760
    %5273 = vmatpush1.msra.mxu0 %v5272
    %5274 = vmatprep.subr.mxu0 0.0
    %v5275 = vand.u32 %v4848, 4294901760
    %v5276 = vsub.f32 %v4848, %v5275
    %v5277 = vand.u32 %v5276, 4294901760
    %5278 = vmatpush1.msra.mxu0 %v5277
    %5279 = vmatprep.subr.mxu0 0.0
    %5280 = vmatpush2.msra.mxu0 0.0
    %5281 = vmatprep.subr.mxu0 0.0
    %5282 = vmatpush2.msra.mxu0 0.0
    %5283 = vmatprep.subr.mxu0 0.0
    %5284 = vmatpush2.msra.mxu0 0.0
    %5285 = vmatprep.subr.mxu0 0.0
    %5286 = vmatpush2.msra.mxu0 0.0
    %5287 = vmatprep.subr.mxu0 0.0
    %5288 = vmatpush2.msra.mxu0 0.0
    %5289 = vmatprep.subr.mxu0 0.0
    %5290 = vmatpush2.msra.mxu0 0.0
    %5291 = vmatprep.subr.mxu0 0.0
    %5292 = vmatpush2.msra.mxu0 0.0
    %5293 = vmatprep.subr.mxu0 0.0
    %5294 = vmatpush2.msra.mxu0 0.0
    %5295 = vmatprep.subr.mxu0 0.0
    %5296 = vmatpush2.msra.mxu0 0.0
    %5297 = vmatprep.subr.mxu0 0.0
    %5298 = vmatpush2.msra.mxu0 0.0
    %5299 = vmatprep.subr.mxu0 0.0
    %5300 = vmatpush2.msra.mxu0 0.0
    %5301 = vmatprep.subr.mxu0 0.0
    %5302 = vmatpush2.msra.mxu0 0.0
    %5303 = vmatprep.subr.mxu0 0.0
    %5304 = vmatpush2.msra.mxu0 0.0
    %5305 = vmatprep.subr.mxu0 0.0
    %5306 = vmatpush2.msra.mxu0 0.0
    %5307 = vmatprep.subr.mxu0 0.0
    %5308 = vmatpush2.msra.mxu0 0.0
    %5309 = vmatprep.subr.mxu0 0.0
    %5310 = vmatpush2.msra.mxu0 0.0
    %5311 = vmatprep.mubr.f32.mxu0 0.0
    %v5312 = vand.u32 %v4858, 4294901760
    %5313 = vmatmul.mubr.f32.gmra.mxu0 %v5312
    %v5314 = vpop.f32.mrf.mxu0
    %v5315 = vadd.f32 %v5220, %v5314
    %v5316 = vpop.f32.mrf.mxu0
    %5317 = vdwg.mxu0
    %5318 = vmatprep.subr.mxu0 0.0
    %5319 = vmatpush1.msra.mxu0 0.0
    %5320 = vmatprep.subr.mxu0 0.0
    %5321 = vmatpush1.msra.mxu0 0.0
    %5322 = vmatprep.subr.mxu0 0.0
    %5323 = vmatpush1.msra.mxu0 0.0
    %5324 = vmatprep.subr.mxu0 0.0
    %5325 = vmatpush1.msra.mxu0 0.0
    %5326 = vmatprep.subr.mxu0 0.0
    %5327 = vmatpush1.msra.mxu0 0.0
    %5328 = vmatprep.subr.mxu0 0.0
    %5329 = vmatpush1.msra.mxu0 0.0
    %5330 = vmatprep.subr.mxu0 0.0
    %5331 = vmatpush1.msra.mxu0 0.0
    %5332 = vmatprep.subr.mxu0 0.0
    %5333 = vmatpush1.msra.mxu0 0.0
    %5334 = vmatprep.subr.mxu0 0.0
    %v5335 = vand.u32 %v4855, 4294901760
    %5336 = vmatpush1.msra.mxu0 %v5335
    %5337 = vmatprep.subr.mxu0 0.0
    %v5338 = vand.u32 %v4854, 4294901760
    %5339 = vmatpush1.msra.mxu0 %v5338
    %5340 = vmatprep.subr.mxu0 0.0
    %v5341 = vand.u32 %v4853, 4294901760
    %5342 = vmatpush1.msra.mxu0 %v5341
    %5343 = vmatprep.subr.mxu0 0.0
    %v5344 = vand.u32 %v4852, 4294901760
    %5345 = vmatpush1.msra.mxu0 %v5344
    %5346 = vmatprep.subr.mxu0 0.0
    %v5347 = vand.u32 %v4851, 4294901760
    %5348 = vmatpush1.msra.mxu0 %v5347
    %5349 = vmatprep.subr.mxu0 0.0
    %v5350 = vand.u32 %v4850, 4294901760
    %5351 = vmatpush1.msra.mxu0 %v5350
    %5352 = vmatprep.subr.mxu0 0.0
    %v5353 = vand.u32 %v4849, 4294901760
    %5354 = vmatpush1.msra.mxu0 %v5353
    %5355 = vmatprep.subr.mxu0 0.0
    %v5356 = vand.u32 %v4848, 4294901760
    %5357 = vmatpush1.msra.mxu0 %v5356
    %5358 = vmatprep.subr.mxu0 0.0
    %5359 = vmatpush2.msra.mxu0 0.0
    %5360 = vmatprep.subr.mxu0 0.0
    %5361 = vmatpush2.msra.mxu0 0.0
    %5362 = vmatprep.subr.mxu0 0.0
    %5363 = vmatpush2.msra.mxu0 0.0
    %5364 = vmatprep.subr.mxu0 0.0
    %5365 = vmatpush2.msra.mxu0 0.0
    %5366 = vmatprep.subr.mxu0 0.0
    %5367 = vmatpush2.msra.mxu0 0.0
    %5368 = vmatprep.subr.mxu0 0.0
    %5369 = vmatpush2.msra.mxu0 0.0
    %5370 = vmatprep.subr.mxu0 0.0
    %5371 = vmatpush2.msra.mxu0 0.0
    %5372 = vmatprep.subr.mxu0 0.0
    %5373 = vmatpush2.msra.mxu0 0.0
    %5374 = vmatprep.subr.mxu0 0.0
    %5375 = vmatpush2.msra.mxu0 0.0
    %5376 = vmatprep.subr.mxu0 0.0
    %5377 = vmatpush2.msra.mxu0 0.0
    %5378 = vmatprep.subr.mxu0 0.0
    %5379 = vmatpush2.msra.mxu0 0.0
    %5380 = vmatprep.subr.mxu0 0.0
    %5381 = vmatpush2.msra.mxu0 0.0
    %5382 = vmatprep.subr.mxu0 0.0
    %5383 = vmatpush2.msra.mxu0 0.0
    %5384 = vmatprep.subr.mxu0 0.0
    %5385 = vmatpush2.msra.mxu0 0.0
    %5386 = vmatprep.subr.mxu0 0.0
    %5387 = vmatpush2.msra.mxu0 0.0
    %5388 = vmatprep.subr.mxu0 0.0
    %5389 = vmatpush2.msra.mxu0 0.0
    %5390 = vmatprep.mubr.f32.mxu0 0.0
    %v5391 = vand.u32 %v4858, 4294901760
    %5392 = vmatmul.mubr.f32.gmra.mxu0 %v5391
    %v5393 = vpop.f32.mrf.mxu0
    %v5394 = vadd.f32 %v5315, %v5393
    %v5395 = vpop.f32.mrf.mxu0
    %5396 = vdwg.mxu0
    %5398 = vrot.lane.b32.xlu0 %v5394, 1
    %v5399 = vpop.permute.xlu0 %5398
    %v5401 = vsel %vm2234, 0.0, %v5399
    %5402 = vrot.lane.b32.xlu0 %v5394, 127
    %v5403 = vpop.permute.xlu0 %5402
    %v5405 = vsel %vm2239, %v5403, 0.0
    %v5406 = vrot.slane %v5394, 1
    %v5408 = vadd.f32 %v5401, %v5406
    %v5410 = vrot.slane %v5405, 2
    %v5412 = vadd.f32 %v5408, %v5410
    %5413 = vrot.lane.b32.xlu0 %v5394, 97
    %v5414 = vpop.permute.xlu0 %5413
    %v5416 = vsel %vm2234, 0.0, %v5414
    %5417 = vrot.lane.b32.xlu0 %v5394, 95
    %v5418 = vpop.permute.xlu0 %5417
    %v5420 = vsel %vm2239, %v5418, 0.0
    %5421 = vrot.lane.b32.xlu0 %v5406, 96
    %v5422 = vpop.permute.xlu0 %5421
    %v5424 = vadd.f32 %v5416, %v5422
    %v5426 = vrot.slane %v5420, 2
    %v5428 = vadd.f32 %v5424, %v5426
    %v5430 = vrot.slane %v5428, 7
    %v5432 = vsel %vm2246, %v5412, %v5430
    %v5433 = vstv %s3668
    %v5434 = vadd.f32 %v5432, %v5433
    %v5435 = vadd.f32 %v4035, %v5434
    %v5436 = vsel %vm1864, %v5435, 0.0
    %5437 = vadd.xlane.f32.xlu0 %v5436
    %v5438 = vpop.xlane.xlu0 %5437
    %v5439 = vmul.f32 %v5438, %v2209
    %v5440 = vsub.f32 %v5435, %v5439
    %v5441 = vmul.f32 %v5440, %v5440
    %v5442 = vsel %vm1864, %v5441, 0.0
    %5443 = vadd.xlane.f32.xlu0 %v5442
    %v5444 = vpop.xlane.xlu0 %5443
    %v5445 = vmul.f32 %v5444, %v2209
    %v5446 = vadd.f32 %v5445, 1e-05
    %v5447 = vrsqrt.pop %v5446
    %v5448 = vmul.f32 %v5440, %v5447
    %v5449 = vlaneseq
    %v5450 = vshrl.u32 %v5449, 7
    %v5451 = vsub.s32 2, %v5450
    %v5452 = vrot.slane %v4012, %v5451
    %v5453 = vmul.f32 %v5448, %v5452
    %v5454 = vlaneseq
    %v5455 = vshrl.u32 %v5454, 7
    %v5456 = vsub.s32 3, %v5455
    %v5457 = vrot.slane %v4012, %v5456
    %v5458 = vadd.f32 %v5453, %v5457
    %5459 = vst.msk [vmem:[#allocation7] sm:$0x3] %vm1864, %v5458
    // Predicated region
    $region26: #{diffnet_forward.1} parent=1 // pred_check
      _
    $region27: #{diffnet_forward.1} parent=1 // pred_check_branch
      %5461 = sbr.rel (0) target = $region29
    $region28: #{diffnet_forward.1} parent=1 // pred_region
      %s5463 = ssub.s32 32, 32
      %5464 = vsyncadd [#allocation4], %s5463
      %s5466 = sshll.u32 [#allocation7], 4
      %s5467 = int_to_ptr.vmem [resolvable:$true] %s5466
      %5469 = dma.vmem_to_hbm [thread:$0]  %s5467, 32, %s4, [#allocation4]
    $region29: #{diffnet_forward.1} parent=1 // pred_fallthru
      _
    // Predicated region
    $region30: #{diffnet_forward.1} parent=1 // pred_check
      _
    $region31: #{diffnet_forward.1} parent=1 // pred_check_branch
      %5471 = sbr.rel (0) target = $region33
    $region32: #{diffnet_forward.1} parent=1 // pred_region
      %5472 = dma.done [#allocation4], 32
    $region33: #{diffnet_forward.1} parent=1 // pred_fallthru
      _
    %5473 = vsyncpa [#allocation3], 1
    %5474 = vsyncpa [#allocation4], 1
    %5475 = vsyncpa [#allocation5], 1

</llo_original>
